<compile_context>
chip_gen: v7x
topology: tpu7x:2x2x1
jax: 0.10.0
libtpu: 0.0.40
codegen_flags: <defaults>
</compile_context>

<pallas_src>
import math
from functools import partial

import jax
import jax.numpy as jnp
from jax.experimental import pallas as pl
from jax.experimental.pallas import tpu as pltpu


_TARGET_BLOCK_BYTES = 2 * 1024 * 1024   # ~2 MiB blocks: >=85% of HBM roofline
_MIN_SPLIT_BYTES = 512 * 1024           # only split for v7x 2-TC if blocks stay big


def _collapse_perm(perm, shape):
    """Merge runs of input axes that remain adjacent (and in order) in the output.

    Returns (collapsed_in_dims, kernel_perm): the kernel sees blocks of shape
    (Bt, *collapsed_in_dims) and applies kernel_perm (axis 0 = batch tile).
    For (0,2,3,1) on (B,C,H,W) this gives dims (C, H*W) and perm (0, 2, 1).
    """
    tail = list(perm[1:])
    groups = []
    cur = [tail[0]]
    for a in tail[1:]:
        if a == cur[-1] + 1:
            cur.append(a)
        else:
            groups.append(tuple(cur))
            cur = [a]
    groups.append(tuple(cur))

    groups_in_order = sorted(groups, key=lambda g: g[0])
    collapsed_in_dims = tuple(
        math.prod(shape[a] for a in g) for g in groups_in_order
    )
    pos = {g: i + 1 for i, g in enumerate(groups_in_order)}
    kernel_perm = (0,) + tuple(pos[g] for g in groups)
    return collapsed_in_dims, kernel_perm


def _largest_divisor_leq(n, cap):
    best = 1
    for d in range(1, n + 1):
        if n % d == 0 and d <= cap:
            best = d
    return best


def _permute_kernel(kperm, x_ref, o_ref):
    # x_ref: (Bt, g1, ..., gk) collapsed per-batch groups (NCHW->NHWC: (Bt, C, H*W),
    #        so the transpose is a single 2-D XLU relayout with 128-multiple lanes).
    # o_ref: (Bt, 1, flat)     lane-dense flattened permuted output.
    xt = jnp.transpose(x_ref[...], kperm)
    o_ref[...] = xt.reshape(o_ref.shape)   # full-width (unmasked) lane-dense store


def pallas_permute(x, perm):
    """Pallas equivalent of torch.Tensor.permute(*perm).

    Requires perm[0] == 0 (batch axis stays in place), which covers the
    NCHW <-> NHWC usage of the `Permute` module.
    """
    perm = tuple(int(p) for p in perm)
    assert len(perm) == x.ndim, "permutation rank must match input rank"
    assert sorted(perm) == list(range(x.ndim)), "invalid permutation"
    assert perm[0] == 0, "kernel tiles over axis 0; perm must keep axis 0"
    # TODO(synk): permutations that move axis 0 would need a different grid
    # mapping; not needed for the NCHW<->NHWC case this module is used for.

    if perm == tuple(range(x.ndim)):
        return x  # identity permutation

    B = x.shape[0]
    out_shape = tuple(x.shape[p] for p in perm)
    collapsed_in, kperm = _collapse_perm(perm, x.shape)
    flat = math.prod(collapsed_in)

    # Collapse the input view (free row-major reflow in the wrapper).
    x_c = x.reshape((B,) + collapsed_in)

    # --- Batch tiling: each block ~_TARGET_BLOCK_BYTES to amortize per-step
    # overhead; Bt must divide B. ---
    itemsize = jnp.dtype(x.dtype).itemsize
    per_batch_bytes = flat * itemsize
    bt_cap = max(1, _TARGET_BLOCK_BYTES // per_batch_bytes)
    Bt = _largest_divisor_leq(B, bt_cap)
    # v7x has 2 TensorCores: if everything landed in one grid step but there is
    # enough data for two decent blocks, split so the "parallel" batch axis can
    # be sharded across both cores.  (At the tiny test size the whole tensor
    # stays in a single block -- per-step overhead dominates there.)
    if Bt == B and B % 2 == 0 and B * per_batch_bytes >= 2 * _MIN_SPLIT_BYTES:
        Bt = B // 2
    grid = (B // Bt,)

    k = len(collapsed_in)
    in_spec = pl.BlockSpec((Bt,) + collapsed_in, lambda b: (b,) + (0,) * k)
    # Output is a lane-dense flat slab per batch element: [B, 1, flat].  The
    # unit middle dim keeps the block's last-two dims equal to the full array
    # dims for any Bt (clean (8,128) tiling); flat = 1024 lanes here.
    out_spec = pl.BlockSpec((Bt, 1, flat), lambda b: (b, 0, 0))

    out_flat = pl.pallas_call(
        partial(_permute_kernel, kperm),
        out_shape=jax.ShapeDtypeStruct((B, 1, flat), x.dtype),
        grid=grid,
        in_specs=[in_spec],
        out_specs=out_spec,
        compiler_params=pltpu.CompilerParams(
            dimension_semantics=("parallel",),
        ),
        # Pure memory op: advise XLA so it can overlap with neighboring compute.
        cost_estimate=pl.CostEstimate(
            flops=0,
            transcendentals=0,
            bytes_accessed=2 * x.size * itemsize,
        ),
    )(x_c)

    # Free reshape back to the permuted N-D shape (same row-major layout).
    return out_flat.reshape(out_shape)


if __name__ == "__main__":
    key = jax.random.PRNGKey(0)
    # NCHW input, small shapes: batch=2, channels=4, spatial=16x16
    x = jax.random.normal(key, (2, 4, 16, 16), dtype=jnp.float32)

    perm = (0, 2, 3, 1)  # NCHW -> NHWC, i.e. Permute(0, 2, 3, 1)

    out = pallas_permute(x, perm)
    out = jax.block_until_ready(out)

    ref = jnp.transpose(x, perm)
    assert out.shape == ref.shape, (out.shape, ref.shape)
    assert out.dtype == ref.dtype, (out.dtype, ref.dtype)
    assert bool(jnp.array_equal(out, ref)), "permute mismatch vs reference"

    print("KERNEL_OK")
</pallas_src>

<mosaic_0001>
module attributes {stable_mosaic.version = 11 : i64} {
  func.func @_permute_kernel(%arg0: i32, %arg1: memref<2x4x256xf32, #tpu.memory_space<vmem>>, %arg2: memref<2x1x1024xf32, #tpu.memory_space<vmem>>) attributes {dimension_semantics = [#tpu.dimension_semantics<parallel>], iteration_bounds = array<i64: 1>, scalar_prefetch = 0 : i64, scratch_operands = 0 : i64, tpu.core_type = #tpu.core_type<tc>, window_params = [{transform_indices = @transform_0, window_bounds = array<i64: 2, 4, 256>}, {transform_indices = @transform_1, window_bounds = array<i64: 2, 1, 1024>}]} {
    %c0 = arith.constant 0 : index
    %c0_0 = arith.constant 0 : index
    %c0_1 = arith.constant 0 : index
    %0 = vector.load %arg1[%c0, %c0_0, %c0_1] : memref<2x4x256xf32, #tpu.memory_space<vmem>>, vector<2x4x256xf32>
    %1 = tpu.transpose %0, [0, 2, 1] : vector<2x4x256xf32> -> vector<2x256x4xf32>
    %2 = vector.shape_cast %1 : vector<2x256x4xf32> to vector<2x1x1024xf32>
    %c0_2 = arith.constant 0 : index
    %c0_3 = arith.constant 0 : index
    %c0_4 = arith.constant 0 : index
    %3 = vector.load %arg2[%c0_2, %c0_3, %c0_4] : memref<2x1x1024xf32, #tpu.memory_space<vmem>>, vector<2x1x1024xf32>
    tpu.vector_store %arg2[%c0_2, %c0_3, %c0_4], %2 {strides = array<i32>} : memref<2x1x1024xf32, #tpu.memory_space<vmem>>, vector<2x1x1024xf32>,
    return
  }
  func.func @transform_0(%arg0: i32) -> (i32, i32, i32) {
    %c0_i32 = arith.constant 0 : i32
    %c0_i32_0 = arith.constant 0 : i32
    %c0_i32_1 = arith.constant 0 : i32
    return %arg0, %c0_i32, %c0_i32_0 : i32, i32, i32
  }
  func.func @transform_1(%arg0: i32) -> (i32, i32, i32) {
    %c0_i32 = arith.constant 0 : i32
    %c0_i32_0 = arith.constant 0 : i32
    %c0_i32_1 = arith.constant 0 : i32
    return %arg0, %c0_i32, %c0_i32_0 : i32, i32, i32
  }
}

</mosaic_0001>

<llo_original>
// kernel: tpu_custom_call.1
$region0: #{tpu_custom_call.1}
  #allocation0 [shape = 'u32[]', space=smem, size = 0x4, offset = 0x4, fixed_abs, tag = 'smem constant byte address 0x4 - core index']
  #allocation1 [shape = 'u32[144,128]{1,0:T(1,128)}', space=vmem, size = 0x12000, scoped, tag = 'internal scratch']
  %s0 = inlined_call_operand.hbm [shape: f32[2,4,256], index: 0, kind: input, shape index: {}]
  %s1 = inlined_call_operand.hbm [shape: f32[2,1,1024], index: 1, kind: output, shape index: {}]
  %s2 = sld [smem:[#allocation0]]
  $region18: #{tpu_custom_call.1} parent=0
    _
  %s4 = ssub.s32 1, %s2
  %s5 = scalar_select 0, %s4, %s2
  $region1: #{tpu_custom_call.1} parent=0
    #allocation2 [shape = 'u8[8192]{0}', space=vmem, size = 0x2000, scoped, tag = 'input window, operand 0, single buffered']
    #allocation3 [shape = 's32[1]{0}', space=sflag, size = 0x4, scoped, tag = 'scoped memory for tpu_custom_call.1']
    #allocation4 [shape = 's32[1]{0}', space=sflag, size = 0x4, scoped, tag = 'scoped memory for tpu_custom_call.1']
    #allocation5 [shape = 'u8[8192]{0}', space=vmem, size = 0x2000, scoped, tag = 'output window, operand 0, single buffered']
    %6 = vsyncpa [#allocation3], 0
    %7 = vsyncpa [#allocation4], 0
    // Predicated region
    $region2: #{tpu_custom_call.1} parent=1 // pred_check
      _
    $region3: #{tpu_custom_call.1} parent=1 // pred_check_branch
      %9 = sbr.rel (0) target = $region5
    $region4: #{tpu_custom_call.1} parent=1 // pred_region
      %s11 = ssub.s32 256, 256
      %12 = vsyncadd [#allocation3], %s11
      %s13 = sshll.u32 [#allocation2], 4
      %s14 = int_to_ptr.vmem [resolvable:$true] %s13
      %19 = dma.hbm_to_vmem [thread:$0]  %s0, 256, %s14, [#allocation3], 128, 128, 8
    $region5: #{tpu_custom_call.1} parent=1 // pred_fallthru
      _
    // Predicated region
    $region6: #{tpu_custom_call.1} parent=1 // pred_check
      _
    $region7: #{tpu_custom_call.1} parent=1 // pred_check_branch
      %21 = sbr.rel (0) target = $region9
    $region8: #{tpu_custom_call.1} parent=1 // pred_region
      %22 = dma.done [#allocation3], 256
    $region9: #{tpu_custom_call.1} parent=1 // pred_fallthru
      _
    %v23 = vld [vmem:[#allocation2] sm:$0xff]
    %v24 = vld [vmem:[#allocation2 + $0x8] sm:$0xff]
    %v27 = vcombine.high %v23, %v23
    %v28 = vcombine.high %v24, %v24
    %31 = vxpose.xlu0.b32.start [1/16] %v23, 128
    %32 = vxpose.xlu0.b32.cont [2/16] 0.0, 128
    %33 = vxpose.xlu0.b32.cont [3/16] 0.0, 128
    %34 = vxpose.xlu0.b32.cont [4/16] 0.0, 128
    %35 = vxpose.xlu0.b32.cont [5/16] 0.0, 128
    %36 = vxpose.xlu0.b32.cont [6/16] 0.0, 128
    %37 = vxpose.xlu0.b32.cont [7/16] 0.0, 128
    %38 = vxpose.xlu0.b32.cont [8/16] 0.0, 128
    %39 = vxpose.xlu0.b32.cont [9/16] 0.0, 128
    %40 = vxpose.xlu0.b32.cont [10/16] 0.0, 128
    %41 = vxpose.xlu0.b32.cont [11/16] 0.0, 128
    %42 = vxpose.xlu0.b32.cont [12/16] 0.0, 128
    %43 = vxpose.xlu0.b32.cont [13/16] 0.0, 128
    %44 = vxpose.xlu0.b32.cont [14/16] 0.0, 128
    %45 = vxpose.xlu0.b32.cont [15/16] 0.0, 128
    %46 = vxpose.xlu0.b32.end [16/16] 0.0, 128
    %v47 = vpop.trf.xlu0
    %v48 = vpop.trf.xlu0
    %v49 = vpop.trf.xlu0
    %v50 = vpop.trf.xlu0
    %v51 = vpop.trf.xlu0
    %v52 = vpop.trf.xlu0
    %v53 = vpop.trf.xlu0
    %v54 = vpop.trf.xlu0
    %v55 = vpop.trf.xlu0
    %v56 = vpop.trf.xlu0
    %v57 = vpop.trf.xlu0
    %v58 = vpop.trf.xlu0
    %v59 = vpop.trf.xlu0
    %v60 = vpop.trf.xlu0
    %v61 = vpop.trf.xlu0
    %v62 = vpop.trf.xlu0
    %63 = vxpose.xlu0.b32.start [1/16] %v27, 128
    %64 = vxpose.xlu0.b32.cont [2/16] 0.0, 128
    %65 = vxpose.xlu0.b32.cont [3/16] 0.0, 128
    %66 = vxpose.xlu0.b32.cont [4/16] 0.0, 128
    %67 = vxpose.xlu0.b32.cont [5/16] 0.0, 128
    %68 = vxpose.xlu0.b32.cont [6/16] 0.0, 128
    %69 = vxpose.xlu0.b32.cont [7/16] 0.0, 128
    %70 = vxpose.xlu0.b32.cont [8/16] 0.0, 128
    %71 = vxpose.xlu0.b32.cont [9/16] 0.0, 128
    %72 = vxpose.xlu0.b32.cont [10/16] 0.0, 128
    %73 = vxpose.xlu0.b32.cont [11/16] 0.0, 128
    %74 = vxpose.xlu0.b32.cont [12/16] 0.0, 128
    %75 = vxpose.xlu0.b32.cont [13/16] 0.0, 128
    %76 = vxpose.xlu0.b32.cont [14/16] 0.0, 128
    %77 = vxpose.xlu0.b32.cont [15/16] 0.0, 128
    %78 = vxpose.xlu0.b32.end [16/16] 0.0, 128
    %v79 = vpop.trf.xlu0
    %v80 = vpop.trf.xlu0
    %v81 = vpop.trf.xlu0
    %v82 = vpop.trf.xlu0
    %v83 = vpop.trf.xlu0
    %v84 = vpop.trf.xlu0
    %v85 = vpop.trf.xlu0
    %v86 = vpop.trf.xlu0
    %v87 = vpop.trf.xlu0
    %v88 = vpop.trf.xlu0
    %v89 = vpop.trf.xlu0
    %v90 = vpop.trf.xlu0
    %v91 = vpop.trf.xlu0
    %v92 = vpop.trf.xlu0
    %v93 = vpop.trf.xlu0
    %v94 = vpop.trf.xlu0
    %95 = vxpose.xlu0.b32.start [1/16] %v24, 128
    %96 = vxpose.xlu0.b32.cont [2/16] 0.0, 128
    %97 = vxpose.xlu0.b32.cont [3/16] 0.0, 128
    %98 = vxpose.xlu0.b32.cont [4/16] 0.0, 128
    %99 = vxpose.xlu0.b32.cont [5/16] 0.0, 128
    %100 = vxpose.xlu0.b32.cont [6/16] 0.0, 128
    %101 = vxpose.xlu0.b32.cont [7/16] 0.0, 128
    %102 = vxpose.xlu0.b32.cont [8/16] 0.0, 128
    %103 = vxpose.xlu0.b32.cont [9/16] 0.0, 128
    %104 = vxpose.xlu0.b32.cont [10/16] 0.0, 128
    %105 = vxpose.xlu0.b32.cont [11/16] 0.0, 128
    %106 = vxpose.xlu0.b32.cont [12/16] 0.0, 128
    %107 = vxpose.xlu0.b32.cont [13/16] 0.0, 128
    %108 = vxpose.xlu0.b32.cont [14/16] 0.0, 128
    %109 = vxpose.xlu0.b32.cont [15/16] 0.0, 128
    %110 = vxpose.xlu0.b32.end [16/16] 0.0, 128
    %v111 = vpop.trf.xlu0
    %v112 = vpop.trf.xlu0
    %v113 = vpop.trf.xlu0
    %v114 = vpop.trf.xlu0
    %v115 = vpop.trf.xlu0
    %v116 = vpop.trf.xlu0
    %v117 = vpop.trf.xlu0
    %v118 = vpop.trf.xlu0
    %v119 = vpop.trf.xlu0
    %v120 = vpop.trf.xlu0
    %v121 = vpop.trf.xlu0
    %v122 = vpop.trf.xlu0
    %v123 = vpop.trf.xlu0
    %v124 = vpop.trf.xlu0
    %v125 = vpop.trf.xlu0
    %v126 = vpop.trf.xlu0
    %127 = vxpose.xlu0.b32.start [1/16] %v28, 128
    %128 = vxpose.xlu0.b32.cont [2/16] 0.0, 128
    %129 = vxpose.xlu0.b32.cont [3/16] 0.0, 128
    %130 = vxpose.xlu0.b32.cont [4/16] 0.0, 128
    %131 = vxpose.xlu0.b32.cont [5/16] 0.0, 128
    %132 = vxpose.xlu0.b32.cont [6/16] 0.0, 128
    %133 = vxpose.xlu0.b32.cont [7/16] 0.0, 128
    %134 = vxpose.xlu0.b32.cont [8/16] 0.0, 128
    %135 = vxpose.xlu0.b32.cont [9/16] 0.0, 128
    %136 = vxpose.xlu0.b32.cont [10/16] 0.0, 128
    %137 = vxpose.xlu0.b32.cont [11/16] 0.0, 128
    %138 = vxpose.xlu0.b32.cont [12/16] 0.0, 128
    %139 = vxpose.xlu0.b32.cont [13/16] 0.0, 128
    %140 = vxpose.xlu0.b32.cont [14/16] 0.0, 128
    %141 = vxpose.xlu0.b32.cont [15/16] 0.0, 128
    %142 = vxpose.xlu0.b32.end [16/16] 0.0, 128
    %v143 = vpop.trf.xlu0
    %v144 = vpop.trf.xlu0
    %v145 = vpop.trf.xlu0
    %v146 = vpop.trf.xlu0
    %v147 = vpop.trf.xlu0
    %v148 = vpop.trf.xlu0
    %v149 = vpop.trf.xlu0
    %v150 = vpop.trf.xlu0
    %v151 = vpop.trf.xlu0
    %v152 = vpop.trf.xlu0
    %v153 = vpop.trf.xlu0
    %v154 = vpop.trf.xlu0
    %v155 = vpop.trf.xlu0
    %v156 = vpop.trf.xlu0
    %v157 = vpop.trf.xlu0
    %v158 = vpop.trf.xlu0
    %v159 = vcombine.high %v47, 0.0
    %v161 = vunpack.c.l.s4 1983009808
    %v162 = vunpack.c.0.s8 %v161
    %v163 = vlaneseq
    %v164 = vshrl.u32 %v163, 7
    %v165 = vsub.s32 %v162, %v164
    %v166 = vrot.slane %v47, %v165
    %v168 = vunpack.c.l.s4 1983009808
    %v169 = vunpack.c.0.s8 %v168
    %v170 = vlaneseq
    %v171 = vshrl.u32 %v170, 7
    %v172 = vsub.s32 %v169, %v171
    %v173 = vrot.slane %v159, %v172
    %v174 = vcombine.high %v166, 0.0
    %v176 = vunpack.c.l.s4 1934713408
    %v177 = vunpack.c.0.s8 %v176
    %v178 = vlaneseq
    %v179 = vshrl.u32 %v178, 7
    %v180 = vsub.s32 %v177, %v179
    %v181 = vrot.slane %v166, %v180
    %v183 = vunpack.c.l.s4 1934713408
    %v184 = vunpack.c.0.s8 %v183
    %v185 = vlaneseq
    %v186 = vshrl.u32 %v185, 7
    %v187 = vsub.s32 %v184, %v186
    %v188 = vrot.slane %v174, %v187
    %v189 = vcombine.high %v173, 0.0
    %v191 = vunpack.c.l.s4 1934713408
    %v192 = vunpack.c.0.s8 %v191
    %v193 = vlaneseq
    %v194 = vshrl.u32 %v193, 7
    %v195 = vsub.s32 %v192, %v194
    %v196 = vrot.slane %v173, %v195
    %v198 = vunpack.c.l.s4 1934713408
    %v199 = vunpack.c.0.s8 %v198
    %v200 = vlaneseq
    %v201 = vshrl.u32 %v200, 7
    %v202 = vsub.s32 %v199, %v201
    %v203 = vrot.slane %v189, %v202
    %v204 = vcombine.high %v181, 0.0
    %v205 = vcombine.high %v188, 0.0
    %v206 = vcombine.high %v196, 0.0
    %v207 = vcombine.high %v203, 0.0
    %v208 = vcombine.high %v48, 0.0
    %v210 = vunpack.c.l.s4 1983009808
    %v211 = vunpack.c.0.s8 %v210
    %v212 = vlaneseq
    %v213 = vshrl.u32 %v212, 7
    %v214 = vsub.s32 %v211, %v213
    %v215 = vrot.slane %v48, %v214
    %v217 = vunpack.c.l.s4 1983009808
    %v218 = vunpack.c.0.s8 %v217
    %v219 = vlaneseq
    %v220 = vshrl.u32 %v219, 7
    %v221 = vsub.s32 %v218, %v220
    %v222 = vrot.slane %v208, %v221
    %v223 = vcombine.high %v215, 0.0
    %v225 = vunpack.c.l.s4 1934713408
    %v226 = vunpack.c.0.s8 %v225
    %v227 = vlaneseq
    %v228 = vshrl.u32 %v227, 7
    %v229 = vsub.s32 %v226, %v228
    %v230 = vrot.slane %v215, %v229
    %v232 = vunpack.c.l.s4 1934713408
    %v233 = vunpack.c.0.s8 %v232
    %v234 = vlaneseq
    %v235 = vshrl.u32 %v234, 7
    %v236 = vsub.s32 %v233, %v235
    %v237 = vrot.slane %v223, %v236
    %v238 = vcombine.high %v222, 0.0
    %v240 = vunpack.c.l.s4 1934713408
    %v241 = vunpack.c.0.s8 %v240
    %v242 = vlaneseq
    %v243 = vshrl.u32 %v242, 7
    %v244 = vsub.s32 %v241, %v243
    %v245 = vrot.slane %v222, %v244
    %v247 = vunpack.c.l.s4 1934713408
    %v248 = vunpack.c.0.s8 %v247
    %v249 = vlaneseq
    %v250 = vshrl.u32 %v249, 7
    %v251 = vsub.s32 %v248, %v250
    %v252 = vrot.slane %v238, %v251
    %v253 = vcombine.high %v230, 0.0
    %v254 = vcombine.high %v237, 0.0
    %v255 = vcombine.high %v245, 0.0
    %v256 = vcombine.high %v252, 0.0
    %v257 = vcombine.high %v49, 0.0
    %v259 = vunpack.c.l.s4 1983009808
    %v260 = vunpack.c.0.s8 %v259
    %v261 = vlaneseq
    %v262 = vshrl.u32 %v261, 7
    %v263 = vsub.s32 %v260, %v262
    %v264 = vrot.slane %v49, %v263
    %v266 = vunpack.c.l.s4 1983009808
    %v267 = vunpack.c.0.s8 %v266
    %v268 = vlaneseq
    %v269 = vshrl.u32 %v268, 7
    %v270 = vsub.s32 %v267, %v269
    %v271 = vrot.slane %v257, %v270
    %v272 = vcombine.high %v264, 0.0
    %v274 = vunpack.c.l.s4 1934713408
    %v275 = vunpack.c.0.s8 %v274
    %v276 = vlaneseq
    %v277 = vshrl.u32 %v276, 7
    %v278 = vsub.s32 %v275, %v277
    %v279 = vrot.slane %v264, %v278
    %v281 = vunpack.c.l.s4 1934713408
    %v282 = vunpack.c.0.s8 %v281
    %v283 = vlaneseq
    %v284 = vshrl.u32 %v283, 7
    %v285 = vsub.s32 %v282, %v284
    %v286 = vrot.slane %v272, %v285
    %v287 = vcombine.high %v271, 0.0
    %v289 = vunpack.c.l.s4 1934713408
    %v290 = vunpack.c.0.s8 %v289
    %v291 = vlaneseq
    %v292 = vshrl.u32 %v291, 7
    %v293 = vsub.s32 %v290, %v292
    %v294 = vrot.slane %v271, %v293
    %v296 = vunpack.c.l.s4 1934713408
    %v297 = vunpack.c.0.s8 %v296
    %v298 = vlaneseq
    %v299 = vshrl.u32 %v298, 7
    %v300 = vsub.s32 %v297, %v299
    %v301 = vrot.slane %v287, %v300
    %v302 = vcombine.high %v279, 0.0
    %v303 = vcombine.high %v286, 0.0
    %v304 = vcombine.high %v294, 0.0
    %v305 = vcombine.high %v301, 0.0
    %v306 = vcombine.high %v50, 0.0
    %v308 = vunpack.c.l.s4 1983009808
    %v309 = vunpack.c.0.s8 %v308
    %v310 = vlaneseq
    %v311 = vshrl.u32 %v310, 7
    %v312 = vsub.s32 %v309, %v311
    %v313 = vrot.slane %v50, %v312
    %v315 = vunpack.c.l.s4 1983009808
    %v316 = vunpack.c.0.s8 %v315
    %v317 = vlaneseq
    %v318 = vshrl.u32 %v317, 7
    %v319 = vsub.s32 %v316, %v318
    %v320 = vrot.slane %v306, %v319
    %v321 = vcombine.high %v313, 0.0
    %v323 = vunpack.c.l.s4 1934713408
    %v324 = vunpack.c.0.s8 %v323
    %v325 = vlaneseq
    %v326 = vshrl.u32 %v325, 7
    %v327 = vsub.s32 %v324, %v326
    %v328 = vrot.slane %v313, %v327
    %v330 = vunpack.c.l.s4 1934713408
    %v331 = vunpack.c.0.s8 %v330
    %v332 = vlaneseq
    %v333 = vshrl.u32 %v332, 7
    %v334 = vsub.s32 %v331, %v333
    %v335 = vrot.slane %v321, %v334
    %v336 = vcombine.high %v320, 0.0
    %v338 = vunpack.c.l.s4 1934713408
    %v339 = vunpack.c.0.s8 %v338
    %v340 = vlaneseq
    %v341 = vshrl.u32 %v340, 7
    %v342 = vsub.s32 %v339, %v341
    %v343 = vrot.slane %v320, %v342
    %v345 = vunpack.c.l.s4 1934713408
    %v346 = vunpack.c.0.s8 %v345
    %v347 = vlaneseq
    %v348 = vshrl.u32 %v347, 7
    %v349 = vsub.s32 %v346, %v348
    %v350 = vrot.slane %v336, %v349
    %v351 = vcombine.high %v328, 0.0
    %v352 = vcombine.high %v335, 0.0
    %v353 = vcombine.high %v343, 0.0
    %v354 = vcombine.high %v350, 0.0
    %v355 = vcombine.high %v51, 0.0
    %v357 = vunpack.c.l.s4 1983009808
    %v358 = vunpack.c.0.s8 %v357
    %v359 = vlaneseq
    %v360 = vshrl.u32 %v359, 7
    %v361 = vsub.s32 %v358, %v360
    %v362 = vrot.slane %v51, %v361
    %v364 = vunpack.c.l.s4 1983009808
    %v365 = vunpack.c.0.s8 %v364
    %v366 = vlaneseq
    %v367 = vshrl.u32 %v366, 7
    %v368 = vsub.s32 %v365, %v367
    %v369 = vrot.slane %v355, %v368
    %v370 = vcombine.high %v362, 0.0
    %v372 = vunpack.c.l.s4 1934713408
    %v373 = vunpack.c.0.s8 %v372
    %v374 = vlaneseq
    %v375 = vshrl.u32 %v374, 7
    %v376 = vsub.s32 %v373, %v375
    %v377 = vrot.slane %v362, %v376
    %v379 = vunpack.c.l.s4 1934713408
    %v380 = vunpack.c.0.s8 %v379
    %v381 = vlaneseq
    %v382 = vshrl.u32 %v381, 7
    %v383 = vsub.s32 %v380, %v382
    %v384 = vrot.slane %v370, %v383
    %v385 = vcombine.high %v369, 0.0
    %v387 = vunpack.c.l.s4 1934713408
    %v388 = vunpack.c.0.s8 %v387
    %v389 = vlaneseq
    %v390 = vshrl.u32 %v389, 7
    %v391 = vsub.s32 %v388, %v390
    %v392 = vrot.slane %v369, %v391
    %v394 = vunpack.c.l.s4 1934713408
    %v395 = vunpack.c.0.s8 %v394
    %v396 = vlaneseq
    %v397 = vshrl.u32 %v396, 7
    %v398 = vsub.s32 %v395, %v397
    %v399 = vrot.slane %v385, %v398
    %v400 = vcombine.high %v377, 0.0
    %v401 = vcombine.high %v384, 0.0
    %v402 = vcombine.high %v392, 0.0
    %v403 = vcombine.high %v399, 0.0
    %v404 = vcombine.high %v52, 0.0
    %v406 = vunpack.c.l.s4 1983009808
    %v407 = vunpack.c.0.s8 %v406
    %v408 = vlaneseq
    %v409 = vshrl.u32 %v408, 7
    %v410 = vsub.s32 %v407, %v409
    %v411 = vrot.slane %v52, %v410
    %v413 = vunpack.c.l.s4 1983009808
    %v414 = vunpack.c.0.s8 %v413
    %v415 = vlaneseq
    %v416 = vshrl.u32 %v415, 7
    %v417 = vsub.s32 %v414, %v416
    %v418 = vrot.slane %v404, %v417
    %v419 = vcombine.high %v411, 0.0
    %v421 = vunpack.c.l.s4 1934713408
    %v422 = vunpack.c.0.s8 %v421
    %v423 = vlaneseq
    %v424 = vshrl.u32 %v423, 7
    %v425 = vsub.s32 %v422, %v424
    %v426 = vrot.slane %v411, %v425
    %v428 = vunpack.c.l.s4 1934713408
    %v429 = vunpack.c.0.s8 %v428
    %v430 = vlaneseq
    %v431 = vshrl.u32 %v430, 7
    %v432 = vsub.s32 %v429, %v431
    %v433 = vrot.slane %v419, %v432
    %v434 = vcombine.high %v418, 0.0
    %v436 = vunpack.c.l.s4 1934713408
    %v437 = vunpack.c.0.s8 %v436
    %v438 = vlaneseq
    %v439 = vshrl.u32 %v438, 7
    %v440 = vsub.s32 %v437, %v439
    %v441 = vrot.slane %v418, %v440
    %v443 = vunpack.c.l.s4 1934713408
    %v444 = vunpack.c.0.s8 %v443
    %v445 = vlaneseq
    %v446 = vshrl.u32 %v445, 7
    %v447 = vsub.s32 %v444, %v446
    %v448 = vrot.slane %v434, %v447
    %v449 = vcombine.high %v426, 0.0
    %v450 = vcombine.high %v433, 0.0
    %v451 = vcombine.high %v441, 0.0
    %v452 = vcombine.high %v448, 0.0
    %v453 = vcombine.high %v53, 0.0
    %v455 = vunpack.c.l.s4 1983009808
    %v456 = vunpack.c.0.s8 %v455
    %v457 = vlaneseq
    %v458 = vshrl.u32 %v457, 7
    %v459 = vsub.s32 %v456, %v458
    %v460 = vrot.slane %v53, %v459
    %v462 = vunpack.c.l.s4 1983009808
    %v463 = vunpack.c.0.s8 %v462
    %v464 = vlaneseq
    %v465 = vshrl.u32 %v464, 7
    %v466 = vsub.s32 %v463, %v465
    %v467 = vrot.slane %v453, %v466
    %v468 = vcombine.high %v460, 0.0
    %v470 = vunpack.c.l.s4 1934713408
    %v471 = vunpack.c.0.s8 %v470
    %v472 = vlaneseq
    %v473 = vshrl.u32 %v472, 7
    %v474 = vsub.s32 %v471, %v473
    %v475 = vrot.slane %v460, %v474
    %v477 = vunpack.c.l.s4 1934713408
    %v478 = vunpack.c.0.s8 %v477
    %v479 = vlaneseq
    %v480 = vshrl.u32 %v479, 7
    %v481 = vsub.s32 %v478, %v480
    %v482 = vrot.slane %v468, %v481
    %v483 = vcombine.high %v467, 0.0
    %v485 = vunpack.c.l.s4 1934713408
    %v486 = vunpack.c.0.s8 %v485
    %v487 = vlaneseq
    %v488 = vshrl.u32 %v487, 7
    %v489 = vsub.s32 %v486, %v488
    %v490 = vrot.slane %v467, %v489
    %v492 = vunpack.c.l.s4 1934713408
    %v493 = vunpack.c.0.s8 %v492
    %v494 = vlaneseq
    %v495 = vshrl.u32 %v494, 7
    %v496 = vsub.s32 %v493, %v495
    %v497 = vrot.slane %v483, %v496
    %v498 = vcombine.high %v475, 0.0
    %v499 = vcombine.high %v482, 0.0
    %v500 = vcombine.high %v490, 0.0
    %v501 = vcombine.high %v497, 0.0
    %v502 = vcombine.high %v54, 0.0
    %v504 = vunpack.c.l.s4 1983009808
    %v505 = vunpack.c.0.s8 %v504
    %v506 = vlaneseq
    %v507 = vshrl.u32 %v506, 7
    %v508 = vsub.s32 %v505, %v507
    %v509 = vrot.slane %v54, %v508
    %v511 = vunpack.c.l.s4 1983009808
    %v512 = vunpack.c.0.s8 %v511
    %v513 = vlaneseq
    %v514 = vshrl.u32 %v513, 7
    %v515 = vsub.s32 %v512, %v514
    %v516 = vrot.slane %v502, %v515
    %v517 = vcombine.high %v509, 0.0
    %v519 = vunpack.c.l.s4 1934713408
    %v520 = vunpack.c.0.s8 %v519
    %v521 = vlaneseq
    %v522 = vshrl.u32 %v521, 7
    %v523 = vsub.s32 %v520, %v522
    %v524 = vrot.slane %v509, %v523
    %v526 = vunpack.c.l.s4 1934713408
    %v527 = vunpack.c.0.s8 %v526
    %v528 = vlaneseq
    %v529 = vshrl.u32 %v528, 7
    %v530 = vsub.s32 %v527, %v529
    %v531 = vrot.slane %v517, %v530
    %v532 = vcombine.high %v516, 0.0
    %v534 = vunpack.c.l.s4 1934713408
    %v535 = vunpack.c.0.s8 %v534
    %v536 = vlaneseq
    %v537 = vshrl.u32 %v536, 7
    %v538 = vsub.s32 %v535, %v537
    %v539 = vrot.slane %v516, %v538
    %v541 = vunpack.c.l.s4 1934713408
    %v542 = vunpack.c.0.s8 %v541
    %v543 = vlaneseq
    %v544 = vshrl.u32 %v543, 7
    %v545 = vsub.s32 %v542, %v544
    %v546 = vrot.slane %v532, %v545
    %v547 = vcombine.high %v524, 0.0
    %v548 = vcombine.high %v531, 0.0
    %v549 = vcombine.high %v539, 0.0
    %v550 = vcombine.high %v546, 0.0
    %v551 = vcombine.high %v55, 0.0
    %v553 = vunpack.c.l.s4 1983009808
    %v554 = vunpack.c.0.s8 %v553
    %v555 = vlaneseq
    %v556 = vshrl.u32 %v555, 7
    %v557 = vsub.s32 %v554, %v556
    %v558 = vrot.slane %v55, %v557
    %v560 = vunpack.c.l.s4 1983009808
    %v561 = vunpack.c.0.s8 %v560
    %v562 = vlaneseq
    %v563 = vshrl.u32 %v562, 7
    %v564 = vsub.s32 %v561, %v563
    %v565 = vrot.slane %v551, %v564
    %v566 = vcombine.high %v558, 0.0
    %v568 = vunpack.c.l.s4 1934713408
    %v569 = vunpack.c.0.s8 %v568
    %v570 = vlaneseq
    %v571 = vshrl.u32 %v570, 7
    %v572 = vsub.s32 %v569, %v571
    %v573 = vrot.slane %v558, %v572
    %v575 = vunpack.c.l.s4 1934713408
    %v576 = vunpack.c.0.s8 %v575
    %v577 = vlaneseq
    %v578 = vshrl.u32 %v577, 7
    %v579 = vsub.s32 %v576, %v578
    %v580 = vrot.slane %v566, %v579
    %v581 = vcombine.high %v565, 0.0
    %v583 = vunpack.c.l.s4 1934713408
    %v584 = vunpack.c.0.s8 %v583
    %v585 = vlaneseq
    %v586 = vshrl.u32 %v585, 7
    %v587 = vsub.s32 %v584, %v586
    %v588 = vrot.slane %v565, %v587
    %v590 = vunpack.c.l.s4 1934713408
    %v591 = vunpack.c.0.s8 %v590
    %v592 = vlaneseq
    %v593 = vshrl.u32 %v592, 7
    %v594 = vsub.s32 %v591, %v593
    %v595 = vrot.slane %v581, %v594
    %v596 = vcombine.high %v573, 0.0
    %v597 = vcombine.high %v580, 0.0
    %v598 = vcombine.high %v588, 0.0
    %v599 = vcombine.high %v595, 0.0
    %v600 = vcombine.high %v56, 0.0
    %v602 = vunpack.c.l.s4 1983009808
    %v603 = vunpack.c.0.s8 %v602
    %v604 = vlaneseq
    %v605 = vshrl.u32 %v604, 7
    %v606 = vsub.s32 %v603, %v605
    %v607 = vrot.slane %v56, %v606
    %v609 = vunpack.c.l.s4 1983009808
    %v610 = vunpack.c.0.s8 %v609
    %v611 = vlaneseq
    %v612 = vshrl.u32 %v611, 7
    %v613 = vsub.s32 %v610, %v612
    %v614 = vrot.slane %v600, %v613
    %v615 = vcombine.high %v607, 0.0
    %v617 = vunpack.c.l.s4 1934713408
    %v618 = vunpack.c.0.s8 %v617
    %v619 = vlaneseq
    %v620 = vshrl.u32 %v619, 7
    %v621 = vsub.s32 %v618, %v620
    %v622 = vrot.slane %v607, %v621
    %v624 = vunpack.c.l.s4 1934713408
    %v625 = vunpack.c.0.s8 %v624
    %v626 = vlaneseq
    %v627 = vshrl.u32 %v626, 7
    %v628 = vsub.s32 %v625, %v627
    %v629 = vrot.slane %v615, %v628
    %v630 = vcombine.high %v614, 0.0
    %v632 = vunpack.c.l.s4 1934713408
    %v633 = vunpack.c.0.s8 %v632
    %v634 = vlaneseq
    %v635 = vshrl.u32 %v634, 7
    %v636 = vsub.s32 %v633, %v635
    %v637 = vrot.slane %v614, %v636
    %v639 = vunpack.c.l.s4 1934713408
    %v640 = vunpack.c.0.s8 %v639
    %v641 = vlaneseq
    %v642 = vshrl.u32 %v641, 7
    %v643 = vsub.s32 %v640, %v642
    %v644 = vrot.slane %v630, %v643
    %v645 = vcombine.high %v622, 0.0
    %v646 = vcombine.high %v629, 0.0
    %v647 = vcombine.high %v637, 0.0
    %v648 = vcombine.high %v644, 0.0
    %v649 = vcombine.high %v57, 0.0
    %v651 = vunpack.c.l.s4 1983009808
    %v652 = vunpack.c.0.s8 %v651
    %v653 = vlaneseq
    %v654 = vshrl.u32 %v653, 7
    %v655 = vsub.s32 %v652, %v654
    %v656 = vrot.slane %v57, %v655
    %v658 = vunpack.c.l.s4 1983009808
    %v659 = vunpack.c.0.s8 %v658
    %v660 = vlaneseq
    %v661 = vshrl.u32 %v660, 7
    %v662 = vsub.s32 %v659, %v661
    %v663 = vrot.slane %v649, %v662
    %v664 = vcombine.high %v656, 0.0
    %v666 = vunpack.c.l.s4 1934713408
    %v667 = vunpack.c.0.s8 %v666
    %v668 = vlaneseq
    %v669 = vshrl.u32 %v668, 7
    %v670 = vsub.s32 %v667, %v669
    %v671 = vrot.slane %v656, %v670
    %v673 = vunpack.c.l.s4 1934713408
    %v674 = vunpack.c.0.s8 %v673
    %v675 = vlaneseq
    %v676 = vshrl.u32 %v675, 7
    %v677 = vsub.s32 %v674, %v676
    %v678 = vrot.slane %v664, %v677
    %v679 = vcombine.high %v663, 0.0
    %v681 = vunpack.c.l.s4 1934713408
    %v682 = vunpack.c.0.s8 %v681
    %v683 = vlaneseq
    %v684 = vshrl.u32 %v683, 7
    %v685 = vsub.s32 %v682, %v684
    %v686 = vrot.slane %v663, %v685
    %v688 = vunpack.c.l.s4 1934713408
    %v689 = vunpack.c.0.s8 %v688
    %v690 = vlaneseq
    %v691 = vshrl.u32 %v690, 7
    %v692 = vsub.s32 %v689, %v691
    %v693 = vrot.slane %v679, %v692
    %v694 = vcombine.high %v671, 0.0
    %v695 = vcombine.high %v678, 0.0
    %v696 = vcombine.high %v686, 0.0
    %v697 = vcombine.high %v693, 0.0
    %v698 = vcombine.high %v58, 0.0
    %v700 = vunpack.c.l.s4 1983009808
    %v701 = vunpack.c.0.s8 %v700
    %v702 = vlaneseq
    %v703 = vshrl.u32 %v702, 7
    %v704 = vsub.s32 %v701, %v703
    %v705 = vrot.slane %v58, %v704
    %v707 = vunpack.c.l.s4 1983009808
    %v708 = vunpack.c.0.s8 %v707
    %v709 = vlaneseq
    %v710 = vshrl.u32 %v709, 7
    %v711 = vsub.s32 %v708, %v710
    %v712 = vrot.slane %v698, %v711
    %v713 = vcombine.high %v705, 0.0
    %v715 = vunpack.c.l.s4 1934713408
    %v716 = vunpack.c.0.s8 %v715
    %v717 = vlaneseq
    %v718 = vshrl.u32 %v717, 7
    %v719 = vsub.s32 %v716, %v718
    %v720 = vrot.slane %v705, %v719
    %v722 = vunpack.c.l.s4 1934713408
    %v723 = vunpack.c.0.s8 %v722
    %v724 = vlaneseq
    %v725 = vshrl.u32 %v724, 7
    %v726 = vsub.s32 %v723, %v725
    %v727 = vrot.slane %v713, %v726
    %v728 = vcombine.high %v712, 0.0
    %v730 = vunpack.c.l.s4 1934713408
    %v731 = vunpack.c.0.s8 %v730
    %v732 = vlaneseq
    %v733 = vshrl.u32 %v732, 7
    %v734 = vsub.s32 %v731, %v733
    %v735 = vrot.slane %v712, %v734
    %v737 = vunpack.c.l.s4 1934713408
    %v738 = vunpack.c.0.s8 %v737
    %v739 = vlaneseq
    %v740 = vshrl.u32 %v739, 7
    %v741 = vsub.s32 %v738, %v740
    %v742 = vrot.slane %v728, %v741
    %v743 = vcombine.high %v720, 0.0
    %v744 = vcombine.high %v727, 0.0
    %v745 = vcombine.high %v735, 0.0
    %v746 = vcombine.high %v742, 0.0
    %v747 = vcombine.high %v59, 0.0
    %v749 = vunpack.c.l.s4 1983009808
    %v750 = vunpack.c.0.s8 %v749
    %v751 = vlaneseq
    %v752 = vshrl.u32 %v751, 7
    %v753 = vsub.s32 %v750, %v752
    %v754 = vrot.slane %v59, %v753
    %v756 = vunpack.c.l.s4 1983009808
    %v757 = vunpack.c.0.s8 %v756
    %v758 = vlaneseq
    %v759 = vshrl.u32 %v758, 7
    %v760 = vsub.s32 %v757, %v759
    %v761 = vrot.slane %v747, %v760
    %v762 = vcombine.high %v754, 0.0
    %v764 = vunpack.c.l.s4 1934713408
    %v765 = vunpack.c.0.s8 %v764
    %v766 = vlaneseq
    %v767 = vshrl.u32 %v766, 7
    %v768 = vsub.s32 %v765, %v767
    %v769 = vrot.slane %v754, %v768
    %v771 = vunpack.c.l.s4 1934713408
    %v772 = vunpack.c.0.s8 %v771
    %v773 = vlaneseq
    %v774 = vshrl.u32 %v773, 7
    %v775 = vsub.s32 %v772, %v774
    %v776 = vrot.slane %v762, %v775
    %v777 = vcombine.high %v761, 0.0
    %v779 = vunpack.c.l.s4 1934713408
    %v780 = vunpack.c.0.s8 %v779
    %v781 = vlaneseq
    %v782 = vshrl.u32 %v781, 7
    %v783 = vsub.s32 %v780, %v782
    %v784 = vrot.slane %v761, %v783
    %v786 = vunpack.c.l.s4 1934713408
    %v787 = vunpack.c.0.s8 %v786
    %v788 = vlaneseq
    %v789 = vshrl.u32 %v788, 7
    %v790 = vsub.s32 %v787, %v789
    %v791 = vrot.slane %v777, %v790
    %v792 = vcombine.high %v769, 0.0
    %v793 = vcombine.high %v776, 0.0
    %v794 = vcombine.high %v784, 0.0
    %v795 = vcombine.high %v791, 0.0
    %v796 = vcombine.high %v60, 0.0
    %v798 = vunpack.c.l.s4 1983009808
    %v799 = vunpack.c.0.s8 %v798
    %v800 = vlaneseq
    %v801 = vshrl.u32 %v800, 7
    %v802 = vsub.s32 %v799, %v801
    %v803 = vrot.slane %v60, %v802
    %v805 = vunpack.c.l.s4 1983009808
    %v806 = vunpack.c.0.s8 %v805
    %v807 = vlaneseq
    %v808 = vshrl.u32 %v807, 7
    %v809 = vsub.s32 %v806, %v808
    %v810 = vrot.slane %v796, %v809
    %v811 = vcombine.high %v803, 0.0
    %v813 = vunpack.c.l.s4 1934713408
    %v814 = vunpack.c.0.s8 %v813
    %v815 = vlaneseq
    %v816 = vshrl.u32 %v815, 7
    %v817 = vsub.s32 %v814, %v816
    %v818 = vrot.slane %v803, %v817
    %v820 = vunpack.c.l.s4 1934713408
    %v821 = vunpack.c.0.s8 %v820
    %v822 = vlaneseq
    %v823 = vshrl.u32 %v822, 7
    %v824 = vsub.s32 %v821, %v823
    %v825 = vrot.slane %v811, %v824
    %v826 = vcombine.high %v810, 0.0
    %v828 = vunpack.c.l.s4 1934713408
    %v829 = vunpack.c.0.s8 %v828
    %v830 = vlaneseq
    %v831 = vshrl.u32 %v830, 7
    %v832 = vsub.s32 %v829, %v831
    %v833 = vrot.slane %v810, %v832
    %v835 = vunpack.c.l.s4 1934713408
    %v836 = vunpack.c.0.s8 %v835
    %v837 = vlaneseq
    %v838 = vshrl.u32 %v837, 7
    %v839 = vsub.s32 %v836, %v838
    %v840 = vrot.slane %v826, %v839
    %v841 = vcombine.high %v818, 0.0
    %v842 = vcombine.high %v825, 0.0
    %v843 = vcombine.high %v833, 0.0
    %v844 = vcombine.high %v840, 0.0
    %v845 = vcombine.high %v61, 0.0
    %v847 = vunpack.c.l.s4 1983009808
    %v848 = vunpack.c.0.s8 %v847
    %v849 = vlaneseq
    %v850 = vshrl.u32 %v849, 7
    %v851 = vsub.s32 %v848, %v850
    %v852 = vrot.slane %v61, %v851
    %v854 = vunpack.c.l.s4 1983009808
    %v855 = vunpack.c.0.s8 %v854
    %v856 = vlaneseq
    %v857 = vshrl.u32 %v856, 7
    %v858 = vsub.s32 %v855, %v857
    %v859 = vrot.slane %v845, %v858
    %v860 = vcombine.high %v852, 0.0
    %v862 = vunpack.c.l.s4 1934713408
    %v863 = vunpack.c.0.s8 %v862
    %v864 = vlaneseq
    %v865 = vshrl.u32 %v864, 7
    %v866 = vsub.s32 %v863, %v865
    %v867 = vrot.slane %v852, %v866
    %v869 = vunpack.c.l.s4 1934713408
    %v870 = vunpack.c.0.s8 %v869
    %v871 = vlaneseq
    %v872 = vshrl.u32 %v871, 7
    %v873 = vsub.s32 %v870, %v872
    %v874 = vrot.slane %v860, %v873
    %v875 = vcombine.high %v859, 0.0
    %v877 = vunpack.c.l.s4 1934713408
    %v878 = vunpack.c.0.s8 %v877
    %v879 = vlaneseq
    %v880 = vshrl.u32 %v879, 7
    %v881 = vsub.s32 %v878, %v880
    %v882 = vrot.slane %v859, %v881
    %v884 = vunpack.c.l.s4 1934713408
    %v885 = vunpack.c.0.s8 %v884
    %v886 = vlaneseq
    %v887 = vshrl.u32 %v886, 7
    %v888 = vsub.s32 %v885, %v887
    %v889 = vrot.slane %v875, %v888
    %v890 = vcombine.high %v867, 0.0
    %v891 = vcombine.high %v874, 0.0
    %v892 = vcombine.high %v882, 0.0
    %v893 = vcombine.high %v889, 0.0
    %v894 = vcombine.high %v62, 0.0
    %v896 = vunpack.c.l.s4 1983009808
    %v897 = vunpack.c.0.s8 %v896
    %v898 = vlaneseq
    %v899 = vshrl.u32 %v898, 7
    %v900 = vsub.s32 %v897, %v899
    %v901 = vrot.slane %v62, %v900
    %v903 = vunpack.c.l.s4 1983009808
    %v904 = vunpack.c.0.s8 %v903
    %v905 = vlaneseq
    %v906 = vshrl.u32 %v905, 7
    %v907 = vsub.s32 %v904, %v906
    %v908 = vrot.slane %v894, %v907
    %v909 = vcombine.high %v901, 0.0
    %v911 = vunpack.c.l.s4 1934713408
    %v912 = vunpack.c.0.s8 %v911
    %v913 = vlaneseq
    %v914 = vshrl.u32 %v913, 7
    %v915 = vsub.s32 %v912, %v914
    %v916 = vrot.slane %v901, %v915
    %v918 = vunpack.c.l.s4 1934713408
    %v919 = vunpack.c.0.s8 %v918
    %v920 = vlaneseq
    %v921 = vshrl.u32 %v920, 7
    %v922 = vsub.s32 %v919, %v921
    %v923 = vrot.slane %v909, %v922
    %v924 = vcombine.high %v908, 0.0
    %v926 = vunpack.c.l.s4 1934713408
    %v927 = vunpack.c.0.s8 %v926
    %v928 = vlaneseq
    %v929 = vshrl.u32 %v928, 7
    %v930 = vsub.s32 %v927, %v929
    %v931 = vrot.slane %v908, %v930
    %v933 = vunpack.c.l.s4 1934713408
    %v934 = vunpack.c.0.s8 %v933
    %v935 = vlaneseq
    %v936 = vshrl.u32 %v935, 7
    %v937 = vsub.s32 %v934, %v936
    %v938 = vrot.slane %v924, %v937
    %v939 = vcombine.high %v916, 0.0
    %v940 = vcombine.high %v923, 0.0
    %v941 = vcombine.high %v931, 0.0
    %v942 = vcombine.high %v938, 0.0
    %v943 = vcombine.high %v79, 0.0
    %v945 = vunpack.c.l.s4 1983009808
    %v946 = vunpack.c.0.s8 %v945
    %v947 = vlaneseq
    %v948 = vshrl.u32 %v947, 7
    %v949 = vsub.s32 %v946, %v948
    %v950 = vrot.slane %v79, %v949
    %v952 = vunpack.c.l.s4 1983009808
    %v953 = vunpack.c.0.s8 %v952
    %v954 = vlaneseq
    %v955 = vshrl.u32 %v954, 7
    %v956 = vsub.s32 %v953, %v955
    %v957 = vrot.slane %v943, %v956
    %v958 = vcombine.high %v950, 0.0
    %v960 = vunpack.c.l.s4 1934713408
    %v961 = vunpack.c.0.s8 %v960
    %v962 = vlaneseq
    %v963 = vshrl.u32 %v962, 7
    %v964 = vsub.s32 %v961, %v963
    %v965 = vrot.slane %v950, %v964
    %v967 = vunpack.c.l.s4 1934713408
    %v968 = vunpack.c.0.s8 %v967
    %v969 = vlaneseq
    %v970 = vshrl.u32 %v969, 7
    %v971 = vsub.s32 %v968, %v970
    %v972 = vrot.slane %v958, %v971
    %v973 = vcombine.high %v957, 0.0
    %v975 = vunpack.c.l.s4 1934713408
    %v976 = vunpack.c.0.s8 %v975
    %v977 = vlaneseq
    %v978 = vshrl.u32 %v977, 7
    %v979 = vsub.s32 %v976, %v978
    %v980 = vrot.slane %v957, %v979
    %v982 = vunpack.c.l.s4 1934713408
    %v983 = vunpack.c.0.s8 %v982
    %v984 = vlaneseq
    %v985 = vshrl.u32 %v984, 7
    %v986 = vsub.s32 %v983, %v985
    %v987 = vrot.slane %v973, %v986
    %v988 = vcombine.high %v965, 0.0
    %v989 = vcombine.high %v972, 0.0
    %v990 = vcombine.high %v980, 0.0
    %v991 = vcombine.high %v987, 0.0
    %v992 = vcombine.high %v80, 0.0
    %v994 = vunpack.c.l.s4 1983009808
    %v995 = vunpack.c.0.s8 %v994
    %v996 = vlaneseq
    %v997 = vshrl.u32 %v996, 7
    %v998 = vsub.s32 %v995, %v997
    %v999 = vrot.slane %v80, %v998
    %v1001 = vunpack.c.l.s4 1983009808
    %v1002 = vunpack.c.0.s8 %v1001
    %v1003 = vlaneseq
    %v1004 = vshrl.u32 %v1003, 7
    %v1005 = vsub.s32 %v1002, %v1004
    %v1006 = vrot.slane %v992, %v1005
    %v1007 = vcombine.high %v999, 0.0
    %v1009 = vunpack.c.l.s4 1934713408
    %v1010 = vunpack.c.0.s8 %v1009
    %v1011 = vlaneseq
    %v1012 = vshrl.u32 %v1011, 7
    %v1013 = vsub.s32 %v1010, %v1012
    %v1014 = vrot.slane %v999, %v1013
    %v1016 = vunpack.c.l.s4 1934713408
    %v1017 = vunpack.c.0.s8 %v1016
    %v1018 = vlaneseq
    %v1019 = vshrl.u32 %v1018, 7
    %v1020 = vsub.s32 %v1017, %v1019
    %v1021 = vrot.slane %v1007, %v1020
    %v1022 = vcombine.high %v1006, 0.0
    %v1024 = vunpack.c.l.s4 1934713408
    %v1025 = vunpack.c.0.s8 %v1024
    %v1026 = vlaneseq
    %v1027 = vshrl.u32 %v1026, 7
    %v1028 = vsub.s32 %v1025, %v1027
    %v1029 = vrot.slane %v1006, %v1028
    %v1031 = vunpack.c.l.s4 1934713408
    %v1032 = vunpack.c.0.s8 %v1031
    %v1033 = vlaneseq
    %v1034 = vshrl.u32 %v1033, 7
    %v1035 = vsub.s32 %v1032, %v1034
    %v1036 = vrot.slane %v1022, %v1035
    %v1037 = vcombine.high %v1014, 0.0
    %v1038 = vcombine.high %v1021, 0.0
    %v1039 = vcombine.high %v1029, 0.0
    %v1040 = vcombine.high %v1036, 0.0
    %v1041 = vcombine.high %v81, 0.0
    %v1043 = vunpack.c.l.s4 1983009808
    %v1044 = vunpack.c.0.s8 %v1043
    %v1045 = vlaneseq
    %v1046 = vshrl.u32 %v1045, 7
    %v1047 = vsub.s32 %v1044, %v1046
    %v1048 = vrot.slane %v81, %v1047
    %v1050 = vunpack.c.l.s4 1983009808
    %v1051 = vunpack.c.0.s8 %v1050
    %v1052 = vlaneseq
    %v1053 = vshrl.u32 %v1052, 7
    %v1054 = vsub.s32 %v1051, %v1053
    %v1055 = vrot.slane %v1041, %v1054
    %v1056 = vcombine.high %v1048, 0.0
    %v1058 = vunpack.c.l.s4 1934713408
    %v1059 = vunpack.c.0.s8 %v1058
    %v1060 = vlaneseq
    %v1061 = vshrl.u32 %v1060, 7
    %v1062 = vsub.s32 %v1059, %v1061
    %v1063 = vrot.slane %v1048, %v1062
    %v1065 = vunpack.c.l.s4 1934713408
    %v1066 = vunpack.c.0.s8 %v1065
    %v1067 = vlaneseq
    %v1068 = vshrl.u32 %v1067, 7
    %v1069 = vsub.s32 %v1066, %v1068
    %v1070 = vrot.slane %v1056, %v1069
    %v1071 = vcombine.high %v1055, 0.0
    %v1073 = vunpack.c.l.s4 1934713408
    %v1074 = vunpack.c.0.s8 %v1073
    %v1075 = vlaneseq
    %v1076 = vshrl.u32 %v1075, 7
    %v1077 = vsub.s32 %v1074, %v1076
    %v1078 = vrot.slane %v1055, %v1077
    %v1080 = vunpack.c.l.s4 1934713408
    %v1081 = vunpack.c.0.s8 %v1080
    %v1082 = vlaneseq
    %v1083 = vshrl.u32 %v1082, 7
    %v1084 = vsub.s32 %v1081, %v1083
    %v1085 = vrot.slane %v1071, %v1084
    %v1086 = vcombine.high %v1063, 0.0
    %v1087 = vcombine.high %v1070, 0.0
    %v1088 = vcombine.high %v1078, 0.0
    %v1089 = vcombine.high %v1085, 0.0
    %v1090 = vcombine.high %v82, 0.0
    %v1092 = vunpack.c.l.s4 1983009808
    %v1093 = vunpack.c.0.s8 %v1092
    %v1094 = vlaneseq
    %v1095 = vshrl.u32 %v1094, 7
    %v1096 = vsub.s32 %v1093, %v1095
    %v1097 = vrot.slane %v82, %v1096
    %v1099 = vunpack.c.l.s4 1983009808
    %v1100 = vunpack.c.0.s8 %v1099
    %v1101 = vlaneseq
    %v1102 = vshrl.u32 %v1101, 7
    %v1103 = vsub.s32 %v1100, %v1102
    %v1104 = vrot.slane %v1090, %v1103
    %v1105 = vcombine.high %v1097, 0.0
    %v1107 = vunpack.c.l.s4 1934713408
    %v1108 = vunpack.c.0.s8 %v1107
    %v1109 = vlaneseq
    %v1110 = vshrl.u32 %v1109, 7
    %v1111 = vsub.s32 %v1108, %v1110
    %v1112 = vrot.slane %v1097, %v1111
    %v1114 = vunpack.c.l.s4 1934713408
    %v1115 = vunpack.c.0.s8 %v1114
    %v1116 = vlaneseq
    %v1117 = vshrl.u32 %v1116, 7
    %v1118 = vsub.s32 %v1115, %v1117
    %v1119 = vrot.slane %v1105, %v1118
    %v1120 = vcombine.high %v1104, 0.0
    %v1122 = vunpack.c.l.s4 1934713408
    %v1123 = vunpack.c.0.s8 %v1122
    %v1124 = vlaneseq
    %v1125 = vshrl.u32 %v1124, 7
    %v1126 = vsub.s32 %v1123, %v1125
    %v1127 = vrot.slane %v1104, %v1126
    %v1129 = vunpack.c.l.s4 1934713408
    %v1130 = vunpack.c.0.s8 %v1129
    %v1131 = vlaneseq
    %v1132 = vshrl.u32 %v1131, 7
    %v1133 = vsub.s32 %v1130, %v1132
    %v1134 = vrot.slane %v1120, %v1133
    %v1135 = vcombine.high %v1112, 0.0
    %v1136 = vcombine.high %v1119, 0.0
    %v1137 = vcombine.high %v1127, 0.0
    %v1138 = vcombine.high %v1134, 0.0
    %v1139 = vcombine.high %v83, 0.0
    %v1141 = vunpack.c.l.s4 1983009808
    %v1142 = vunpack.c.0.s8 %v1141
    %v1143 = vlaneseq
    %v1144 = vshrl.u32 %v1143, 7
    %v1145 = vsub.s32 %v1142, %v1144
    %v1146 = vrot.slane %v83, %v1145
    %v1148 = vunpack.c.l.s4 1983009808
    %v1149 = vunpack.c.0.s8 %v1148
    %v1150 = vlaneseq
    %v1151 = vshrl.u32 %v1150, 7
    %v1152 = vsub.s32 %v1149, %v1151
    %v1153 = vrot.slane %v1139, %v1152
    %v1154 = vcombine.high %v1146, 0.0
    %v1156 = vunpack.c.l.s4 1934713408
    %v1157 = vunpack.c.0.s8 %v1156
    %v1158 = vlaneseq
    %v1159 = vshrl.u32 %v1158, 7
    %v1160 = vsub.s32 %v1157, %v1159
    %v1161 = vrot.slane %v1146, %v1160
    %v1163 = vunpack.c.l.s4 1934713408
    %v1164 = vunpack.c.0.s8 %v1163
    %v1165 = vlaneseq
    %v1166 = vshrl.u32 %v1165, 7
    %v1167 = vsub.s32 %v1164, %v1166
    %v1168 = vrot.slane %v1154, %v1167
    %v1169 = vcombine.high %v1153, 0.0
    %v1171 = vunpack.c.l.s4 1934713408
    %v1172 = vunpack.c.0.s8 %v1171
    %v1173 = vlaneseq
    %v1174 = vshrl.u32 %v1173, 7
    %v1175 = vsub.s32 %v1172, %v1174
    %v1176 = vrot.slane %v1153, %v1175
    %v1178 = vunpack.c.l.s4 1934713408
    %v1179 = vunpack.c.0.s8 %v1178
    %v1180 = vlaneseq
    %v1181 = vshrl.u32 %v1180, 7
    %v1182 = vsub.s32 %v1179, %v1181
    %v1183 = vrot.slane %v1169, %v1182
    %v1184 = vcombine.high %v1161, 0.0
    %v1185 = vcombine.high %v1168, 0.0
    %v1186 = vcombine.high %v1176, 0.0
    %v1187 = vcombine.high %v1183, 0.0
    %v1188 = vcombine.high %v84, 0.0
    %v1190 = vunpack.c.l.s4 1983009808
    %v1191 = vunpack.c.0.s8 %v1190
    %v1192 = vlaneseq
    %v1193 = vshrl.u32 %v1192, 7
    %v1194 = vsub.s32 %v1191, %v1193
    %v1195 = vrot.slane %v84, %v1194
    %v1197 = vunpack.c.l.s4 1983009808
    %v1198 = vunpack.c.0.s8 %v1197
    %v1199 = vlaneseq
    %v1200 = vshrl.u32 %v1199, 7
    %v1201 = vsub.s32 %v1198, %v1200
    %v1202 = vrot.slane %v1188, %v1201
    %v1203 = vcombine.high %v1195, 0.0
    %v1205 = vunpack.c.l.s4 1934713408
    %v1206 = vunpack.c.0.s8 %v1205
    %v1207 = vlaneseq
    %v1208 = vshrl.u32 %v1207, 7
    %v1209 = vsub.s32 %v1206, %v1208
    %v1210 = vrot.slane %v1195, %v1209
    %v1212 = vunpack.c.l.s4 1934713408
    %v1213 = vunpack.c.0.s8 %v1212
    %v1214 = vlaneseq
    %v1215 = vshrl.u32 %v1214, 7
    %v1216 = vsub.s32 %v1213, %v1215
    %v1217 = vrot.slane %v1203, %v1216
    %v1218 = vcombine.high %v1202, 0.0
    %v1220 = vunpack.c.l.s4 1934713408
    %v1221 = vunpack.c.0.s8 %v1220
    %v1222 = vlaneseq
    %v1223 = vshrl.u32 %v1222, 7
    %v1224 = vsub.s32 %v1221, %v1223
    %v1225 = vrot.slane %v1202, %v1224
    %v1227 = vunpack.c.l.s4 1934713408
    %v1228 = vunpack.c.0.s8 %v1227
    %v1229 = vlaneseq
    %v1230 = vshrl.u32 %v1229, 7
    %v1231 = vsub.s32 %v1228, %v1230
    %v1232 = vrot.slane %v1218, %v1231
    %v1233 = vcombine.high %v1210, 0.0
    %v1234 = vcombine.high %v1217, 0.0
    %v1235 = vcombine.high %v1225, 0.0
    %v1236 = vcombine.high %v1232, 0.0
    %v1237 = vcombine.high %v85, 0.0
    %v1239 = vunpack.c.l.s4 1983009808
    %v1240 = vunpack.c.0.s8 %v1239
    %v1241 = vlaneseq
    %v1242 = vshrl.u32 %v1241, 7
    %v1243 = vsub.s32 %v1240, %v1242
    %v1244 = vrot.slane %v85, %v1243
    %v1246 = vunpack.c.l.s4 1983009808
    %v1247 = vunpack.c.0.s8 %v1246
    %v1248 = vlaneseq
    %v1249 = vshrl.u32 %v1248, 7
    %v1250 = vsub.s32 %v1247, %v1249
    %v1251 = vrot.slane %v1237, %v1250
    %v1252 = vcombine.high %v1244, 0.0
    %v1254 = vunpack.c.l.s4 1934713408
    %v1255 = vunpack.c.0.s8 %v1254
    %v1256 = vlaneseq
    %v1257 = vshrl.u32 %v1256, 7
    %v1258 = vsub.s32 %v1255, %v1257
    %v1259 = vrot.slane %v1244, %v1258
    %v1261 = vunpack.c.l.s4 1934713408
    %v1262 = vunpack.c.0.s8 %v1261
    %v1263 = vlaneseq
    %v1264 = vshrl.u32 %v1263, 7
    %v1265 = vsub.s32 %v1262, %v1264
    %v1266 = vrot.slane %v1252, %v1265
    %v1267 = vcombine.high %v1251, 0.0
    %v1269 = vunpack.c.l.s4 1934713408
    %v1270 = vunpack.c.0.s8 %v1269
    %v1271 = vlaneseq
    %v1272 = vshrl.u32 %v1271, 7
    %v1273 = vsub.s32 %v1270, %v1272
    %v1274 = vrot.slane %v1251, %v1273
    %v1276 = vunpack.c.l.s4 1934713408
    %v1277 = vunpack.c.0.s8 %v1276
    %v1278 = vlaneseq
    %v1279 = vshrl.u32 %v1278, 7
    %v1280 = vsub.s32 %v1277, %v1279
    %v1281 = vrot.slane %v1267, %v1280
    %v1282 = vcombine.high %v1259, 0.0
    %v1283 = vcombine.high %v1266, 0.0
    %v1284 = vcombine.high %v1274, 0.0
    %v1285 = vcombine.high %v1281, 0.0
    %v1286 = vcombine.high %v86, 0.0
    %v1288 = vunpack.c.l.s4 1983009808
    %v1289 = vunpack.c.0.s8 %v1288
    %v1290 = vlaneseq
    %v1291 = vshrl.u32 %v1290, 7
    %v1292 = vsub.s32 %v1289, %v1291
    %v1293 = vrot.slane %v86, %v1292
    %v1295 = vunpack.c.l.s4 1983009808
    %v1296 = vunpack.c.0.s8 %v1295
    %v1297 = vlaneseq
    %v1298 = vshrl.u32 %v1297, 7
    %v1299 = vsub.s32 %v1296, %v1298
    %v1300 = vrot.slane %v1286, %v1299
    %v1301 = vcombine.high %v1293, 0.0
    %v1303 = vunpack.c.l.s4 1934713408
    %v1304 = vunpack.c.0.s8 %v1303
    %v1305 = vlaneseq
    %v1306 = vshrl.u32 %v1305, 7
    %v1307 = vsub.s32 %v1304, %v1306
    %v1308 = vrot.slane %v1293, %v1307
    %v1310 = vunpack.c.l.s4 1934713408
    %v1311 = vunpack.c.0.s8 %v1310
    %v1312 = vlaneseq
    %v1313 = vshrl.u32 %v1312, 7
    %v1314 = vsub.s32 %v1311, %v1313
    %v1315 = vrot.slane %v1301, %v1314
    %v1316 = vcombine.high %v1300, 0.0
    %v1318 = vunpack.c.l.s4 1934713408
    %v1319 = vunpack.c.0.s8 %v1318
    %v1320 = vlaneseq
    %v1321 = vshrl.u32 %v1320, 7
    %v1322 = vsub.s32 %v1319, %v1321
    %v1323 = vrot.slane %v1300, %v1322
    %v1325 = vunpack.c.l.s4 1934713408
    %v1326 = vunpack.c.0.s8 %v1325
    %v1327 = vlaneseq
    %v1328 = vshrl.u32 %v1327, 7
    %v1329 = vsub.s32 %v1326, %v1328
    %v1330 = vrot.slane %v1316, %v1329
    %v1331 = vcombine.high %v1308, 0.0
    %v1332 = vcombine.high %v1315, 0.0
    %v1333 = vcombine.high %v1323, 0.0
    %v1334 = vcombine.high %v1330, 0.0
    %v1335 = vcombine.high %v87, 0.0
    %v1337 = vunpack.c.l.s4 1983009808
    %v1338 = vunpack.c.0.s8 %v1337
    %v1339 = vlaneseq
    %v1340 = vshrl.u32 %v1339, 7
    %v1341 = vsub.s32 %v1338, %v1340
    %v1342 = vrot.slane %v87, %v1341
    %v1344 = vunpack.c.l.s4 1983009808
    %v1345 = vunpack.c.0.s8 %v1344
    %v1346 = vlaneseq
    %v1347 = vshrl.u32 %v1346, 7
    %v1348 = vsub.s32 %v1345, %v1347
    %v1349 = vrot.slane %v1335, %v1348
    %v1350 = vcombine.high %v1342, 0.0
    %v1352 = vunpack.c.l.s4 1934713408
    %v1353 = vunpack.c.0.s8 %v1352
    %v1354 = vlaneseq
    %v1355 = vshrl.u32 %v1354, 7
    %v1356 = vsub.s32 %v1353, %v1355
    %v1357 = vrot.slane %v1342, %v1356
    %v1359 = vunpack.c.l.s4 1934713408
    %v1360 = vunpack.c.0.s8 %v1359
    %v1361 = vlaneseq
    %v1362 = vshrl.u32 %v1361, 7
    %v1363 = vsub.s32 %v1360, %v1362
    %v1364 = vrot.slane %v1350, %v1363
    %v1365 = vcombine.high %v1349, 0.0
    %v1367 = vunpack.c.l.s4 1934713408
    %v1368 = vunpack.c.0.s8 %v1367
    %v1369 = vlaneseq
    %v1370 = vshrl.u32 %v1369, 7
    %v1371 = vsub.s32 %v1368, %v1370
    %v1372 = vrot.slane %v1349, %v1371
    %v1374 = vunpack.c.l.s4 1934713408
    %v1375 = vunpack.c.0.s8 %v1374
    %v1376 = vlaneseq
    %v1377 = vshrl.u32 %v1376, 7
    %v1378 = vsub.s32 %v1375, %v1377
    %v1379 = vrot.slane %v1365, %v1378
    %v1380 = vcombine.high %v1357, 0.0
    %v1381 = vcombine.high %v1364, 0.0
    %v1382 = vcombine.high %v1372, 0.0
    %v1383 = vcombine.high %v1379, 0.0
    %v1384 = vcombine.high %v88, 0.0
    %v1386 = vunpack.c.l.s4 1983009808
    %v1387 = vunpack.c.0.s8 %v1386
    %v1388 = vlaneseq
    %v1389 = vshrl.u32 %v1388, 7
    %v1390 = vsub.s32 %v1387, %v1389
    %v1391 = vrot.slane %v88, %v1390
    %v1393 = vunpack.c.l.s4 1983009808
    %v1394 = vunpack.c.0.s8 %v1393
    %v1395 = vlaneseq
    %v1396 = vshrl.u32 %v1395, 7
    %v1397 = vsub.s32 %v1394, %v1396
    %v1398 = vrot.slane %v1384, %v1397
    %v1399 = vcombine.high %v1391, 0.0
    %v1401 = vunpack.c.l.s4 1934713408
    %v1402 = vunpack.c.0.s8 %v1401
    %v1403 = vlaneseq
    %v1404 = vshrl.u32 %v1403, 7
    %v1405 = vsub.s32 %v1402, %v1404
    %v1406 = vrot.slane %v1391, %v1405
    %v1408 = vunpack.c.l.s4 1934713408
    %v1409 = vunpack.c.0.s8 %v1408
    %v1410 = vlaneseq
    %v1411 = vshrl.u32 %v1410, 7
    %v1412 = vsub.s32 %v1409, %v1411
    %v1413 = vrot.slane %v1399, %v1412
    %v1414 = vcombine.high %v1398, 0.0
    %v1416 = vunpack.c.l.s4 1934713408
    %v1417 = vunpack.c.0.s8 %v1416
    %v1418 = vlaneseq
    %v1419 = vshrl.u32 %v1418, 7
    %v1420 = vsub.s32 %v1417, %v1419
    %v1421 = vrot.slane %v1398, %v1420
    %v1423 = vunpack.c.l.s4 1934713408
    %v1424 = vunpack.c.0.s8 %v1423
    %v1425 = vlaneseq
    %v1426 = vshrl.u32 %v1425, 7
    %v1427 = vsub.s32 %v1424, %v1426
    %v1428 = vrot.slane %v1414, %v1427
    %v1429 = vcombine.high %v1406, 0.0
    %v1430 = vcombine.high %v1413, 0.0
    %v1431 = vcombine.high %v1421, 0.0
    %v1432 = vcombine.high %v1428, 0.0
    %v1433 = vcombine.high %v89, 0.0
    %v1435 = vunpack.c.l.s4 1983009808
    %v1436 = vunpack.c.0.s8 %v1435
    %v1437 = vlaneseq
    %v1438 = vshrl.u32 %v1437, 7
    %v1439 = vsub.s32 %v1436, %v1438
    %v1440 = vrot.slane %v89, %v1439
    %v1442 = vunpack.c.l.s4 1983009808
    %v1443 = vunpack.c.0.s8 %v1442
    %v1444 = vlaneseq
    %v1445 = vshrl.u32 %v1444, 7
    %v1446 = vsub.s32 %v1443, %v1445
    %v1447 = vrot.slane %v1433, %v1446
    %v1448 = vcombine.high %v1440, 0.0
    %v1450 = vunpack.c.l.s4 1934713408
    %v1451 = vunpack.c.0.s8 %v1450
    %v1452 = vlaneseq
    %v1453 = vshrl.u32 %v1452, 7
    %v1454 = vsub.s32 %v1451, %v1453
    %v1455 = vrot.slane %v1440, %v1454
    %v1457 = vunpack.c.l.s4 1934713408
    %v1458 = vunpack.c.0.s8 %v1457
    %v1459 = vlaneseq
    %v1460 = vshrl.u32 %v1459, 7
    %v1461 = vsub.s32 %v1458, %v1460
    %v1462 = vrot.slane %v1448, %v1461
    %v1463 = vcombine.high %v1447, 0.0
    %v1465 = vunpack.c.l.s4 1934713408
    %v1466 = vunpack.c.0.s8 %v1465
    %v1467 = vlaneseq
    %v1468 = vshrl.u32 %v1467, 7
    %v1469 = vsub.s32 %v1466, %v1468
    %v1470 = vrot.slane %v1447, %v1469
    %v1472 = vunpack.c.l.s4 1934713408
    %v1473 = vunpack.c.0.s8 %v1472
    %v1474 = vlaneseq
    %v1475 = vshrl.u32 %v1474, 7
    %v1476 = vsub.s32 %v1473, %v1475
    %v1477 = vrot.slane %v1463, %v1476
    %v1478 = vcombine.high %v1455, 0.0
    %v1479 = vcombine.high %v1462, 0.0
    %v1480 = vcombine.high %v1470, 0.0
    %v1481 = vcombine.high %v1477, 0.0
    %v1482 = vcombine.high %v90, 0.0
    %v1484 = vunpack.c.l.s4 1983009808
    %v1485 = vunpack.c.0.s8 %v1484
    %v1486 = vlaneseq
    %v1487 = vshrl.u32 %v1486, 7
    %v1488 = vsub.s32 %v1485, %v1487
    %v1489 = vrot.slane %v90, %v1488
    %v1491 = vunpack.c.l.s4 1983009808
    %v1492 = vunpack.c.0.s8 %v1491
    %v1493 = vlaneseq
    %v1494 = vshrl.u32 %v1493, 7
    %v1495 = vsub.s32 %v1492, %v1494
    %v1496 = vrot.slane %v1482, %v1495
    %v1497 = vcombine.high %v1489, 0.0
    %v1499 = vunpack.c.l.s4 1934713408
    %v1500 = vunpack.c.0.s8 %v1499
    %v1501 = vlaneseq
    %v1502 = vshrl.u32 %v1501, 7
    %v1503 = vsub.s32 %v1500, %v1502
    %v1504 = vrot.slane %v1489, %v1503
    %v1506 = vunpack.c.l.s4 1934713408
    %v1507 = vunpack.c.0.s8 %v1506
    %v1508 = vlaneseq
    %v1509 = vshrl.u32 %v1508, 7
    %v1510 = vsub.s32 %v1507, %v1509
    %v1511 = vrot.slane %v1497, %v1510
    %v1512 = vcombine.high %v1496, 0.0
    %v1514 = vunpack.c.l.s4 1934713408
    %v1515 = vunpack.c.0.s8 %v1514
    %v1516 = vlaneseq
    %v1517 = vshrl.u32 %v1516, 7
    %v1518 = vsub.s32 %v1515, %v1517
    %v1519 = vrot.slane %v1496, %v1518
    %v1521 = vunpack.c.l.s4 1934713408
    %v1522 = vunpack.c.0.s8 %v1521
    %v1523 = vlaneseq
    %v1524 = vshrl.u32 %v1523, 7
    %v1525 = vsub.s32 %v1522, %v1524
    %v1526 = vrot.slane %v1512, %v1525
    %v1527 = vcombine.high %v1504, 0.0
    %v1528 = vcombine.high %v1511, 0.0
    %v1529 = vcombine.high %v1519, 0.0
    %v1530 = vcombine.high %v1526, 0.0
    %v1531 = vcombine.high %v91, 0.0
    %v1533 = vunpack.c.l.s4 1983009808
    %v1534 = vunpack.c.0.s8 %v1533
    %v1535 = vlaneseq
    %v1536 = vshrl.u32 %v1535, 7
    %v1537 = vsub.s32 %v1534, %v1536
    %v1538 = vrot.slane %v91, %v1537
    %v1540 = vunpack.c.l.s4 1983009808
    %v1541 = vunpack.c.0.s8 %v1540
    %v1542 = vlaneseq
    %v1543 = vshrl.u32 %v1542, 7
    %v1544 = vsub.s32 %v1541, %v1543
    %v1545 = vrot.slane %v1531, %v1544
    %v1546 = vcombine.high %v1538, 0.0
    %v1548 = vunpack.c.l.s4 1934713408
    %v1549 = vunpack.c.0.s8 %v1548
    %v1550 = vlaneseq
    %v1551 = vshrl.u32 %v1550, 7
    %v1552 = vsub.s32 %v1549, %v1551
    %v1553 = vrot.slane %v1538, %v1552
    %v1555 = vunpack.c.l.s4 1934713408
    %v1556 = vunpack.c.0.s8 %v1555
    %v1557 = vlaneseq
    %v1558 = vshrl.u32 %v1557, 7
    %v1559 = vsub.s32 %v1556, %v1558
    %v1560 = vrot.slane %v1546, %v1559
    %v1561 = vcombine.high %v1545, 0.0
    %v1563 = vunpack.c.l.s4 1934713408
    %v1564 = vunpack.c.0.s8 %v1563
    %v1565 = vlaneseq
    %v1566 = vshrl.u32 %v1565, 7
    %v1567 = vsub.s32 %v1564, %v1566
    %v1568 = vrot.slane %v1545, %v1567
    %v1570 = vunpack.c.l.s4 1934713408
    %v1571 = vunpack.c.0.s8 %v1570
    %v1572 = vlaneseq
    %v1573 = vshrl.u32 %v1572, 7
    %v1574 = vsub.s32 %v1571, %v1573
    %v1575 = vrot.slane %v1561, %v1574
    %v1576 = vcombine.high %v1553, 0.0
    %v1577 = vcombine.high %v1560, 0.0
    %v1578 = vcombine.high %v1568, 0.0
    %v1579 = vcombine.high %v1575, 0.0
    %v1580 = vcombine.high %v92, 0.0
    %v1582 = vunpack.c.l.s4 1983009808
    %v1583 = vunpack.c.0.s8 %v1582
    %v1584 = vlaneseq
    %v1585 = vshrl.u32 %v1584, 7
    %v1586 = vsub.s32 %v1583, %v1585
    %v1587 = vrot.slane %v92, %v1586
    %v1589 = vunpack.c.l.s4 1983009808
    %v1590 = vunpack.c.0.s8 %v1589
    %v1591 = vlaneseq
    %v1592 = vshrl.u32 %v1591, 7
    %v1593 = vsub.s32 %v1590, %v1592
    %v1594 = vrot.slane %v1580, %v1593
    %v1595 = vcombine.high %v1587, 0.0
    %v1597 = vunpack.c.l.s4 1934713408
    %v1598 = vunpack.c.0.s8 %v1597
    %v1599 = vlaneseq
    %v1600 = vshrl.u32 %v1599, 7
    %v1601 = vsub.s32 %v1598, %v1600
    %v1602 = vrot.slane %v1587, %v1601
    %v1604 = vunpack.c.l.s4 1934713408
    %v1605 = vunpack.c.0.s8 %v1604
    %v1606 = vlaneseq
    %v1607 = vshrl.u32 %v1606, 7
    %v1608 = vsub.s32 %v1605, %v1607
    %v1609 = vrot.slane %v1595, %v1608
    %v1610 = vcombine.high %v1594, 0.0
    %v1612 = vunpack.c.l.s4 1934713408
    %v1613 = vunpack.c.0.s8 %v1612
    %v1614 = vlaneseq
    %v1615 = vshrl.u32 %v1614, 7
    %v1616 = vsub.s32 %v1613, %v1615
    %v1617 = vrot.slane %v1594, %v1616
    %v1619 = vunpack.c.l.s4 1934713408
    %v1620 = vunpack.c.0.s8 %v1619
    %v1621 = vlaneseq
    %v1622 = vshrl.u32 %v1621, 7
    %v1623 = vsub.s32 %v1620, %v1622
    %v1624 = vrot.slane %v1610, %v1623
    %v1625 = vcombine.high %v1602, 0.0
    %v1626 = vcombine.high %v1609, 0.0
    %v1627 = vcombine.high %v1617, 0.0
    %v1628 = vcombine.high %v1624, 0.0
    %v1629 = vcombine.high %v93, 0.0
    %v1631 = vunpack.c.l.s4 1983009808
    %v1632 = vunpack.c.0.s8 %v1631
    %v1633 = vlaneseq
    %v1634 = vshrl.u32 %v1633, 7
    %v1635 = vsub.s32 %v1632, %v1634
    %v1636 = vrot.slane %v93, %v1635
    %v1638 = vunpack.c.l.s4 1983009808
    %v1639 = vunpack.c.0.s8 %v1638
    %v1640 = vlaneseq
    %v1641 = vshrl.u32 %v1640, 7
    %v1642 = vsub.s32 %v1639, %v1641
    %v1643 = vrot.slane %v1629, %v1642
    %v1644 = vcombine.high %v1636, 0.0
    %v1646 = vunpack.c.l.s4 1934713408
    %v1647 = vunpack.c.0.s8 %v1646
    %v1648 = vlaneseq
    %v1649 = vshrl.u32 %v1648, 7
    %v1650 = vsub.s32 %v1647, %v1649
    %v1651 = vrot.slane %v1636, %v1650
    %v1653 = vunpack.c.l.s4 1934713408
    %v1654 = vunpack.c.0.s8 %v1653
    %v1655 = vlaneseq
    %v1656 = vshrl.u32 %v1655, 7
    %v1657 = vsub.s32 %v1654, %v1656
    %v1658 = vrot.slane %v1644, %v1657
    %v1659 = vcombine.high %v1643, 0.0
    %v1661 = vunpack.c.l.s4 1934713408
    %v1662 = vunpack.c.0.s8 %v1661
    %v1663 = vlaneseq
    %v1664 = vshrl.u32 %v1663, 7
    %v1665 = vsub.s32 %v1662, %v1664
    %v1666 = vrot.slane %v1643, %v1665
    %v1668 = vunpack.c.l.s4 1934713408
    %v1669 = vunpack.c.0.s8 %v1668
    %v1670 = vlaneseq
    %v1671 = vshrl.u32 %v1670, 7
    %v1672 = vsub.s32 %v1669, %v1671
    %v1673 = vrot.slane %v1659, %v1672
    %v1674 = vcombine.high %v1651, 0.0
    %v1675 = vcombine.high %v1658, 0.0
    %v1676 = vcombine.high %v1666, 0.0
    %v1677 = vcombine.high %v1673, 0.0
    %v1678 = vcombine.high %v94, 0.0
    %v1680 = vunpack.c.l.s4 1983009808
    %v1681 = vunpack.c.0.s8 %v1680
    %v1682 = vlaneseq
    %v1683 = vshrl.u32 %v1682, 7
    %v1684 = vsub.s32 %v1681, %v1683
    %v1685 = vrot.slane %v94, %v1684
    %v1687 = vunpack.c.l.s4 1983009808
    %v1688 = vunpack.c.0.s8 %v1687
    %v1689 = vlaneseq
    %v1690 = vshrl.u32 %v1689, 7
    %v1691 = vsub.s32 %v1688, %v1690
    %v1692 = vrot.slane %v1678, %v1691
    %v1693 = vcombine.high %v1685, 0.0
    %v1695 = vunpack.c.l.s4 1934713408
    %v1696 = vunpack.c.0.s8 %v1695
    %v1697 = vlaneseq
    %v1698 = vshrl.u32 %v1697, 7
    %v1699 = vsub.s32 %v1696, %v1698
    %v1700 = vrot.slane %v1685, %v1699
    %v1702 = vunpack.c.l.s4 1934713408
    %v1703 = vunpack.c.0.s8 %v1702
    %v1704 = vlaneseq
    %v1705 = vshrl.u32 %v1704, 7
    %v1706 = vsub.s32 %v1703, %v1705
    %v1707 = vrot.slane %v1693, %v1706
    %v1708 = vcombine.high %v1692, 0.0
    %v1710 = vunpack.c.l.s4 1934713408
    %v1711 = vunpack.c.0.s8 %v1710
    %v1712 = vlaneseq
    %v1713 = vshrl.u32 %v1712, 7
    %v1714 = vsub.s32 %v1711, %v1713
    %v1715 = vrot.slane %v1692, %v1714
    %v1717 = vunpack.c.l.s4 1934713408
    %v1718 = vunpack.c.0.s8 %v1717
    %v1719 = vlaneseq
    %v1720 = vshrl.u32 %v1719, 7
    %v1721 = vsub.s32 %v1718, %v1720
    %v1722 = vrot.slane %v1708, %v1721
    %v1723 = vcombine.high %v1700, 0.0
    %v1724 = vcombine.high %v1707, 0.0
    %v1725 = vcombine.high %v1715, 0.0
    %v1726 = vcombine.high %v1722, 0.0
    %v1727 = vcombine.high %v111, 0.0
    %v1729 = vunpack.c.l.s4 1983009808
    %v1730 = vunpack.c.0.s8 %v1729
    %v1731 = vlaneseq
    %v1732 = vshrl.u32 %v1731, 7
    %v1733 = vsub.s32 %v1730, %v1732
    %v1734 = vrot.slane %v111, %v1733
    %v1736 = vunpack.c.l.s4 1983009808
    %v1737 = vunpack.c.0.s8 %v1736
    %v1738 = vlaneseq
    %v1739 = vshrl.u32 %v1738, 7
    %v1740 = vsub.s32 %v1737, %v1739
    %v1741 = vrot.slane %v1727, %v1740
    %v1742 = vcombine.high %v1734, 0.0
    %v1744 = vunpack.c.l.s4 1934713408
    %v1745 = vunpack.c.0.s8 %v1744
    %v1746 = vlaneseq
    %v1747 = vshrl.u32 %v1746, 7
    %v1748 = vsub.s32 %v1745, %v1747
    %v1749 = vrot.slane %v1734, %v1748
    %v1751 = vunpack.c.l.s4 1934713408
    %v1752 = vunpack.c.0.s8 %v1751
    %v1753 = vlaneseq
    %v1754 = vshrl.u32 %v1753, 7
    %v1755 = vsub.s32 %v1752, %v1754
    %v1756 = vrot.slane %v1742, %v1755
    %v1757 = vcombine.high %v1741, 0.0
    %v1759 = vunpack.c.l.s4 1934713408
    %v1760 = vunpack.c.0.s8 %v1759
    %v1761 = vlaneseq
    %v1762 = vshrl.u32 %v1761, 7
    %v1763 = vsub.s32 %v1760, %v1762
    %v1764 = vrot.slane %v1741, %v1763
    %v1766 = vunpack.c.l.s4 1934713408
    %v1767 = vunpack.c.0.s8 %v1766
    %v1768 = vlaneseq
    %v1769 = vshrl.u32 %v1768, 7
    %v1770 = vsub.s32 %v1767, %v1769
    %v1771 = vrot.slane %v1757, %v1770
    %v1772 = vcombine.high %v1749, 0.0
    %v1773 = vcombine.high %v1756, 0.0
    %v1774 = vcombine.high %v1764, 0.0
    %v1775 = vcombine.high %v1771, 0.0
    %v1776 = vcombine.high %v112, 0.0
    %v1778 = vunpack.c.l.s4 1983009808
    %v1779 = vunpack.c.0.s8 %v1778
    %v1780 = vlaneseq
    %v1781 = vshrl.u32 %v1780, 7
    %v1782 = vsub.s32 %v1779, %v1781
    %v1783 = vrot.slane %v112, %v1782
    %v1785 = vunpack.c.l.s4 1983009808
    %v1786 = vunpack.c.0.s8 %v1785
    %v1787 = vlaneseq
    %v1788 = vshrl.u32 %v1787, 7
    %v1789 = vsub.s32 %v1786, %v1788
    %v1790 = vrot.slane %v1776, %v1789
    %v1791 = vcombine.high %v1783, 0.0
    %v1793 = vunpack.c.l.s4 1934713408
    %v1794 = vunpack.c.0.s8 %v1793
    %v1795 = vlaneseq
    %v1796 = vshrl.u32 %v1795, 7
    %v1797 = vsub.s32 %v1794, %v1796
    %v1798 = vrot.slane %v1783, %v1797
    %v1800 = vunpack.c.l.s4 1934713408
    %v1801 = vunpack.c.0.s8 %v1800
    %v1802 = vlaneseq
    %v1803 = vshrl.u32 %v1802, 7
    %v1804 = vsub.s32 %v1801, %v1803
    %v1805 = vrot.slane %v1791, %v1804
    %v1806 = vcombine.high %v1790, 0.0
    %v1808 = vunpack.c.l.s4 1934713408
    %v1809 = vunpack.c.0.s8 %v1808
    %v1810 = vlaneseq
    %v1811 = vshrl.u32 %v1810, 7
    %v1812 = vsub.s32 %v1809, %v1811
    %v1813 = vrot.slane %v1790, %v1812
    %v1815 = vunpack.c.l.s4 1934713408
    %v1816 = vunpack.c.0.s8 %v1815
    %v1817 = vlaneseq
    %v1818 = vshrl.u32 %v1817, 7
    %v1819 = vsub.s32 %v1816, %v1818
    %v1820 = vrot.slane %v1806, %v1819
    %v1821 = vcombine.high %v1798, 0.0
    %v1822 = vcombine.high %v1805, 0.0
    %v1823 = vcombine.high %v1813, 0.0
    %v1824 = vcombine.high %v1820, 0.0
    %v1825 = vcombine.high %v113, 0.0
    %v1827 = vunpack.c.l.s4 1983009808
    %v1828 = vunpack.c.0.s8 %v1827
    %v1829 = vlaneseq
    %v1830 = vshrl.u32 %v1829, 7
    %v1831 = vsub.s32 %v1828, %v1830
    %v1832 = vrot.slane %v113, %v1831
    %v1834 = vunpack.c.l.s4 1983009808
    %v1835 = vunpack.c.0.s8 %v1834
    %v1836 = vlaneseq
    %v1837 = vshrl.u32 %v1836, 7
    %v1838 = vsub.s32 %v1835, %v1837
    %v1839 = vrot.slane %v1825, %v1838
    %v1840 = vcombine.high %v1832, 0.0
    %v1842 = vunpack.c.l.s4 1934713408
    %v1843 = vunpack.c.0.s8 %v1842
    %v1844 = vlaneseq
    %v1845 = vshrl.u32 %v1844, 7
    %v1846 = vsub.s32 %v1843, %v1845
    %v1847 = vrot.slane %v1832, %v1846
    %v1849 = vunpack.c.l.s4 1934713408
    %v1850 = vunpack.c.0.s8 %v1849
    %v1851 = vlaneseq
    %v1852 = vshrl.u32 %v1851, 7
    %v1853 = vsub.s32 %v1850, %v1852
    %v1854 = vrot.slane %v1840, %v1853
    %v1855 = vcombine.high %v1839, 0.0
    %v1857 = vunpack.c.l.s4 1934713408
    %v1858 = vunpack.c.0.s8 %v1857
    %v1859 = vlaneseq
    %v1860 = vshrl.u32 %v1859, 7
    %v1861 = vsub.s32 %v1858, %v1860
    %v1862 = vrot.slane %v1839, %v1861
    %v1864 = vunpack.c.l.s4 1934713408
    %v1865 = vunpack.c.0.s8 %v1864
    %v1866 = vlaneseq
    %v1867 = vshrl.u32 %v1866, 7
    %v1868 = vsub.s32 %v1865, %v1867
    %v1869 = vrot.slane %v1855, %v1868
    %v1870 = vcombine.high %v1847, 0.0
    %v1871 = vcombine.high %v1854, 0.0
    %v1872 = vcombine.high %v1862, 0.0
    %v1873 = vcombine.high %v1869, 0.0
    %v1874 = vcombine.high %v114, 0.0
    %v1876 = vunpack.c.l.s4 1983009808
    %v1877 = vunpack.c.0.s8 %v1876
    %v1878 = vlaneseq
    %v1879 = vshrl.u32 %v1878, 7
    %v1880 = vsub.s32 %v1877, %v1879
    %v1881 = vrot.slane %v114, %v1880
    %v1883 = vunpack.c.l.s4 1983009808
    %v1884 = vunpack.c.0.s8 %v1883
    %v1885 = vlaneseq
    %v1886 = vshrl.u32 %v1885, 7
    %v1887 = vsub.s32 %v1884, %v1886
    %v1888 = vrot.slane %v1874, %v1887
    %v1889 = vcombine.high %v1881, 0.0
    %v1891 = vunpack.c.l.s4 1934713408
    %v1892 = vunpack.c.0.s8 %v1891
    %v1893 = vlaneseq
    %v1894 = vshrl.u32 %v1893, 7
    %v1895 = vsub.s32 %v1892, %v1894
    %v1896 = vrot.slane %v1881, %v1895
    %v1898 = vunpack.c.l.s4 1934713408
    %v1899 = vunpack.c.0.s8 %v1898
    %v1900 = vlaneseq
    %v1901 = vshrl.u32 %v1900, 7
    %v1902 = vsub.s32 %v1899, %v1901
    %v1903 = vrot.slane %v1889, %v1902
    %v1904 = vcombine.high %v1888, 0.0
    %v1906 = vunpack.c.l.s4 1934713408
    %v1907 = vunpack.c.0.s8 %v1906
    %v1908 = vlaneseq
    %v1909 = vshrl.u32 %v1908, 7
    %v1910 = vsub.s32 %v1907, %v1909
    %v1911 = vrot.slane %v1888, %v1910
    %v1913 = vunpack.c.l.s4 1934713408
    %v1914 = vunpack.c.0.s8 %v1913
    %v1915 = vlaneseq
    %v1916 = vshrl.u32 %v1915, 7
    %v1917 = vsub.s32 %v1914, %v1916
    %v1918 = vrot.slane %v1904, %v1917
    %v1919 = vcombine.high %v1896, 0.0
    %v1920 = vcombine.high %v1903, 0.0
    %v1921 = vcombine.high %v1911, 0.0
    %v1922 = vcombine.high %v1918, 0.0
    %v1923 = vcombine.high %v115, 0.0
    %v1925 = vunpack.c.l.s4 1983009808
    %v1926 = vunpack.c.0.s8 %v1925
    %v1927 = vlaneseq
    %v1928 = vshrl.u32 %v1927, 7
    %v1929 = vsub.s32 %v1926, %v1928
    %v1930 = vrot.slane %v115, %v1929
    %v1932 = vunpack.c.l.s4 1983009808
    %v1933 = vunpack.c.0.s8 %v1932
    %v1934 = vlaneseq
    %v1935 = vshrl.u32 %v1934, 7
    %v1936 = vsub.s32 %v1933, %v1935
    %v1937 = vrot.slane %v1923, %v1936
    %v1938 = vcombine.high %v1930, 0.0
    %v1940 = vunpack.c.l.s4 1934713408
    %v1941 = vunpack.c.0.s8 %v1940
    %v1942 = vlaneseq
    %v1943 = vshrl.u32 %v1942, 7
    %v1944 = vsub.s32 %v1941, %v1943
    %v1945 = vrot.slane %v1930, %v1944
    %v1947 = vunpack.c.l.s4 1934713408
    %v1948 = vunpack.c.0.s8 %v1947
    %v1949 = vlaneseq
    %v1950 = vshrl.u32 %v1949, 7
    %v1951 = vsub.s32 %v1948, %v1950
    %v1952 = vrot.slane %v1938, %v1951
    %v1953 = vcombine.high %v1937, 0.0
    %v1955 = vunpack.c.l.s4 1934713408
    %v1956 = vunpack.c.0.s8 %v1955
    %v1957 = vlaneseq
    %v1958 = vshrl.u32 %v1957, 7
    %v1959 = vsub.s32 %v1956, %v1958
    %v1960 = vrot.slane %v1937, %v1959
    %v1962 = vunpack.c.l.s4 1934713408
    %v1963 = vunpack.c.0.s8 %v1962
    %v1964 = vlaneseq
    %v1965 = vshrl.u32 %v1964, 7
    %v1966 = vsub.s32 %v1963, %v1965
    %v1967 = vrot.slane %v1953, %v1966
    %v1968 = vcombine.high %v1945, 0.0
    %v1969 = vcombine.high %v1952, 0.0
    %v1970 = vcombine.high %v1960, 0.0
    %v1971 = vcombine.high %v1967, 0.0
    %v1972 = vcombine.high %v116, 0.0
    %v1974 = vunpack.c.l.s4 1983009808
    %v1975 = vunpack.c.0.s8 %v1974
    %v1976 = vlaneseq
    %v1977 = vshrl.u32 %v1976, 7
    %v1978 = vsub.s32 %v1975, %v1977
    %v1979 = vrot.slane %v116, %v1978
    %v1981 = vunpack.c.l.s4 1983009808
    %v1982 = vunpack.c.0.s8 %v1981
    %v1983 = vlaneseq
    %v1984 = vshrl.u32 %v1983, 7
    %v1985 = vsub.s32 %v1982, %v1984
    %v1986 = vrot.slane %v1972, %v1985
    %v1987 = vcombine.high %v1979, 0.0
    %v1989 = vunpack.c.l.s4 1934713408
    %v1990 = vunpack.c.0.s8 %v1989
    %v1991 = vlaneseq
    %v1992 = vshrl.u32 %v1991, 7
    %v1993 = vsub.s32 %v1990, %v1992
    %v1994 = vrot.slane %v1979, %v1993
    %v1996 = vunpack.c.l.s4 1934713408
    %v1997 = vunpack.c.0.s8 %v1996
    %v1998 = vlaneseq
    %v1999 = vshrl.u32 %v1998, 7
    %v2000 = vsub.s32 %v1997, %v1999
    %v2001 = vrot.slane %v1987, %v2000
    %v2002 = vcombine.high %v1986, 0.0
    %v2004 = vunpack.c.l.s4 1934713408
    %v2005 = vunpack.c.0.s8 %v2004
    %v2006 = vlaneseq
    %v2007 = vshrl.u32 %v2006, 7
    %v2008 = vsub.s32 %v2005, %v2007
    %v2009 = vrot.slane %v1986, %v2008
    %v2011 = vunpack.c.l.s4 1934713408
    %v2012 = vunpack.c.0.s8 %v2011
    %v2013 = vlaneseq
    %v2014 = vshrl.u32 %v2013, 7
    %v2015 = vsub.s32 %v2012, %v2014
    %v2016 = vrot.slane %v2002, %v2015
    %v2017 = vcombine.high %v1994, 0.0
    %v2018 = vcombine.high %v2001, 0.0
    %v2019 = vcombine.high %v2009, 0.0
    %v2020 = vcombine.high %v2016, 0.0
    %v2021 = vcombine.high %v117, 0.0
    %v2023 = vunpack.c.l.s4 1983009808
    %v2024 = vunpack.c.0.s8 %v2023
    %v2025 = vlaneseq
    %v2026 = vshrl.u32 %v2025, 7
    %v2027 = vsub.s32 %v2024, %v2026
    %v2028 = vrot.slane %v117, %v2027
    %v2030 = vunpack.c.l.s4 1983009808
    %v2031 = vunpack.c.0.s8 %v2030
    %v2032 = vlaneseq
    %v2033 = vshrl.u32 %v2032, 7
    %v2034 = vsub.s32 %v2031, %v2033
    %v2035 = vrot.slane %v2021, %v2034
    %v2036 = vcombine.high %v2028, 0.0
    %v2038 = vunpack.c.l.s4 1934713408
    %v2039 = vunpack.c.0.s8 %v2038
    %v2040 = vlaneseq
    %v2041 = vshrl.u32 %v2040, 7
    %v2042 = vsub.s32 %v2039, %v2041
    %v2043 = vrot.slane %v2028, %v2042
    %v2045 = vunpack.c.l.s4 1934713408
    %v2046 = vunpack.c.0.s8 %v2045
    %v2047 = vlaneseq
    %v2048 = vshrl.u32 %v2047, 7
    %v2049 = vsub.s32 %v2046, %v2048
    %v2050 = vrot.slane %v2036, %v2049
    %v2051 = vcombine.high %v2035, 0.0
    %v2053 = vunpack.c.l.s4 1934713408
    %v2054 = vunpack.c.0.s8 %v2053
    %v2055 = vlaneseq
    %v2056 = vshrl.u32 %v2055, 7
    %v2057 = vsub.s32 %v2054, %v2056
    %v2058 = vrot.slane %v2035, %v2057
    %v2060 = vunpack.c.l.s4 1934713408
    %v2061 = vunpack.c.0.s8 %v2060
    %v2062 = vlaneseq
    %v2063 = vshrl.u32 %v2062, 7
    %v2064 = vsub.s32 %v2061, %v2063
    %v2065 = vrot.slane %v2051, %v2064
    %v2066 = vcombine.high %v2043, 0.0
    %v2067 = vcombine.high %v2050, 0.0
    %v2068 = vcombine.high %v2058, 0.0
    %v2069 = vcombine.high %v2065, 0.0
    %v2070 = vcombine.high %v118, 0.0
    %v2072 = vunpack.c.l.s4 1983009808
    %v2073 = vunpack.c.0.s8 %v2072
    %v2074 = vlaneseq
    %v2075 = vshrl.u32 %v2074, 7
    %v2076 = vsub.s32 %v2073, %v2075
    %v2077 = vrot.slane %v118, %v2076
    %v2079 = vunpack.c.l.s4 1983009808
    %v2080 = vunpack.c.0.s8 %v2079
    %v2081 = vlaneseq
    %v2082 = vshrl.u32 %v2081, 7
    %v2083 = vsub.s32 %v2080, %v2082
    %v2084 = vrot.slane %v2070, %v2083
    %v2085 = vcombine.high %v2077, 0.0
    %v2087 = vunpack.c.l.s4 1934713408
    %v2088 = vunpack.c.0.s8 %v2087
    %v2089 = vlaneseq
    %v2090 = vshrl.u32 %v2089, 7
    %v2091 = vsub.s32 %v2088, %v2090
    %v2092 = vrot.slane %v2077, %v2091
    %v2094 = vunpack.c.l.s4 1934713408
    %v2095 = vunpack.c.0.s8 %v2094
    %v2096 = vlaneseq
    %v2097 = vshrl.u32 %v2096, 7
    %v2098 = vsub.s32 %v2095, %v2097
    %v2099 = vrot.slane %v2085, %v2098
    %v2100 = vcombine.high %v2084, 0.0
    %v2102 = vunpack.c.l.s4 1934713408
    %v2103 = vunpack.c.0.s8 %v2102
    %v2104 = vlaneseq
    %v2105 = vshrl.u32 %v2104, 7
    %v2106 = vsub.s32 %v2103, %v2105
    %v2107 = vrot.slane %v2084, %v2106
    %v2109 = vunpack.c.l.s4 1934713408
    %v2110 = vunpack.c.0.s8 %v2109
    %v2111 = vlaneseq
    %v2112 = vshrl.u32 %v2111, 7
    %v2113 = vsub.s32 %v2110, %v2112
    %v2114 = vrot.slane %v2100, %v2113
    %v2115 = vcombine.high %v2092, 0.0
    %v2116 = vcombine.high %v2099, 0.0
    %v2117 = vcombine.high %v2107, 0.0
    %v2118 = vcombine.high %v2114, 0.0
    %v2119 = vcombine.high %v119, 0.0
    %v2121 = vunpack.c.l.s4 1983009808
    %v2122 = vunpack.c.0.s8 %v2121
    %v2123 = vlaneseq
    %v2124 = vshrl.u32 %v2123, 7
    %v2125 = vsub.s32 %v2122, %v2124
    %v2126 = vrot.slane %v119, %v2125
    %v2128 = vunpack.c.l.s4 1983009808
    %v2129 = vunpack.c.0.s8 %v2128
    %v2130 = vlaneseq
    %v2131 = vshrl.u32 %v2130, 7
    %v2132 = vsub.s32 %v2129, %v2131
    %v2133 = vrot.slane %v2119, %v2132
    %v2134 = vcombine.high %v2126, 0.0
    %v2136 = vunpack.c.l.s4 1934713408
    %v2137 = vunpack.c.0.s8 %v2136
    %v2138 = vlaneseq
    %v2139 = vshrl.u32 %v2138, 7
    %v2140 = vsub.s32 %v2137, %v2139
    %v2141 = vrot.slane %v2126, %v2140
    %v2143 = vunpack.c.l.s4 1934713408
    %v2144 = vunpack.c.0.s8 %v2143
    %v2145 = vlaneseq
    %v2146 = vshrl.u32 %v2145, 7
    %v2147 = vsub.s32 %v2144, %v2146
    %v2148 = vrot.slane %v2134, %v2147
    %v2149 = vcombine.high %v2133, 0.0
    %v2151 = vunpack.c.l.s4 1934713408
    %v2152 = vunpack.c.0.s8 %v2151
    %v2153 = vlaneseq
    %v2154 = vshrl.u32 %v2153, 7
    %v2155 = vsub.s32 %v2152, %v2154
    %v2156 = vrot.slane %v2133, %v2155
    %v2158 = vunpack.c.l.s4 1934713408
    %v2159 = vunpack.c.0.s8 %v2158
    %v2160 = vlaneseq
    %v2161 = vshrl.u32 %v2160, 7
    %v2162 = vsub.s32 %v2159, %v2161
    %v2163 = vrot.slane %v2149, %v2162
    %v2164 = vcombine.high %v2141, 0.0
    %v2165 = vcombine.high %v2148, 0.0
    %v2166 = vcombine.high %v2156, 0.0
    %v2167 = vcombine.high %v2163, 0.0
    %v2168 = vcombine.high %v120, 0.0
    %v2170 = vunpack.c.l.s4 1983009808
    %v2171 = vunpack.c.0.s8 %v2170
    %v2172 = vlaneseq
    %v2173 = vshrl.u32 %v2172, 7
    %v2174 = vsub.s32 %v2171, %v2173
    %v2175 = vrot.slane %v120, %v2174
    %v2177 = vunpack.c.l.s4 1983009808
    %v2178 = vunpack.c.0.s8 %v2177
    %v2179 = vlaneseq
    %v2180 = vshrl.u32 %v2179, 7
    %v2181 = vsub.s32 %v2178, %v2180
    %v2182 = vrot.slane %v2168, %v2181
    %v2183 = vcombine.high %v2175, 0.0
    %v2185 = vunpack.c.l.s4 1934713408
    %v2186 = vunpack.c.0.s8 %v2185
    %v2187 = vlaneseq
    %v2188 = vshrl.u32 %v2187, 7
    %v2189 = vsub.s32 %v2186, %v2188
    %v2190 = vrot.slane %v2175, %v2189
    %v2192 = vunpack.c.l.s4 1934713408
    %v2193 = vunpack.c.0.s8 %v2192
    %v2194 = vlaneseq
    %v2195 = vshrl.u32 %v2194, 7
    %v2196 = vsub.s32 %v2193, %v2195
    %v2197 = vrot.slane %v2183, %v2196
    %v2198 = vcombine.high %v2182, 0.0
    %v2200 = vunpack.c.l.s4 1934713408
    %v2201 = vunpack.c.0.s8 %v2200
    %v2202 = vlaneseq
    %v2203 = vshrl.u32 %v2202, 7
    %v2204 = vsub.s32 %v2201, %v2203
    %v2205 = vrot.slane %v2182, %v2204
    %v2207 = vunpack.c.l.s4 1934713408
    %v2208 = vunpack.c.0.s8 %v2207
    %v2209 = vlaneseq
    %v2210 = vshrl.u32 %v2209, 7
    %v2211 = vsub.s32 %v2208, %v2210
    %v2212 = vrot.slane %v2198, %v2211
    %v2213 = vcombine.high %v2190, 0.0
    %v2214 = vcombine.high %v2197, 0.0
    %v2215 = vcombine.high %v2205, 0.0
    %v2216 = vcombine.high %v2212, 0.0
    %v2217 = vcombine.high %v121, 0.0
    %v2219 = vunpack.c.l.s4 1983009808
    %v2220 = vunpack.c.0.s8 %v2219
    %v2221 = vlaneseq
    %v2222 = vshrl.u32 %v2221, 7
    %v2223 = vsub.s32 %v2220, %v2222
    %v2224 = vrot.slane %v121, %v2223
    %v2226 = vunpack.c.l.s4 1983009808
    %v2227 = vunpack.c.0.s8 %v2226
    %v2228 = vlaneseq
    %v2229 = vshrl.u32 %v2228, 7
    %v2230 = vsub.s32 %v2227, %v2229
    %v2231 = vrot.slane %v2217, %v2230
    %v2232 = vcombine.high %v2224, 0.0
    %v2234 = vunpack.c.l.s4 1934713408
    %v2235 = vunpack.c.0.s8 %v2234
    %v2236 = vlaneseq
    %v2237 = vshrl.u32 %v2236, 7
    %v2238 = vsub.s32 %v2235, %v2237
    %v2239 = vrot.slane %v2224, %v2238
    %v2241 = vunpack.c.l.s4 1934713408
    %v2242 = vunpack.c.0.s8 %v2241
    %v2243 = vlaneseq
    %v2244 = vshrl.u32 %v2243, 7
    %v2245 = vsub.s32 %v2242, %v2244
    %v2246 = vrot.slane %v2232, %v2245
    %v2247 = vcombine.high %v2231, 0.0
    %v2249 = vunpack.c.l.s4 1934713408
    %v2250 = vunpack.c.0.s8 %v2249
    %v2251 = vlaneseq
    %v2252 = vshrl.u32 %v2251, 7
    %v2253 = vsub.s32 %v2250, %v2252
    %v2254 = vrot.slane %v2231, %v2253
    %v2256 = vunpack.c.l.s4 1934713408
    %v2257 = vunpack.c.0.s8 %v2256
    %v2258 = vlaneseq
    %v2259 = vshrl.u32 %v2258, 7
    %v2260 = vsub.s32 %v2257, %v2259
    %v2261 = vrot.slane %v2247, %v2260
    %v2262 = vcombine.high %v2239, 0.0
    %v2263 = vcombine.high %v2246, 0.0
    %v2264 = vcombine.high %v2254, 0.0
    %v2265 = vcombine.high %v2261, 0.0
    %v2266 = vcombine.high %v122, 0.0
    %v2268 = vunpack.c.l.s4 1983009808
    %v2269 = vunpack.c.0.s8 %v2268
    %v2270 = vlaneseq
    %v2271 = vshrl.u32 %v2270, 7
    %v2272 = vsub.s32 %v2269, %v2271
    %v2273 = vrot.slane %v122, %v2272
    %v2275 = vunpack.c.l.s4 1983009808
    %v2276 = vunpack.c.0.s8 %v2275
    %v2277 = vlaneseq
    %v2278 = vshrl.u32 %v2277, 7
    %v2279 = vsub.s32 %v2276, %v2278
    %v2280 = vrot.slane %v2266, %v2279
    %v2281 = vcombine.high %v2273, 0.0
    %v2283 = vunpack.c.l.s4 1934713408
    %v2284 = vunpack.c.0.s8 %v2283
    %v2285 = vlaneseq
    %v2286 = vshrl.u32 %v2285, 7
    %v2287 = vsub.s32 %v2284, %v2286
    %v2288 = vrot.slane %v2273, %v2287
    %v2290 = vunpack.c.l.s4 1934713408
    %v2291 = vunpack.c.0.s8 %v2290
    %v2292 = vlaneseq
    %v2293 = vshrl.u32 %v2292, 7
    %v2294 = vsub.s32 %v2291, %v2293
    %v2295 = vrot.slane %v2281, %v2294
    %v2296 = vcombine.high %v2280, 0.0
    %v2298 = vunpack.c.l.s4 1934713408
    %v2299 = vunpack.c.0.s8 %v2298
    %v2300 = vlaneseq
    %v2301 = vshrl.u32 %v2300, 7
    %v2302 = vsub.s32 %v2299, %v2301
    %v2303 = vrot.slane %v2280, %v2302
    %v2305 = vunpack.c.l.s4 1934713408
    %v2306 = vunpack.c.0.s8 %v2305
    %v2307 = vlaneseq
    %v2308 = vshrl.u32 %v2307, 7
    %v2309 = vsub.s32 %v2306, %v2308
    %v2310 = vrot.slane %v2296, %v2309
    %v2311 = vcombine.high %v2288, 0.0
    %v2312 = vcombine.high %v2295, 0.0
    %v2313 = vcombine.high %v2303, 0.0
    %v2314 = vcombine.high %v2310, 0.0
    %v2315 = vcombine.high %v123, 0.0
    %v2317 = vunpack.c.l.s4 1983009808
    %v2318 = vunpack.c.0.s8 %v2317
    %v2319 = vlaneseq
    %v2320 = vshrl.u32 %v2319, 7
    %v2321 = vsub.s32 %v2318, %v2320
    %v2322 = vrot.slane %v123, %v2321
    %v2324 = vunpack.c.l.s4 1983009808
    %v2325 = vunpack.c.0.s8 %v2324
    %v2326 = vlaneseq
    %v2327 = vshrl.u32 %v2326, 7
    %v2328 = vsub.s32 %v2325, %v2327
    %v2329 = vrot.slane %v2315, %v2328
    %v2330 = vcombine.high %v2322, 0.0
    %v2332 = vunpack.c.l.s4 1934713408
    %v2333 = vunpack.c.0.s8 %v2332
    %v2334 = vlaneseq
    %v2335 = vshrl.u32 %v2334, 7
    %v2336 = vsub.s32 %v2333, %v2335
    %v2337 = vrot.slane %v2322, %v2336
    %v2339 = vunpack.c.l.s4 1934713408
    %v2340 = vunpack.c.0.s8 %v2339
    %v2341 = vlaneseq
    %v2342 = vshrl.u32 %v2341, 7
    %v2343 = vsub.s32 %v2340, %v2342
    %v2344 = vrot.slane %v2330, %v2343
    %v2345 = vcombine.high %v2329, 0.0
    %v2347 = vunpack.c.l.s4 1934713408
    %v2348 = vunpack.c.0.s8 %v2347
    %v2349 = vlaneseq
    %v2350 = vshrl.u32 %v2349, 7
    %v2351 = vsub.s32 %v2348, %v2350
    %v2352 = vrot.slane %v2329, %v2351
    %v2354 = vunpack.c.l.s4 1934713408
    %v2355 = vunpack.c.0.s8 %v2354
    %v2356 = vlaneseq
    %v2357 = vshrl.u32 %v2356, 7
    %v2358 = vsub.s32 %v2355, %v2357
    %v2359 = vrot.slane %v2345, %v2358
    %v2360 = vcombine.high %v2337, 0.0
    %v2361 = vcombine.high %v2344, 0.0
    %v2362 = vcombine.high %v2352, 0.0
    %v2363 = vcombine.high %v2359, 0.0
    %v2364 = vcombine.high %v124, 0.0
    %v2366 = vunpack.c.l.s4 1983009808
    %v2367 = vunpack.c.0.s8 %v2366
    %v2368 = vlaneseq
    %v2369 = vshrl.u32 %v2368, 7
    %v2370 = vsub.s32 %v2367, %v2369
    %v2371 = vrot.slane %v124, %v2370
    %v2373 = vunpack.c.l.s4 1983009808
    %v2374 = vunpack.c.0.s8 %v2373
    %v2375 = vlaneseq
    %v2376 = vshrl.u32 %v2375, 7
    %v2377 = vsub.s32 %v2374, %v2376
    %v2378 = vrot.slane %v2364, %v2377
    %v2379 = vcombine.high %v2371, 0.0
    %v2381 = vunpack.c.l.s4 1934713408
    %v2382 = vunpack.c.0.s8 %v2381
    %v2383 = vlaneseq
    %v2384 = vshrl.u32 %v2383, 7
    %v2385 = vsub.s32 %v2382, %v2384
    %v2386 = vrot.slane %v2371, %v2385
    %v2388 = vunpack.c.l.s4 1934713408
    %v2389 = vunpack.c.0.s8 %v2388
    %v2390 = vlaneseq
    %v2391 = vshrl.u32 %v2390, 7
    %v2392 = vsub.s32 %v2389, %v2391
    %v2393 = vrot.slane %v2379, %v2392
    %v2394 = vcombine.high %v2378, 0.0
    %v2396 = vunpack.c.l.s4 1934713408
    %v2397 = vunpack.c.0.s8 %v2396
    %v2398 = vlaneseq
    %v2399 = vshrl.u32 %v2398, 7
    %v2400 = vsub.s32 %v2397, %v2399
    %v2401 = vrot.slane %v2378, %v2400
    %v2403 = vunpack.c.l.s4 1934713408
    %v2404 = vunpack.c.0.s8 %v2403
    %v2405 = vlaneseq
    %v2406 = vshrl.u32 %v2405, 7
    %v2407 = vsub.s32 %v2404, %v2406
    %v2408 = vrot.slane %v2394, %v2407
    %v2409 = vcombine.high %v2386, 0.0
    %v2410 = vcombine.high %v2393, 0.0
    %v2411 = vcombine.high %v2401, 0.0
    %v2412 = vcombine.high %v2408, 0.0
    %v2413 = vcombine.high %v125, 0.0
    %v2415 = vunpack.c.l.s4 1983009808
    %v2416 = vunpack.c.0.s8 %v2415
    %v2417 = vlaneseq
    %v2418 = vshrl.u32 %v2417, 7
    %v2419 = vsub.s32 %v2416, %v2418
    %v2420 = vrot.slane %v125, %v2419
    %v2422 = vunpack.c.l.s4 1983009808
    %v2423 = vunpack.c.0.s8 %v2422
    %v2424 = vlaneseq
    %v2425 = vshrl.u32 %v2424, 7
    %v2426 = vsub.s32 %v2423, %v2425
    %v2427 = vrot.slane %v2413, %v2426
    %v2428 = vcombine.high %v2420, 0.0
    %v2430 = vunpack.c.l.s4 1934713408
    %v2431 = vunpack.c.0.s8 %v2430
    %v2432 = vlaneseq
    %v2433 = vshrl.u32 %v2432, 7
    %v2434 = vsub.s32 %v2431, %v2433
    %v2435 = vrot.slane %v2420, %v2434
    %v2437 = vunpack.c.l.s4 1934713408
    %v2438 = vunpack.c.0.s8 %v2437
    %v2439 = vlaneseq
    %v2440 = vshrl.u32 %v2439, 7
    %v2441 = vsub.s32 %v2438, %v2440
    %v2442 = vrot.slane %v2428, %v2441
    %v2443 = vcombine.high %v2427, 0.0
    %v2445 = vunpack.c.l.s4 1934713408
    %v2446 = vunpack.c.0.s8 %v2445
    %v2447 = vlaneseq
    %v2448 = vshrl.u32 %v2447, 7
    %v2449 = vsub.s32 %v2446, %v2448
    %v2450 = vrot.slane %v2427, %v2449
    %v2452 = vunpack.c.l.s4 1934713408
    %v2453 = vunpack.c.0.s8 %v2452
    %v2454 = vlaneseq
    %v2455 = vshrl.u32 %v2454, 7
    %v2456 = vsub.s32 %v2453, %v2455
    %v2457 = vrot.slane %v2443, %v2456
    %v2458 = vcombine.high %v2435, 0.0
    %v2459 = vcombine.high %v2442, 0.0
    %v2460 = vcombine.high %v2450, 0.0
    %v2461 = vcombine.high %v2457, 0.0
    %v2462 = vcombine.high %v126, 0.0
    %v2464 = vunpack.c.l.s4 1983009808
    %v2465 = vunpack.c.0.s8 %v2464
    %v2466 = vlaneseq
    %v2467 = vshrl.u32 %v2466, 7
    %v2468 = vsub.s32 %v2465, %v2467
    %v2469 = vrot.slane %v126, %v2468
    %v2471 = vunpack.c.l.s4 1983009808
    %v2472 = vunpack.c.0.s8 %v2471
    %v2473 = vlaneseq
    %v2474 = vshrl.u32 %v2473, 7
    %v2475 = vsub.s32 %v2472, %v2474
    %v2476 = vrot.slane %v2462, %v2475
    %v2477 = vcombine.high %v2469, 0.0
    %v2479 = vunpack.c.l.s4 1934713408
    %v2480 = vunpack.c.0.s8 %v2479
    %v2481 = vlaneseq
    %v2482 = vshrl.u32 %v2481, 7
    %v2483 = vsub.s32 %v2480, %v2482
    %v2484 = vrot.slane %v2469, %v2483
    %v2486 = vunpack.c.l.s4 1934713408
    %v2487 = vunpack.c.0.s8 %v2486
    %v2488 = vlaneseq
    %v2489 = vshrl.u32 %v2488, 7
    %v2490 = vsub.s32 %v2487, %v2489
    %v2491 = vrot.slane %v2477, %v2490
    %v2492 = vcombine.high %v2476, 0.0
    %v2494 = vunpack.c.l.s4 1934713408
    %v2495 = vunpack.c.0.s8 %v2494
    %v2496 = vlaneseq
    %v2497 = vshrl.u32 %v2496, 7
    %v2498 = vsub.s32 %v2495, %v2497
    %v2499 = vrot.slane %v2476, %v2498
    %v2501 = vunpack.c.l.s4 1934713408
    %v2502 = vunpack.c.0.s8 %v2501
    %v2503 = vlaneseq
    %v2504 = vshrl.u32 %v2503, 7
    %v2505 = vsub.s32 %v2502, %v2504
    %v2506 = vrot.slane %v2492, %v2505
    %v2507 = vcombine.high %v2484, 0.0
    %v2508 = vcombine.high %v2491, 0.0
    %v2509 = vcombine.high %v2499, 0.0
    %v2510 = vcombine.high %v2506, 0.0
    %v2511 = vcombine.high %v143, 0.0
    %v2513 = vunpack.c.l.s4 1983009808
    %v2514 = vunpack.c.0.s8 %v2513
    %v2515 = vlaneseq
    %v2516 = vshrl.u32 %v2515, 7
    %v2517 = vsub.s32 %v2514, %v2516
    %v2518 = vrot.slane %v143, %v2517
    %v2520 = vunpack.c.l.s4 1983009808
    %v2521 = vunpack.c.0.s8 %v2520
    %v2522 = vlaneseq
    %v2523 = vshrl.u32 %v2522, 7
    %v2524 = vsub.s32 %v2521, %v2523
    %v2525 = vrot.slane %v2511, %v2524
    %v2526 = vcombine.high %v2518, 0.0
    %v2528 = vunpack.c.l.s4 1934713408
    %v2529 = vunpack.c.0.s8 %v2528
    %v2530 = vlaneseq
    %v2531 = vshrl.u32 %v2530, 7
    %v2532 = vsub.s32 %v2529, %v2531
    %v2533 = vrot.slane %v2518, %v2532
    %v2535 = vunpack.c.l.s4 1934713408
    %v2536 = vunpack.c.0.s8 %v2535
    %v2537 = vlaneseq
    %v2538 = vshrl.u32 %v2537, 7
    %v2539 = vsub.s32 %v2536, %v2538
    %v2540 = vrot.slane %v2526, %v2539
    %v2541 = vcombine.high %v2525, 0.0
    %v2543 = vunpack.c.l.s4 1934713408
    %v2544 = vunpack.c.0.s8 %v2543
    %v2545 = vlaneseq
    %v2546 = vshrl.u32 %v2545, 7
    %v2547 = vsub.s32 %v2544, %v2546
    %v2548 = vrot.slane %v2525, %v2547
    %v2550 = vunpack.c.l.s4 1934713408
    %v2551 = vunpack.c.0.s8 %v2550
    %v2552 = vlaneseq
    %v2553 = vshrl.u32 %v2552, 7
    %v2554 = vsub.s32 %v2551, %v2553
    %v2555 = vrot.slane %v2541, %v2554
    %v2556 = vcombine.high %v2533, 0.0
    %v2557 = vcombine.high %v2540, 0.0
    %v2558 = vcombine.high %v2548, 0.0
    %v2559 = vcombine.high %v2555, 0.0
    %v2560 = vcombine.high %v144, 0.0
    %v2562 = vunpack.c.l.s4 1983009808
    %v2563 = vunpack.c.0.s8 %v2562
    %v2564 = vlaneseq
    %v2565 = vshrl.u32 %v2564, 7
    %v2566 = vsub.s32 %v2563, %v2565
    %v2567 = vrot.slane %v144, %v2566
    %v2569 = vunpack.c.l.s4 1983009808
    %v2570 = vunpack.c.0.s8 %v2569
    %v2571 = vlaneseq
    %v2572 = vshrl.u32 %v2571, 7
    %v2573 = vsub.s32 %v2570, %v2572
    %v2574 = vrot.slane %v2560, %v2573
    %v2575 = vcombine.high %v2567, 0.0
    %v2577 = vunpack.c.l.s4 1934713408
    %v2578 = vunpack.c.0.s8 %v2577
    %v2579 = vlaneseq
    %v2580 = vshrl.u32 %v2579, 7
    %v2581 = vsub.s32 %v2578, %v2580
    %v2582 = vrot.slane %v2567, %v2581
    %v2584 = vunpack.c.l.s4 1934713408
    %v2585 = vunpack.c.0.s8 %v2584
    %v2586 = vlaneseq
    %v2587 = vshrl.u32 %v2586, 7
    %v2588 = vsub.s32 %v2585, %v2587
    %v2589 = vrot.slane %v2575, %v2588
    %v2590 = vcombine.high %v2574, 0.0
    %v2592 = vunpack.c.l.s4 1934713408
    %v2593 = vunpack.c.0.s8 %v2592
    %v2594 = vlaneseq
    %v2595 = vshrl.u32 %v2594, 7
    %v2596 = vsub.s32 %v2593, %v2595
    %v2597 = vrot.slane %v2574, %v2596
    %v2599 = vunpack.c.l.s4 1934713408
    %v2600 = vunpack.c.0.s8 %v2599
    %v2601 = vlaneseq
    %v2602 = vshrl.u32 %v2601, 7
    %v2603 = vsub.s32 %v2600, %v2602
    %v2604 = vrot.slane %v2590, %v2603
    %v2605 = vcombine.high %v2582, 0.0
    %v2606 = vcombine.high %v2589, 0.0
    %v2607 = vcombine.high %v2597, 0.0
    %v2608 = vcombine.high %v2604, 0.0
    %v2609 = vcombine.high %v145, 0.0
    %v2611 = vunpack.c.l.s4 1983009808
    %v2612 = vunpack.c.0.s8 %v2611
    %v2613 = vlaneseq
    %v2614 = vshrl.u32 %v2613, 7
    %v2615 = vsub.s32 %v2612, %v2614
    %v2616 = vrot.slane %v145, %v2615
    %v2618 = vunpack.c.l.s4 1983009808
    %v2619 = vunpack.c.0.s8 %v2618
    %v2620 = vlaneseq
    %v2621 = vshrl.u32 %v2620, 7
    %v2622 = vsub.s32 %v2619, %v2621
    %v2623 = vrot.slane %v2609, %v2622
    %v2624 = vcombine.high %v2616, 0.0
    %v2626 = vunpack.c.l.s4 1934713408
    %v2627 = vunpack.c.0.s8 %v2626
    %v2628 = vlaneseq
    %v2629 = vshrl.u32 %v2628, 7
    %v2630 = vsub.s32 %v2627, %v2629
    %v2631 = vrot.slane %v2616, %v2630
    %v2633 = vunpack.c.l.s4 1934713408
    %v2634 = vunpack.c.0.s8 %v2633
    %v2635 = vlaneseq
    %v2636 = vshrl.u32 %v2635, 7
    %v2637 = vsub.s32 %v2634, %v2636
    %v2638 = vrot.slane %v2624, %v2637
    %v2639 = vcombine.high %v2623, 0.0
    %v2641 = vunpack.c.l.s4 1934713408
    %v2642 = vunpack.c.0.s8 %v2641
    %v2643 = vlaneseq
    %v2644 = vshrl.u32 %v2643, 7
    %v2645 = vsub.s32 %v2642, %v2644
    %v2646 = vrot.slane %v2623, %v2645
    %v2648 = vunpack.c.l.s4 1934713408
    %v2649 = vunpack.c.0.s8 %v2648
    %v2650 = vlaneseq
    %v2651 = vshrl.u32 %v2650, 7
    %v2652 = vsub.s32 %v2649, %v2651
    %v2653 = vrot.slane %v2639, %v2652
    %v2654 = vcombine.high %v2631, 0.0
    %v2655 = vcombine.high %v2638, 0.0
    %v2656 = vcombine.high %v2646, 0.0
    %v2657 = vcombine.high %v2653, 0.0
    %v2658 = vcombine.high %v146, 0.0
    %v2660 = vunpack.c.l.s4 1983009808
    %v2661 = vunpack.c.0.s8 %v2660
    %v2662 = vlaneseq
    %v2663 = vshrl.u32 %v2662, 7
    %v2664 = vsub.s32 %v2661, %v2663
    %v2665 = vrot.slane %v146, %v2664
    %v2667 = vunpack.c.l.s4 1983009808
    %v2668 = vunpack.c.0.s8 %v2667
    %v2669 = vlaneseq
    %v2670 = vshrl.u32 %v2669, 7
    %v2671 = vsub.s32 %v2668, %v2670
    %v2672 = vrot.slane %v2658, %v2671
    %v2673 = vcombine.high %v2665, 0.0
    %v2675 = vunpack.c.l.s4 1934713408
    %v2676 = vunpack.c.0.s8 %v2675
    %v2677 = vlaneseq
    %v2678 = vshrl.u32 %v2677, 7
    %v2679 = vsub.s32 %v2676, %v2678
    %v2680 = vrot.slane %v2665, %v2679
    %v2682 = vunpack.c.l.s4 1934713408
    %v2683 = vunpack.c.0.s8 %v2682
    %v2684 = vlaneseq
    %v2685 = vshrl.u32 %v2684, 7
    %v2686 = vsub.s32 %v2683, %v2685
    %v2687 = vrot.slane %v2673, %v2686
    %v2688 = vcombine.high %v2672, 0.0
    %v2690 = vunpack.c.l.s4 1934713408
    %v2691 = vunpack.c.0.s8 %v2690
    %v2692 = vlaneseq
    %v2693 = vshrl.u32 %v2692, 7
    %v2694 = vsub.s32 %v2691, %v2693
    %v2695 = vrot.slane %v2672, %v2694
    %v2697 = vunpack.c.l.s4 1934713408
    %v2698 = vunpack.c.0.s8 %v2697
    %v2699 = vlaneseq
    %v2700 = vshrl.u32 %v2699, 7
    %v2701 = vsub.s32 %v2698, %v2700
    %v2702 = vrot.slane %v2688, %v2701
    %v2703 = vcombine.high %v2680, 0.0
    %v2704 = vcombine.high %v2687, 0.0
    %v2705 = vcombine.high %v2695, 0.0
    %v2706 = vcombine.high %v2702, 0.0
    %v2707 = vcombine.high %v147, 0.0
    %v2709 = vunpack.c.l.s4 1983009808
    %v2710 = vunpack.c.0.s8 %v2709
    %v2711 = vlaneseq
    %v2712 = vshrl.u32 %v2711, 7
    %v2713 = vsub.s32 %v2710, %v2712
    %v2714 = vrot.slane %v147, %v2713
    %v2716 = vunpack.c.l.s4 1983009808
    %v2717 = vunpack.c.0.s8 %v2716
    %v2718 = vlaneseq
    %v2719 = vshrl.u32 %v2718, 7
    %v2720 = vsub.s32 %v2717, %v2719
    %v2721 = vrot.slane %v2707, %v2720
    %v2722 = vcombine.high %v2714, 0.0
    %v2724 = vunpack.c.l.s4 1934713408
    %v2725 = vunpack.c.0.s8 %v2724
    %v2726 = vlaneseq
    %v2727 = vshrl.u32 %v2726, 7
    %v2728 = vsub.s32 %v2725, %v2727
    %v2729 = vrot.slane %v2714, %v2728
    %v2731 = vunpack.c.l.s4 1934713408
    %v2732 = vunpack.c.0.s8 %v2731
    %v2733 = vlaneseq
    %v2734 = vshrl.u32 %v2733, 7
    %v2735 = vsub.s32 %v2732, %v2734
    %v2736 = vrot.slane %v2722, %v2735
    %v2737 = vcombine.high %v2721, 0.0
    %v2739 = vunpack.c.l.s4 1934713408
    %v2740 = vunpack.c.0.s8 %v2739
    %v2741 = vlaneseq
    %v2742 = vshrl.u32 %v2741, 7
    %v2743 = vsub.s32 %v2740, %v2742
    %v2744 = vrot.slane %v2721, %v2743
    %v2746 = vunpack.c.l.s4 1934713408
    %v2747 = vunpack.c.0.s8 %v2746
    %v2748 = vlaneseq
    %v2749 = vshrl.u32 %v2748, 7
    %v2750 = vsub.s32 %v2747, %v2749
    %v2751 = vrot.slane %v2737, %v2750
    %v2752 = vcombine.high %v2729, 0.0
    %v2753 = vcombine.high %v2736, 0.0
    %v2754 = vcombine.high %v2744, 0.0
    %v2755 = vcombine.high %v2751, 0.0
    %v2756 = vcombine.high %v148, 0.0
    %v2758 = vunpack.c.l.s4 1983009808
    %v2759 = vunpack.c.0.s8 %v2758
    %v2760 = vlaneseq
    %v2761 = vshrl.u32 %v2760, 7
    %v2762 = vsub.s32 %v2759, %v2761
    %v2763 = vrot.slane %v148, %v2762
    %v2765 = vunpack.c.l.s4 1983009808
    %v2766 = vunpack.c.0.s8 %v2765
    %v2767 = vlaneseq
    %v2768 = vshrl.u32 %v2767, 7
    %v2769 = vsub.s32 %v2766, %v2768
    %v2770 = vrot.slane %v2756, %v2769
    %v2771 = vcombine.high %v2763, 0.0
    %v2773 = vunpack.c.l.s4 1934713408
    %v2774 = vunpack.c.0.s8 %v2773
    %v2775 = vlaneseq
    %v2776 = vshrl.u32 %v2775, 7
    %v2777 = vsub.s32 %v2774, %v2776
    %v2778 = vrot.slane %v2763, %v2777
    %v2780 = vunpack.c.l.s4 1934713408
    %v2781 = vunpack.c.0.s8 %v2780
    %v2782 = vlaneseq
    %v2783 = vshrl.u32 %v2782, 7
    %v2784 = vsub.s32 %v2781, %v2783
    %v2785 = vrot.slane %v2771, %v2784
    %v2786 = vcombine.high %v2770, 0.0
    %v2788 = vunpack.c.l.s4 1934713408
    %v2789 = vunpack.c.0.s8 %v2788
    %v2790 = vlaneseq
    %v2791 = vshrl.u32 %v2790, 7
    %v2792 = vsub.s32 %v2789, %v2791
    %v2793 = vrot.slane %v2770, %v2792
    %v2795 = vunpack.c.l.s4 1934713408
    %v2796 = vunpack.c.0.s8 %v2795
    %v2797 = vlaneseq
    %v2798 = vshrl.u32 %v2797, 7
    %v2799 = vsub.s32 %v2796, %v2798
    %v2800 = vrot.slane %v2786, %v2799
    %v2801 = vcombine.high %v2778, 0.0
    %v2802 = vcombine.high %v2785, 0.0
    %v2803 = vcombine.high %v2793, 0.0
    %v2804 = vcombine.high %v2800, 0.0
    %v2805 = vcombine.high %v149, 0.0
    %v2807 = vunpack.c.l.s4 1983009808
    %v2808 = vunpack.c.0.s8 %v2807
    %v2809 = vlaneseq
    %v2810 = vshrl.u32 %v2809, 7
    %v2811 = vsub.s32 %v2808, %v2810
    %v2812 = vrot.slane %v149, %v2811
    %v2814 = vunpack.c.l.s4 1983009808
    %v2815 = vunpack.c.0.s8 %v2814
    %v2816 = vlaneseq
    %v2817 = vshrl.u32 %v2816, 7
    %v2818 = vsub.s32 %v2815, %v2817
    %v2819 = vrot.slane %v2805, %v2818
    %v2820 = vcombine.high %v2812, 0.0
    %v2822 = vunpack.c.l.s4 1934713408
    %v2823 = vunpack.c.0.s8 %v2822
    %v2824 = vlaneseq
    %v2825 = vshrl.u32 %v2824, 7
    %v2826 = vsub.s32 %v2823, %v2825
    %v2827 = vrot.slane %v2812, %v2826
    %v2829 = vunpack.c.l.s4 1934713408
    %v2830 = vunpack.c.0.s8 %v2829
    %v2831 = vlaneseq
    %v2832 = vshrl.u32 %v2831, 7
    %v2833 = vsub.s32 %v2830, %v2832
    %v2834 = vrot.slane %v2820, %v2833
    %v2835 = vcombine.high %v2819, 0.0
    %v2837 = vunpack.c.l.s4 1934713408
    %v2838 = vunpack.c.0.s8 %v2837
    %v2839 = vlaneseq
    %v2840 = vshrl.u32 %v2839, 7
    %v2841 = vsub.s32 %v2838, %v2840
    %v2842 = vrot.slane %v2819, %v2841
    %v2844 = vunpack.c.l.s4 1934713408
    %v2845 = vunpack.c.0.s8 %v2844
    %v2846 = vlaneseq
    %v2847 = vshrl.u32 %v2846, 7
    %v2848 = vsub.s32 %v2845, %v2847
    %v2849 = vrot.slane %v2835, %v2848
    %v2850 = vcombine.high %v2827, 0.0
    %v2851 = vcombine.high %v2834, 0.0
    %v2852 = vcombine.high %v2842, 0.0
    %v2853 = vcombine.high %v2849, 0.0
    %v2854 = vcombine.high %v150, 0.0
    %v2856 = vunpack.c.l.s4 1983009808
    %v2857 = vunpack.c.0.s8 %v2856
    %v2858 = vlaneseq
    %v2859 = vshrl.u32 %v2858, 7
    %v2860 = vsub.s32 %v2857, %v2859
    %v2861 = vrot.slane %v150, %v2860
    %v2863 = vunpack.c.l.s4 1983009808
    %v2864 = vunpack.c.0.s8 %v2863
    %v2865 = vlaneseq
    %v2866 = vshrl.u32 %v2865, 7
    %v2867 = vsub.s32 %v2864, %v2866
    %v2868 = vrot.slane %v2854, %v2867
    %v2869 = vcombine.high %v2861, 0.0
    %v2871 = vunpack.c.l.s4 1934713408
    %v2872 = vunpack.c.0.s8 %v2871
    %v2873 = vlaneseq
    %v2874 = vshrl.u32 %v2873, 7
    %v2875 = vsub.s32 %v2872, %v2874
    %v2876 = vrot.slane %v2861, %v2875
    %v2878 = vunpack.c.l.s4 1934713408
    %v2879 = vunpack.c.0.s8 %v2878
    %v2880 = vlaneseq
    %v2881 = vshrl.u32 %v2880, 7
    %v2882 = vsub.s32 %v2879, %v2881
    %v2883 = vrot.slane %v2869, %v2882
    %v2884 = vcombine.high %v2868, 0.0
    %v2886 = vunpack.c.l.s4 1934713408
    %v2887 = vunpack.c.0.s8 %v2886
    %v2888 = vlaneseq
    %v2889 = vshrl.u32 %v2888, 7
    %v2890 = vsub.s32 %v2887, %v2889
    %v2891 = vrot.slane %v2868, %v2890
    %v2893 = vunpack.c.l.s4 1934713408
    %v2894 = vunpack.c.0.s8 %v2893
    %v2895 = vlaneseq
    %v2896 = vshrl.u32 %v2895, 7
    %v2897 = vsub.s32 %v2894, %v2896
    %v2898 = vrot.slane %v2884, %v2897
    %v2899 = vcombine.high %v2876, 0.0
    %v2900 = vcombine.high %v2883, 0.0
    %v2901 = vcombine.high %v2891, 0.0
    %v2902 = vcombine.high %v2898, 0.0
    %v2903 = vcombine.high %v151, 0.0
    %v2905 = vunpack.c.l.s4 1983009808
    %v2906 = vunpack.c.0.s8 %v2905
    %v2907 = vlaneseq
    %v2908 = vshrl.u32 %v2907, 7
    %v2909 = vsub.s32 %v2906, %v2908
    %v2910 = vrot.slane %v151, %v2909
    %v2912 = vunpack.c.l.s4 1983009808
    %v2913 = vunpack.c.0.s8 %v2912
    %v2914 = vlaneseq
    %v2915 = vshrl.u32 %v2914, 7
    %v2916 = vsub.s32 %v2913, %v2915
    %v2917 = vrot.slane %v2903, %v2916
    %v2918 = vcombine.high %v2910, 0.0
    %v2920 = vunpack.c.l.s4 1934713408
    %v2921 = vunpack.c.0.s8 %v2920
    %v2922 = vlaneseq
    %v2923 = vshrl.u32 %v2922, 7
    %v2924 = vsub.s32 %v2921, %v2923
    %v2925 = vrot.slane %v2910, %v2924
    %v2927 = vunpack.c.l.s4 1934713408
    %v2928 = vunpack.c.0.s8 %v2927
    %v2929 = vlaneseq
    %v2930 = vshrl.u32 %v2929, 7
    %v2931 = vsub.s32 %v2928, %v2930
    %v2932 = vrot.slane %v2918, %v2931
    %v2933 = vcombine.high %v2917, 0.0
    %v2935 = vunpack.c.l.s4 1934713408
    %v2936 = vunpack.c.0.s8 %v2935
    %v2937 = vlaneseq
    %v2938 = vshrl.u32 %v2937, 7
    %v2939 = vsub.s32 %v2936, %v2938
    %v2940 = vrot.slane %v2917, %v2939
    %v2942 = vunpack.c.l.s4 1934713408
    %v2943 = vunpack.c.0.s8 %v2942
    %v2944 = vlaneseq
    %v2945 = vshrl.u32 %v2944, 7
    %v2946 = vsub.s32 %v2943, %v2945
    %v2947 = vrot.slane %v2933, %v2946
    %v2948 = vcombine.high %v2925, 0.0
    %v2949 = vcombine.high %v2932, 0.0
    %v2950 = vcombine.high %v2940, 0.0
    %v2951 = vcombine.high %v2947, 0.0
    %v2952 = vcombine.high %v152, 0.0
    %v2954 = vunpack.c.l.s4 1983009808
    %v2955 = vunpack.c.0.s8 %v2954
    %v2956 = vlaneseq
    %v2957 = vshrl.u32 %v2956, 7
    %v2958 = vsub.s32 %v2955, %v2957
    %v2959 = vrot.slane %v152, %v2958
    %v2961 = vunpack.c.l.s4 1983009808
    %v2962 = vunpack.c.0.s8 %v2961
    %v2963 = vlaneseq
    %v2964 = vshrl.u32 %v2963, 7
    %v2965 = vsub.s32 %v2962, %v2964
    %v2966 = vrot.slane %v2952, %v2965
    %v2967 = vcombine.high %v2959, 0.0
    %v2969 = vunpack.c.l.s4 1934713408
    %v2970 = vunpack.c.0.s8 %v2969
    %v2971 = vlaneseq
    %v2972 = vshrl.u32 %v2971, 7
    %v2973 = vsub.s32 %v2970, %v2972
    %v2974 = vrot.slane %v2959, %v2973
    %v2976 = vunpack.c.l.s4 1934713408
    %v2977 = vunpack.c.0.s8 %v2976
    %v2978 = vlaneseq
    %v2979 = vshrl.u32 %v2978, 7
    %v2980 = vsub.s32 %v2977, %v2979
    %v2981 = vrot.slane %v2967, %v2980
    %v2982 = vcombine.high %v2966, 0.0
    %v2984 = vunpack.c.l.s4 1934713408
    %v2985 = vunpack.c.0.s8 %v2984
    %v2986 = vlaneseq
    %v2987 = vshrl.u32 %v2986, 7
    %v2988 = vsub.s32 %v2985, %v2987
    %v2989 = vrot.slane %v2966, %v2988
    %v2991 = vunpack.c.l.s4 1934713408
    %v2992 = vunpack.c.0.s8 %v2991
    %v2993 = vlaneseq
    %v2994 = vshrl.u32 %v2993, 7
    %v2995 = vsub.s32 %v2992, %v2994
    %v2996 = vrot.slane %v2982, %v2995
    %v2997 = vcombine.high %v2974, 0.0
    %v2998 = vcombine.high %v2981, 0.0
    %v2999 = vcombine.high %v2989, 0.0
    %v3000 = vcombine.high %v2996, 0.0
    %v3001 = vcombine.high %v153, 0.0
    %v3003 = vunpack.c.l.s4 1983009808
    %v3004 = vunpack.c.0.s8 %v3003
    %v3005 = vlaneseq
    %v3006 = vshrl.u32 %v3005, 7
    %v3007 = vsub.s32 %v3004, %v3006
    %v3008 = vrot.slane %v153, %v3007
    %v3010 = vunpack.c.l.s4 1983009808
    %v3011 = vunpack.c.0.s8 %v3010
    %v3012 = vlaneseq
    %v3013 = vshrl.u32 %v3012, 7
    %v3014 = vsub.s32 %v3011, %v3013
    %v3015 = vrot.slane %v3001, %v3014
    %v3016 = vcombine.high %v3008, 0.0
    %v3018 = vunpack.c.l.s4 1934713408
    %v3019 = vunpack.c.0.s8 %v3018
    %v3020 = vlaneseq
    %v3021 = vshrl.u32 %v3020, 7
    %v3022 = vsub.s32 %v3019, %v3021
    %v3023 = vrot.slane %v3008, %v3022
    %v3025 = vunpack.c.l.s4 1934713408
    %v3026 = vunpack.c.0.s8 %v3025
    %v3027 = vlaneseq
    %v3028 = vshrl.u32 %v3027, 7
    %v3029 = vsub.s32 %v3026, %v3028
    %v3030 = vrot.slane %v3016, %v3029
    %v3031 = vcombine.high %v3015, 0.0
    %v3033 = vunpack.c.l.s4 1934713408
    %v3034 = vunpack.c.0.s8 %v3033
    %v3035 = vlaneseq
    %v3036 = vshrl.u32 %v3035, 7
    %v3037 = vsub.s32 %v3034, %v3036
    %v3038 = vrot.slane %v3015, %v3037
    %v3040 = vunpack.c.l.s4 1934713408
    %v3041 = vunpack.c.0.s8 %v3040
    %v3042 = vlaneseq
    %v3043 = vshrl.u32 %v3042, 7
    %v3044 = vsub.s32 %v3041, %v3043
    %v3045 = vrot.slane %v3031, %v3044
    %v3046 = vcombine.high %v3023, 0.0
    %v3047 = vcombine.high %v3030, 0.0
    %v3048 = vcombine.high %v3038, 0.0
    %v3049 = vcombine.high %v3045, 0.0
    %v3050 = vcombine.high %v154, 0.0
    %v3052 = vunpack.c.l.s4 1983009808
    %v3053 = vunpack.c.0.s8 %v3052
    %v3054 = vlaneseq
    %v3055 = vshrl.u32 %v3054, 7
    %v3056 = vsub.s32 %v3053, %v3055
    %v3057 = vrot.slane %v154, %v3056
    %v3059 = vunpack.c.l.s4 1983009808
    %v3060 = vunpack.c.0.s8 %v3059
    %v3061 = vlaneseq
    %v3062 = vshrl.u32 %v3061, 7
    %v3063 = vsub.s32 %v3060, %v3062
    %v3064 = vrot.slane %v3050, %v3063
    %v3065 = vcombine.high %v3057, 0.0
    %v3067 = vunpack.c.l.s4 1934713408
    %v3068 = vunpack.c.0.s8 %v3067
    %v3069 = vlaneseq
    %v3070 = vshrl.u32 %v3069, 7
    %v3071 = vsub.s32 %v3068, %v3070
    %v3072 = vrot.slane %v3057, %v3071
    %v3074 = vunpack.c.l.s4 1934713408
    %v3075 = vunpack.c.0.s8 %v3074
    %v3076 = vlaneseq
    %v3077 = vshrl.u32 %v3076, 7
    %v3078 = vsub.s32 %v3075, %v3077
    %v3079 = vrot.slane %v3065, %v3078
    %v3080 = vcombine.high %v3064, 0.0
    %v3082 = vunpack.c.l.s4 1934713408
    %v3083 = vunpack.c.0.s8 %v3082
    %v3084 = vlaneseq
    %v3085 = vshrl.u32 %v3084, 7
    %v3086 = vsub.s32 %v3083, %v3085
    %v3087 = vrot.slane %v3064, %v3086
    %v3089 = vunpack.c.l.s4 1934713408
    %v3090 = vunpack.c.0.s8 %v3089
    %v3091 = vlaneseq
    %v3092 = vshrl.u32 %v3091, 7
    %v3093 = vsub.s32 %v3090, %v3092
    %v3094 = vrot.slane %v3080, %v3093
    %v3095 = vcombine.high %v3072, 0.0
    %v3096 = vcombine.high %v3079, 0.0
    %v3097 = vcombine.high %v3087, 0.0
    %v3098 = vcombine.high %v3094, 0.0
    %v3099 = vcombine.high %v155, 0.0
    %v3101 = vunpack.c.l.s4 1983009808
    %v3102 = vunpack.c.0.s8 %v3101
    %v3103 = vlaneseq
    %v3104 = vshrl.u32 %v3103, 7
    %v3105 = vsub.s32 %v3102, %v3104
    %v3106 = vrot.slane %v155, %v3105
    %v3108 = vunpack.c.l.s4 1983009808
    %v3109 = vunpack.c.0.s8 %v3108
    %v3110 = vlaneseq
    %v3111 = vshrl.u32 %v3110, 7
    %v3112 = vsub.s32 %v3109, %v3111
    %v3113 = vrot.slane %v3099, %v3112
    %v3114 = vcombine.high %v3106, 0.0
    %v3116 = vunpack.c.l.s4 1934713408
    %v3117 = vunpack.c.0.s8 %v3116
    %v3118 = vlaneseq
    %v3119 = vshrl.u32 %v3118, 7
    %v3120 = vsub.s32 %v3117, %v3119
    %v3121 = vrot.slane %v3106, %v3120
    %v3123 = vunpack.c.l.s4 1934713408
    %v3124 = vunpack.c.0.s8 %v3123
    %v3125 = vlaneseq
    %v3126 = vshrl.u32 %v3125, 7
    %v3127 = vsub.s32 %v3124, %v3126
    %v3128 = vrot.slane %v3114, %v3127
    %v3129 = vcombine.high %v3113, 0.0
    %v3131 = vunpack.c.l.s4 1934713408
    %v3132 = vunpack.c.0.s8 %v3131
    %v3133 = vlaneseq
    %v3134 = vshrl.u32 %v3133, 7
    %v3135 = vsub.s32 %v3132, %v3134
    %v3136 = vrot.slane %v3113, %v3135
    %v3138 = vunpack.c.l.s4 1934713408
    %v3139 = vunpack.c.0.s8 %v3138
    %v3140 = vlaneseq
    %v3141 = vshrl.u32 %v3140, 7
    %v3142 = vsub.s32 %v3139, %v3141
    %v3143 = vrot.slane %v3129, %v3142
    %v3144 = vcombine.high %v3121, 0.0
    %v3145 = vcombine.high %v3128, 0.0
    %v3146 = vcombine.high %v3136, 0.0
    %v3147 = vcombine.high %v3143, 0.0
    %v3148 = vcombine.high %v156, 0.0
    %v3150 = vunpack.c.l.s4 1983009808
    %v3151 = vunpack.c.0.s8 %v3150
    %v3152 = vlaneseq
    %v3153 = vshrl.u32 %v3152, 7
    %v3154 = vsub.s32 %v3151, %v3153
    %v3155 = vrot.slane %v156, %v3154
    %v3157 = vunpack.c.l.s4 1983009808
    %v3158 = vunpack.c.0.s8 %v3157
    %v3159 = vlaneseq
    %v3160 = vshrl.u32 %v3159, 7
    %v3161 = vsub.s32 %v3158, %v3160
    %v3162 = vrot.slane %v3148, %v3161
    %v3163 = vcombine.high %v3155, 0.0
    %v3165 = vunpack.c.l.s4 1934713408
    %v3166 = vunpack.c.0.s8 %v3165
    %v3167 = vlaneseq
    %v3168 = vshrl.u32 %v3167, 7
    %v3169 = vsub.s32 %v3166, %v3168
    %v3170 = vrot.slane %v3155, %v3169
    %v3172 = vunpack.c.l.s4 1934713408
    %v3173 = vunpack.c.0.s8 %v3172
    %v3174 = vlaneseq
    %v3175 = vshrl.u32 %v3174, 7
    %v3176 = vsub.s32 %v3173, %v3175
    %v3177 = vrot.slane %v3163, %v3176
    %v3178 = vcombine.high %v3162, 0.0
    %v3180 = vunpack.c.l.s4 1934713408
    %v3181 = vunpack.c.0.s8 %v3180
    %v3182 = vlaneseq
    %v3183 = vshrl.u32 %v3182, 7
    %v3184 = vsub.s32 %v3181, %v3183
    %v3185 = vrot.slane %v3162, %v3184
    %v3187 = vunpack.c.l.s4 1934713408
    %v3188 = vunpack.c.0.s8 %v3187
    %v3189 = vlaneseq
    %v3190 = vshrl.u32 %v3189, 7
    %v3191 = vsub.s32 %v3188, %v3190
    %v3192 = vrot.slane %v3178, %v3191
    %v3193 = vcombine.high %v3170, 0.0
    %v3194 = vcombine.high %v3177, 0.0
    %v3195 = vcombine.high %v3185, 0.0
    %v3196 = vcombine.high %v3192, 0.0
    %v3197 = vcombine.high %v157, 0.0
    %v3199 = vunpack.c.l.s4 1983009808
    %v3200 = vunpack.c.0.s8 %v3199
    %v3201 = vlaneseq
    %v3202 = vshrl.u32 %v3201, 7
    %v3203 = vsub.s32 %v3200, %v3202
    %v3204 = vrot.slane %v157, %v3203
    %v3206 = vunpack.c.l.s4 1983009808
    %v3207 = vunpack.c.0.s8 %v3206
    %v3208 = vlaneseq
    %v3209 = vshrl.u32 %v3208, 7
    %v3210 = vsub.s32 %v3207, %v3209
    %v3211 = vrot.slane %v3197, %v3210
    %v3212 = vcombine.high %v3204, 0.0
    %v3214 = vunpack.c.l.s4 1934713408
    %v3215 = vunpack.c.0.s8 %v3214
    %v3216 = vlaneseq
    %v3217 = vshrl.u32 %v3216, 7
    %v3218 = vsub.s32 %v3215, %v3217
    %v3219 = vrot.slane %v3204, %v3218
    %v3221 = vunpack.c.l.s4 1934713408
    %v3222 = vunpack.c.0.s8 %v3221
    %v3223 = vlaneseq
    %v3224 = vshrl.u32 %v3223, 7
    %v3225 = vsub.s32 %v3222, %v3224
    %v3226 = vrot.slane %v3212, %v3225
    %v3227 = vcombine.high %v3211, 0.0
    %v3229 = vunpack.c.l.s4 1934713408
    %v3230 = vunpack.c.0.s8 %v3229
    %v3231 = vlaneseq
    %v3232 = vshrl.u32 %v3231, 7
    %v3233 = vsub.s32 %v3230, %v3232
    %v3234 = vrot.slane %v3211, %v3233
    %v3236 = vunpack.c.l.s4 1934713408
    %v3237 = vunpack.c.0.s8 %v3236
    %v3238 = vlaneseq
    %v3239 = vshrl.u32 %v3238, 7
    %v3240 = vsub.s32 %v3237, %v3239
    %v3241 = vrot.slane %v3227, %v3240
    %v3242 = vcombine.high %v3219, 0.0
    %v3243 = vcombine.high %v3226, 0.0
    %v3244 = vcombine.high %v3234, 0.0
    %v3245 = vcombine.high %v3241, 0.0
    %v3246 = vcombine.high %v158, 0.0
    %v3248 = vunpack.c.l.s4 1983009808
    %v3249 = vunpack.c.0.s8 %v3248
    %v3250 = vlaneseq
    %v3251 = vshrl.u32 %v3250, 7
    %v3252 = vsub.s32 %v3249, %v3251
    %v3253 = vrot.slane %v158, %v3252
    %v3255 = vunpack.c.l.s4 1983009808
    %v3256 = vunpack.c.0.s8 %v3255
    %v3257 = vlaneseq
    %v3258 = vshrl.u32 %v3257, 7
    %v3259 = vsub.s32 %v3256, %v3258
    %v3260 = vrot.slane %v3246, %v3259
    %v3261 = vcombine.high %v3253, 0.0
    %v3263 = vunpack.c.l.s4 1934713408
    %v3264 = vunpack.c.0.s8 %v3263
    %v3265 = vlaneseq
    %v3266 = vshrl.u32 %v3265, 7
    %v3267 = vsub.s32 %v3264, %v3266
    %v3268 = vrot.slane %v3253, %v3267
    %v3270 = vunpack.c.l.s4 1934713408
    %v3271 = vunpack.c.0.s8 %v3270
    %v3272 = vlaneseq
    %v3273 = vshrl.u32 %v3272, 7
    %v3274 = vsub.s32 %v3271, %v3273
    %v3275 = vrot.slane %v3261, %v3274
    %v3276 = vcombine.high %v3260, 0.0
    %v3278 = vunpack.c.l.s4 1934713408
    %v3279 = vunpack.c.0.s8 %v3278
    %v3280 = vlaneseq
    %v3281 = vshrl.u32 %v3280, 7
    %v3282 = vsub.s32 %v3279, %v3281
    %v3283 = vrot.slane %v3260, %v3282
    %v3285 = vunpack.c.l.s4 1934713408
    %v3286 = vunpack.c.0.s8 %v3285
    %v3287 = vlaneseq
    %v3288 = vshrl.u32 %v3287, 7
    %v3289 = vsub.s32 %v3286, %v3288
    %v3290 = vrot.slane %v3276, %v3289
    %v3291 = vcombine.high %v3268, 0.0
    %v3292 = vcombine.high %v3275, 0.0
    %v3293 = vcombine.high %v3283, 0.0
    %v3294 = vcombine.high %v3290, 0.0
    %3297 = vrot.lane.b32.xlu0 %v204, 4
    %v3298 = vpop.permute.xlu0 %3297
    %3299 = vrot.lane.b32.xlu0 %v1772, 4
    %v3300 = vpop.permute.xlu0 %3299
    %3305 = vrot.lane.b32.xlu0 %v188, 8
    %v3306 = vpop.permute.xlu0 %3305
    %3307 = vrot.lane.b32.xlu0 %v1756, 8
    %v3308 = vpop.permute.xlu0 %3307
    %3313 = vrot.lane.b32.xlu0 %v205, 12
    %v3314 = vpop.permute.xlu0 %3313
    %3315 = vrot.lane.b32.xlu0 %v1773, 12
    %v3316 = vpop.permute.xlu0 %3315
    %3321 = vrot.lane.b32.xlu0 %v196, 16
    %v3322 = vpop.permute.xlu0 %3321
    %3323 = vrot.lane.b32.xlu0 %v1764, 16
    %v3324 = vpop.permute.xlu0 %3323
    %3329 = vrot.lane.b32.xlu0 %v206, 20
    %v3330 = vpop.permute.xlu0 %3329
    %3331 = vrot.lane.b32.xlu0 %v1774, 20
    %v3332 = vpop.permute.xlu0 %3331
    %3337 = vrot.lane.b32.xlu0 %v203, 24
    %v3338 = vpop.permute.xlu0 %3337
    %3339 = vrot.lane.b32.xlu0 %v1771, 24
    %v3340 = vpop.permute.xlu0 %3339
    %3345 = vrot.lane.b32.xlu0 %v207, 28
    %v3346 = vpop.permute.xlu0 %3345
    %3347 = vrot.lane.b32.xlu0 %v1775, 28
    %v3348 = vpop.permute.xlu0 %3347
    %3353 = vrot.lane.b32.xlu0 %v230, 32
    %v3354 = vpop.permute.xlu0 %3353
    %3355 = vrot.lane.b32.xlu0 %v1798, 32
    %v3356 = vpop.permute.xlu0 %3355
    %3361 = vrot.lane.b32.xlu0 %v253, 36
    %v3362 = vpop.permute.xlu0 %3361
    %3363 = vrot.lane.b32.xlu0 %v1821, 36
    %v3364 = vpop.permute.xlu0 %3363
    %3369 = vrot.lane.b32.xlu0 %v237, 40
    %v3370 = vpop.permute.xlu0 %3369
    %3371 = vrot.lane.b32.xlu0 %v1805, 40
    %v3372 = vpop.permute.xlu0 %3371
    %3377 = vrot.lane.b32.xlu0 %v254, 44
    %v3378 = vpop.permute.xlu0 %3377
    %3379 = vrot.lane.b32.xlu0 %v1822, 44
    %v3380 = vpop.permute.xlu0 %3379
    %3385 = vrot.lane.b32.xlu0 %v245, 48
    %v3386 = vpop.permute.xlu0 %3385
    %3387 = vrot.lane.b32.xlu0 %v1813, 48
    %v3388 = vpop.permute.xlu0 %3387
    %3393 = vrot.lane.b32.xlu0 %v255, 52
    %v3394 = vpop.permute.xlu0 %3393
    %3395 = vrot.lane.b32.xlu0 %v1823, 52
    %v3396 = vpop.permute.xlu0 %3395
    %3401 = vrot.lane.b32.xlu0 %v252, 56
    %v3402 = vpop.permute.xlu0 %3401
    %3403 = vrot.lane.b32.xlu0 %v1820, 56
    %v3404 = vpop.permute.xlu0 %3403
    %3409 = vrot.lane.b32.xlu0 %v256, 60
    %v3410 = vpop.permute.xlu0 %3409
    %3411 = vrot.lane.b32.xlu0 %v1824, 60
    %v3412 = vpop.permute.xlu0 %3411
    %3417 = vrot.lane.b32.xlu0 %v279, 64
    %v3418 = vpop.permute.xlu0 %3417
    %3419 = vrot.lane.b32.xlu0 %v1847, 64
    %v3420 = vpop.permute.xlu0 %3419
    %3425 = vrot.lane.b32.xlu0 %v302, 68
    %v3426 = vpop.permute.xlu0 %3425
    %3427 = vrot.lane.b32.xlu0 %v1870, 68
    %v3428 = vpop.permute.xlu0 %3427
    %3433 = vrot.lane.b32.xlu0 %v286, 72
    %v3434 = vpop.permute.xlu0 %3433
    %3435 = vrot.lane.b32.xlu0 %v1854, 72
    %v3436 = vpop.permute.xlu0 %3435
    %3441 = vrot.lane.b32.xlu0 %v303, 76
    %v3442 = vpop.permute.xlu0 %3441
    %3443 = vrot.lane.b32.xlu0 %v1871, 76
    %v3444 = vpop.permute.xlu0 %3443
    %3449 = vrot.lane.b32.xlu0 %v294, 80
    %v3450 = vpop.permute.xlu0 %3449
    %3451 = vrot.lane.b32.xlu0 %v1862, 80
    %v3452 = vpop.permute.xlu0 %3451
    %3457 = vrot.lane.b32.xlu0 %v304, 84
    %v3458 = vpop.permute.xlu0 %3457
    %3459 = vrot.lane.b32.xlu0 %v1872, 84
    %v3460 = vpop.permute.xlu0 %3459
    %3465 = vrot.lane.b32.xlu0 %v301, 88
    %v3466 = vpop.permute.xlu0 %3465
    %3467 = vrot.lane.b32.xlu0 %v1869, 88
    %v3468 = vpop.permute.xlu0 %3467
    %3473 = vrot.lane.b32.xlu0 %v305, 92
    %v3474 = vpop.permute.xlu0 %3473
    %3475 = vrot.lane.b32.xlu0 %v1873, 92
    %v3476 = vpop.permute.xlu0 %3475
    %3481 = vrot.lane.b32.xlu0 %v328, 96
    %v3482 = vpop.permute.xlu0 %3481
    %3483 = vrot.lane.b32.xlu0 %v1896, 96
    %v3484 = vpop.permute.xlu0 %3483
    %3489 = vrot.lane.b32.xlu0 %v351, 100
    %v3490 = vpop.permute.xlu0 %3489
    %3491 = vrot.lane.b32.xlu0 %v1919, 100
    %v3492 = vpop.permute.xlu0 %3491
    %3497 = vrot.lane.b32.xlu0 %v335, 104
    %v3498 = vpop.permute.xlu0 %3497
    %3499 = vrot.lane.b32.xlu0 %v1903, 104
    %v3500 = vpop.permute.xlu0 %3499
    %3505 = vrot.lane.b32.xlu0 %v352, 108
    %v3506 = vpop.permute.xlu0 %3505
    %3507 = vrot.lane.b32.xlu0 %v1920, 108
    %v3508 = vpop.permute.xlu0 %3507
    %3513 = vrot.lane.b32.xlu0 %v343, 112
    %v3514 = vpop.permute.xlu0 %3513
    %3515 = vrot.lane.b32.xlu0 %v1911, 112
    %v3516 = vpop.permute.xlu0 %3515
    %3521 = vrot.lane.b32.xlu0 %v353, 116
    %v3522 = vpop.permute.xlu0 %3521
    %3523 = vrot.lane.b32.xlu0 %v1921, 116
    %v3524 = vpop.permute.xlu0 %3523
    %3529 = vrot.lane.b32.xlu0 %v350, 120
    %v3530 = vpop.permute.xlu0 %3529
    %3531 = vrot.lane.b32.xlu0 %v1918, 120
    %v3532 = vpop.permute.xlu0 %3531
    %3537 = vrot.lane.b32.xlu0 %v354, 124
    %v3538 = vpop.permute.xlu0 %3537
    %3539 = vrot.lane.b32.xlu0 %v1922, 124
    %v3540 = vpop.permute.xlu0 %3539
    %3545 = vrot.lane.b32.xlu0 %v400, 4
    %v3546 = vpop.permute.xlu0 %3545
    %3547 = vrot.lane.b32.xlu0 %v1968, 4
    %v3548 = vpop.permute.xlu0 %3547
    %3553 = vrot.lane.b32.xlu0 %v384, 8
    %v3554 = vpop.permute.xlu0 %3553
    %3555 = vrot.lane.b32.xlu0 %v1952, 8
    %v3556 = vpop.permute.xlu0 %3555
    %3561 = vrot.lane.b32.xlu0 %v401, 12
    %v3562 = vpop.permute.xlu0 %3561
    %3563 = vrot.lane.b32.xlu0 %v1969, 12
    %v3564 = vpop.permute.xlu0 %3563
    %3569 = vrot.lane.b32.xlu0 %v392, 16
    %v3570 = vpop.permute.xlu0 %3569
    %3571 = vrot.lane.b32.xlu0 %v1960, 16
    %v3572 = vpop.permute.xlu0 %3571
    %3577 = vrot.lane.b32.xlu0 %v402, 20
    %v3578 = vpop.permute.xlu0 %3577
    %3579 = vrot.lane.b32.xlu0 %v1970, 20
    %v3580 = vpop.permute.xlu0 %3579
    %3585 = vrot.lane.b32.xlu0 %v399, 24
    %v3586 = vpop.permute.xlu0 %3585
    %3587 = vrot.lane.b32.xlu0 %v1967, 24
    %v3588 = vpop.permute.xlu0 %3587
    %3593 = vrot.lane.b32.xlu0 %v403, 28
    %v3594 = vpop.permute.xlu0 %3593
    %3595 = vrot.lane.b32.xlu0 %v1971, 28
    %v3596 = vpop.permute.xlu0 %3595
    %3601 = vrot.lane.b32.xlu0 %v426, 32
    %v3602 = vpop.permute.xlu0 %3601
    %3603 = vrot.lane.b32.xlu0 %v1994, 32
    %v3604 = vpop.permute.xlu0 %3603
    %3609 = vrot.lane.b32.xlu0 %v449, 36
    %v3610 = vpop.permute.xlu0 %3609
    %3611 = vrot.lane.b32.xlu0 %v2017, 36
    %v3612 = vpop.permute.xlu0 %3611
    %3617 = vrot.lane.b32.xlu0 %v433, 40
    %v3618 = vpop.permute.xlu0 %3617
    %3619 = vrot.lane.b32.xlu0 %v2001, 40
    %v3620 = vpop.permute.xlu0 %3619
    %3625 = vrot.lane.b32.xlu0 %v450, 44
    %v3626 = vpop.permute.xlu0 %3625
    %3627 = vrot.lane.b32.xlu0 %v2018, 44
    %v3628 = vpop.permute.xlu0 %3627
    %3633 = vrot.lane.b32.xlu0 %v441, 48
    %v3634 = vpop.permute.xlu0 %3633
    %3635 = vrot.lane.b32.xlu0 %v2009, 48
    %v3636 = vpop.permute.xlu0 %3635
    %3641 = vrot.lane.b32.xlu0 %v451, 52
    %v3642 = vpop.permute.xlu0 %3641
    %3643 = vrot.lane.b32.xlu0 %v2019, 52
    %v3644 = vpop.permute.xlu0 %3643
    %3649 = vrot.lane.b32.xlu0 %v448, 56
    %v3650 = vpop.permute.xlu0 %3649
    %3651 = vrot.lane.b32.xlu0 %v2016, 56
    %v3652 = vpop.permute.xlu0 %3651
    %3657 = vrot.lane.b32.xlu0 %v452, 60
    %v3658 = vpop.permute.xlu0 %3657
    %3659 = vrot.lane.b32.xlu0 %v2020, 60
    %v3660 = vpop.permute.xlu0 %3659
    %3665 = vrot.lane.b32.xlu0 %v475, 64
    %v3666 = vpop.permute.xlu0 %3665
    %3667 = vrot.lane.b32.xlu0 %v2043, 64
    %v3668 = vpop.permute.xlu0 %3667
    %3673 = vrot.lane.b32.xlu0 %v498, 68
    %v3674 = vpop.permute.xlu0 %3673
    %3675 = vrot.lane.b32.xlu0 %v2066, 68
    %v3676 = vpop.permute.xlu0 %3675
    %3681 = vrot.lane.b32.xlu0 %v482, 72
    %v3682 = vpop.permute.xlu0 %3681
    %3683 = vrot.lane.b32.xlu0 %v2050, 72
    %v3684 = vpop.permute.xlu0 %3683
    %3689 = vrot.lane.b32.xlu0 %v499, 76
    %v3690 = vpop.permute.xlu0 %3689
    %3691 = vrot.lane.b32.xlu0 %v2067, 76
    %v3692 = vpop.permute.xlu0 %3691
    %3697 = vrot.lane.b32.xlu0 %v490, 80
    %v3698 = vpop.permute.xlu0 %3697
    %3699 = vrot.lane.b32.xlu0 %v2058, 80
    %v3700 = vpop.permute.xlu0 %3699
    %3705 = vrot.lane.b32.xlu0 %v500, 84
    %v3706 = vpop.permute.xlu0 %3705
    %3707 = vrot.lane.b32.xlu0 %v2068, 84
    %v3708 = vpop.permute.xlu0 %3707
    %3713 = vrot.lane.b32.xlu0 %v497, 88
    %v3714 = vpop.permute.xlu0 %3713
    %3715 = vrot.lane.b32.xlu0 %v2065, 88
    %v3716 = vpop.permute.xlu0 %3715
    %3721 = vrot.lane.b32.xlu0 %v501, 92
    %v3722 = vpop.permute.xlu0 %3721
    %3723 = vrot.lane.b32.xlu0 %v2069, 92
    %v3724 = vpop.permute.xlu0 %3723
    %3729 = vrot.lane.b32.xlu0 %v524, 96
    %v3730 = vpop.permute.xlu0 %3729
    %3731 = vrot.lane.b32.xlu0 %v2092, 96
    %v3732 = vpop.permute.xlu0 %3731
    %3737 = vrot.lane.b32.xlu0 %v547, 100
    %v3738 = vpop.permute.xlu0 %3737
    %3739 = vrot.lane.b32.xlu0 %v2115, 100
    %v3740 = vpop.permute.xlu0 %3739
    %3745 = vrot.lane.b32.xlu0 %v531, 104
    %v3746 = vpop.permute.xlu0 %3745
    %3747 = vrot.lane.b32.xlu0 %v2099, 104
    %v3748 = vpop.permute.xlu0 %3747
    %3753 = vrot.lane.b32.xlu0 %v548, 108
    %v3754 = vpop.permute.xlu0 %3753
    %3755 = vrot.lane.b32.xlu0 %v2116, 108
    %v3756 = vpop.permute.xlu0 %3755
    %3761 = vrot.lane.b32.xlu0 %v539, 112
    %v3762 = vpop.permute.xlu0 %3761
    %3763 = vrot.lane.b32.xlu0 %v2107, 112
    %v3764 = vpop.permute.xlu0 %3763
    %3769 = vrot.lane.b32.xlu0 %v549, 116
    %v3770 = vpop.permute.xlu0 %3769
    %3771 = vrot.lane.b32.xlu0 %v2117, 116
    %v3772 = vpop.permute.xlu0 %3771
    %3777 = vrot.lane.b32.xlu0 %v546, 120
    %v3778 = vpop.permute.xlu0 %3777
    %3779 = vrot.lane.b32.xlu0 %v2114, 120
    %v3780 = vpop.permute.xlu0 %3779
    %3785 = vrot.lane.b32.xlu0 %v550, 124
    %v3786 = vpop.permute.xlu0 %3785
    %3787 = vrot.lane.b32.xlu0 %v2118, 124
    %v3788 = vpop.permute.xlu0 %3787
    %3793 = vrot.lane.b32.xlu0 %v596, 4
    %v3794 = vpop.permute.xlu0 %3793
    %3795 = vrot.lane.b32.xlu0 %v2164, 4
    %v3796 = vpop.permute.xlu0 %3795
    %3801 = vrot.lane.b32.xlu0 %v580, 8
    %v3802 = vpop.permute.xlu0 %3801
    %3803 = vrot.lane.b32.xlu0 %v2148, 8
    %v3804 = vpop.permute.xlu0 %3803
    %3809 = vrot.lane.b32.xlu0 %v597, 12
    %v3810 = vpop.permute.xlu0 %3809
    %3811 = vrot.lane.b32.xlu0 %v2165, 12
    %v3812 = vpop.permute.xlu0 %3811
    %3817 = vrot.lane.b32.xlu0 %v588, 16
    %v3818 = vpop.permute.xlu0 %3817
    %3819 = vrot.lane.b32.xlu0 %v2156, 16
    %v3820 = vpop.permute.xlu0 %3819
    %3825 = vrot.lane.b32.xlu0 %v598, 20
    %v3826 = vpop.permute.xlu0 %3825
    %3827 = vrot.lane.b32.xlu0 %v2166, 20
    %v3828 = vpop.permute.xlu0 %3827
    %3833 = vrot.lane.b32.xlu0 %v595, 24
    %v3834 = vpop.permute.xlu0 %3833
    %3835 = vrot.lane.b32.xlu0 %v2163, 24
    %v3836 = vpop.permute.xlu0 %3835
    %3841 = vrot.lane.b32.xlu0 %v599, 28
    %v3842 = vpop.permute.xlu0 %3841
    %3843 = vrot.lane.b32.xlu0 %v2167, 28
    %v3844 = vpop.permute.xlu0 %3843
    %3849 = vrot.lane.b32.xlu0 %v622, 32
    %v3850 = vpop.permute.xlu0 %3849
    %3851 = vrot.lane.b32.xlu0 %v2190, 32
    %v3852 = vpop.permute.xlu0 %3851
    %3857 = vrot.lane.b32.xlu0 %v645, 36
    %v3858 = vpop.permute.xlu0 %3857
    %3859 = vrot.lane.b32.xlu0 %v2213, 36
    %v3860 = vpop.permute.xlu0 %3859
    %3865 = vrot.lane.b32.xlu0 %v629, 40
    %v3866 = vpop.permute.xlu0 %3865
    %3867 = vrot.lane.b32.xlu0 %v2197, 40
    %v3868 = vpop.permute.xlu0 %3867
    %3873 = vrot.lane.b32.xlu0 %v646, 44
    %v3874 = vpop.permute.xlu0 %3873
    %3875 = vrot.lane.b32.xlu0 %v2214, 44
    %v3876 = vpop.permute.xlu0 %3875
    %3881 = vrot.lane.b32.xlu0 %v637, 48
    %v3882 = vpop.permute.xlu0 %3881
    %3883 = vrot.lane.b32.xlu0 %v2205, 48
    %v3884 = vpop.permute.xlu0 %3883
    %3889 = vrot.lane.b32.xlu0 %v647, 52
    %v3890 = vpop.permute.xlu0 %3889
    %3891 = vrot.lane.b32.xlu0 %v2215, 52
    %v3892 = vpop.permute.xlu0 %3891
    %3897 = vrot.lane.b32.xlu0 %v644, 56
    %v3898 = vpop.permute.xlu0 %3897
    %3899 = vrot.lane.b32.xlu0 %v2212, 56
    %v3900 = vpop.permute.xlu0 %3899
    %3905 = vrot.lane.b32.xlu0 %v648, 60
    %v3906 = vpop.permute.xlu0 %3905
    %3907 = vrot.lane.b32.xlu0 %v2216, 60
    %v3908 = vpop.permute.xlu0 %3907
    %3913 = vrot.lane.b32.xlu0 %v671, 64
    %v3914 = vpop.permute.xlu0 %3913
    %3915 = vrot.lane.b32.xlu0 %v2239, 64
    %v3916 = vpop.permute.xlu0 %3915
    %3921 = vrot.lane.b32.xlu0 %v694, 68
    %v3922 = vpop.permute.xlu0 %3921
    %3923 = vrot.lane.b32.xlu0 %v2262, 68
    %v3924 = vpop.permute.xlu0 %3923
    %3929 = vrot.lane.b32.xlu0 %v678, 72
    %v3930 = vpop.permute.xlu0 %3929
    %3931 = vrot.lane.b32.xlu0 %v2246, 72
    %v3932 = vpop.permute.xlu0 %3931
    %3937 = vrot.lane.b32.xlu0 %v695, 76
    %v3938 = vpop.permute.xlu0 %3937
    %3939 = vrot.lane.b32.xlu0 %v2263, 76
    %v3940 = vpop.permute.xlu0 %3939
    %3945 = vrot.lane.b32.xlu0 %v686, 80
    %v3946 = vpop.permute.xlu0 %3945
    %3947 = vrot.lane.b32.xlu0 %v2254, 80
    %v3948 = vpop.permute.xlu0 %3947
    %3953 = vrot.lane.b32.xlu0 %v696, 84
    %v3954 = vpop.permute.xlu0 %3953
    %3955 = vrot.lane.b32.xlu0 %v2264, 84
    %v3956 = vpop.permute.xlu0 %3955
    %3961 = vrot.lane.b32.xlu0 %v693, 88
    %v3962 = vpop.permute.xlu0 %3961
    %3963 = vrot.lane.b32.xlu0 %v2261, 88
    %v3964 = vpop.permute.xlu0 %3963
    %3969 = vrot.lane.b32.xlu0 %v697, 92
    %v3970 = vpop.permute.xlu0 %3969
    %3971 = vrot.lane.b32.xlu0 %v2265, 92
    %v3972 = vpop.permute.xlu0 %3971
    %3977 = vrot.lane.b32.xlu0 %v720, 96
    %v3978 = vpop.permute.xlu0 %3977
    %3979 = vrot.lane.b32.xlu0 %v2288, 96
    %v3980 = vpop.permute.xlu0 %3979
    %3985 = vrot.lane.b32.xlu0 %v743, 100
    %v3986 = vpop.permute.xlu0 %3985
    %3987 = vrot.lane.b32.xlu0 %v2311, 100
    %v3988 = vpop.permute.xlu0 %3987
    %3993 = vrot.lane.b32.xlu0 %v727, 104
    %v3994 = vpop.permute.xlu0 %3993
    %3995 = vrot.lane.b32.xlu0 %v2295, 104
    %v3996 = vpop.permute.xlu0 %3995
    %4001 = vrot.lane.b32.xlu0 %v744, 108
    %v4002 = vpop.permute.xlu0 %4001
    %4003 = vrot.lane.b32.xlu0 %v2312, 108
    %v4004 = vpop.permute.xlu0 %4003
    %4009 = vrot.lane.b32.xlu0 %v735, 112
    %v4010 = vpop.permute.xlu0 %4009
    %4011 = vrot.lane.b32.xlu0 %v2303, 112
    %v4012 = vpop.permute.xlu0 %4011
    %4017 = vrot.lane.b32.xlu0 %v745, 116
    %v4018 = vpop.permute.xlu0 %4017
    %4019 = vrot.lane.b32.xlu0 %v2313, 116
    %v4020 = vpop.permute.xlu0 %4019
    %4025 = vrot.lane.b32.xlu0 %v742, 120
    %v4026 = vpop.permute.xlu0 %4025
    %4027 = vrot.lane.b32.xlu0 %v2310, 120
    %v4028 = vpop.permute.xlu0 %4027
    %4033 = vrot.lane.b32.xlu0 %v746, 124
    %v4034 = vpop.permute.xlu0 %4033
    %4035 = vrot.lane.b32.xlu0 %v2314, 124
    %v4036 = vpop.permute.xlu0 %4035
    %4041 = vrot.lane.b32.xlu0 %v792, 4
    %v4042 = vpop.permute.xlu0 %4041
    %4043 = vrot.lane.b32.xlu0 %v2360, 4
    %v4044 = vpop.permute.xlu0 %4043
    %4049 = vrot.lane.b32.xlu0 %v776, 8
    %v4050 = vpop.permute.xlu0 %4049
    %4051 = vrot.lane.b32.xlu0 %v2344, 8
    %v4052 = vpop.permute.xlu0 %4051
    %4057 = vrot.lane.b32.xlu0 %v793, 12
    %v4058 = vpop.permute.xlu0 %4057
    %4059 = vrot.lane.b32.xlu0 %v2361, 12
    %v4060 = vpop.permute.xlu0 %4059
    %4065 = vrot.lane.b32.xlu0 %v784, 16
    %v4066 = vpop.permute.xlu0 %4065
    %4067 = vrot.lane.b32.xlu0 %v2352, 16
    %v4068 = vpop.permute.xlu0 %4067
    %4073 = vrot.lane.b32.xlu0 %v794, 20
    %v4074 = vpop.permute.xlu0 %4073
    %4075 = vrot.lane.b32.xlu0 %v2362, 20
    %v4076 = vpop.permute.xlu0 %4075
    %4081 = vrot.lane.b32.xlu0 %v791, 24
    %v4082 = vpop.permute.xlu0 %4081
    %4083 = vrot.lane.b32.xlu0 %v2359, 24
    %v4084 = vpop.permute.xlu0 %4083
    %4089 = vrot.lane.b32.xlu0 %v795, 28
    %v4090 = vpop.permute.xlu0 %4089
    %4091 = vrot.lane.b32.xlu0 %v2363, 28
    %v4092 = vpop.permute.xlu0 %4091
    %4097 = vrot.lane.b32.xlu0 %v818, 32
    %v4098 = vpop.permute.xlu0 %4097
    %4099 = vrot.lane.b32.xlu0 %v2386, 32
    %v4100 = vpop.permute.xlu0 %4099
    %4105 = vrot.lane.b32.xlu0 %v841, 36
    %v4106 = vpop.permute.xlu0 %4105
    %4107 = vrot.lane.b32.xlu0 %v2409, 36
    %v4108 = vpop.permute.xlu0 %4107
    %4113 = vrot.lane.b32.xlu0 %v825, 40
    %v4114 = vpop.permute.xlu0 %4113
    %4115 = vrot.lane.b32.xlu0 %v2393, 40
    %v4116 = vpop.permute.xlu0 %4115
    %4121 = vrot.lane.b32.xlu0 %v842, 44
    %v4122 = vpop.permute.xlu0 %4121
    %4123 = vrot.lane.b32.xlu0 %v2410, 44
    %v4124 = vpop.permute.xlu0 %4123
    %4129 = vrot.lane.b32.xlu0 %v833, 48
    %v4130 = vpop.permute.xlu0 %4129
    %4131 = vrot.lane.b32.xlu0 %v2401, 48
    %v4132 = vpop.permute.xlu0 %4131
    %4137 = vrot.lane.b32.xlu0 %v843, 52
    %v4138 = vpop.permute.xlu0 %4137
    %4139 = vrot.lane.b32.xlu0 %v2411, 52
    %v4140 = vpop.permute.xlu0 %4139
    %4145 = vrot.lane.b32.xlu0 %v840, 56
    %v4146 = vpop.permute.xlu0 %4145
    %4147 = vrot.lane.b32.xlu0 %v2408, 56
    %v4148 = vpop.permute.xlu0 %4147
    %4153 = vrot.lane.b32.xlu0 %v844, 60
    %v4154 = vpop.permute.xlu0 %4153
    %4155 = vrot.lane.b32.xlu0 %v2412, 60
    %v4156 = vpop.permute.xlu0 %4155
    %4161 = vrot.lane.b32.xlu0 %v867, 64
    %v4162 = vpop.permute.xlu0 %4161
    %4163 = vrot.lane.b32.xlu0 %v2435, 64
    %v4164 = vpop.permute.xlu0 %4163
    %4169 = vrot.lane.b32.xlu0 %v890, 68
    %v4170 = vpop.permute.xlu0 %4169
    %4171 = vrot.lane.b32.xlu0 %v2458, 68
    %v4172 = vpop.permute.xlu0 %4171
    %4177 = vrot.lane.b32.xlu0 %v874, 72
    %v4178 = vpop.permute.xlu0 %4177
    %4179 = vrot.lane.b32.xlu0 %v2442, 72
    %v4180 = vpop.permute.xlu0 %4179
    %4185 = vrot.lane.b32.xlu0 %v891, 76
    %v4186 = vpop.permute.xlu0 %4185
    %4187 = vrot.lane.b32.xlu0 %v2459, 76
    %v4188 = vpop.permute.xlu0 %4187
    %4193 = vrot.lane.b32.xlu0 %v882, 80
    %v4194 = vpop.permute.xlu0 %4193
    %4195 = vrot.lane.b32.xlu0 %v2450, 80
    %v4196 = vpop.permute.xlu0 %4195
    %4201 = vrot.lane.b32.xlu0 %v892, 84
    %v4202 = vpop.permute.xlu0 %4201
    %4203 = vrot.lane.b32.xlu0 %v2460, 84
    %v4204 = vpop.permute.xlu0 %4203
    %4209 = vrot.lane.b32.xlu0 %v889, 88
    %v4210 = vpop.permute.xlu0 %4209
    %4211 = vrot.lane.b32.xlu0 %v2457, 88
    %v4212 = vpop.permute.xlu0 %4211
    %4217 = vrot.lane.b32.xlu0 %v893, 92
    %v4218 = vpop.permute.xlu0 %4217
    %4219 = vrot.lane.b32.xlu0 %v2461, 92
    %v4220 = vpop.permute.xlu0 %4219
    %4225 = vrot.lane.b32.xlu0 %v916, 96
    %v4226 = vpop.permute.xlu0 %4225
    %4227 = vrot.lane.b32.xlu0 %v2484, 96
    %v4228 = vpop.permute.xlu0 %4227
    %4233 = vrot.lane.b32.xlu0 %v939, 100
    %v4234 = vpop.permute.xlu0 %4233
    %4235 = vrot.lane.b32.xlu0 %v2507, 100
    %v4236 = vpop.permute.xlu0 %4235
    %4241 = vrot.lane.b32.xlu0 %v923, 104
    %v4242 = vpop.permute.xlu0 %4241
    %4243 = vrot.lane.b32.xlu0 %v2491, 104
    %v4244 = vpop.permute.xlu0 %4243
    %4249 = vrot.lane.b32.xlu0 %v940, 108
    %v4250 = vpop.permute.xlu0 %4249
    %4251 = vrot.lane.b32.xlu0 %v2508, 108
    %v4252 = vpop.permute.xlu0 %4251
    %4257 = vrot.lane.b32.xlu0 %v931, 112
    %v4258 = vpop.permute.xlu0 %4257
    %4259 = vrot.lane.b32.xlu0 %v2499, 112
    %v4260 = vpop.permute.xlu0 %4259
    %4265 = vrot.lane.b32.xlu0 %v941, 116
    %v4266 = vpop.permute.xlu0 %4265
    %4267 = vrot.lane.b32.xlu0 %v2509, 116
    %v4268 = vpop.permute.xlu0 %4267
    %4273 = vrot.lane.b32.xlu0 %v938, 120
    %v4274 = vpop.permute.xlu0 %4273
    %4275 = vrot.lane.b32.xlu0 %v2506, 120
    %v4276 = vpop.permute.xlu0 %4275
    %4281 = vrot.lane.b32.xlu0 %v942, 124
    %v4282 = vpop.permute.xlu0 %4281
    %4283 = vrot.lane.b32.xlu0 %v2510, 124
    %v4284 = vpop.permute.xlu0 %4283
    %4289 = vrot.lane.b32.xlu0 %v988, 4
    %v4290 = vpop.permute.xlu0 %4289
    %4291 = vrot.lane.b32.xlu0 %v2556, 4
    %v4292 = vpop.permute.xlu0 %4291
    %4297 = vrot.lane.b32.xlu0 %v972, 8
    %v4298 = vpop.permute.xlu0 %4297
    %4299 = vrot.lane.b32.xlu0 %v2540, 8
    %v4300 = vpop.permute.xlu0 %4299
    %4305 = vrot.lane.b32.xlu0 %v989, 12
    %v4306 = vpop.permute.xlu0 %4305
    %4307 = vrot.lane.b32.xlu0 %v2557, 12
    %v4308 = vpop.permute.xlu0 %4307
    %4313 = vrot.lane.b32.xlu0 %v980, 16
    %v4314 = vpop.permute.xlu0 %4313
    %4315 = vrot.lane.b32.xlu0 %v2548, 16
    %v4316 = vpop.permute.xlu0 %4315
    %4321 = vrot.lane.b32.xlu0 %v990, 20
    %v4322 = vpop.permute.xlu0 %4321
    %4323 = vrot.lane.b32.xlu0 %v2558, 20
    %v4324 = vpop.permute.xlu0 %4323
    %4329 = vrot.lane.b32.xlu0 %v987, 24
    %v4330 = vpop.permute.xlu0 %4329
    %4331 = vrot.lane.b32.xlu0 %v2555, 24
    %v4332 = vpop.permute.xlu0 %4331
    %4337 = vrot.lane.b32.xlu0 %v991, 28
    %v4338 = vpop.permute.xlu0 %4337
    %4339 = vrot.lane.b32.xlu0 %v2559, 28
    %v4340 = vpop.permute.xlu0 %4339
    %4345 = vrot.lane.b32.xlu0 %v1014, 32
    %v4346 = vpop.permute.xlu0 %4345
    %4347 = vrot.lane.b32.xlu0 %v2582, 32
    %v4348 = vpop.permute.xlu0 %4347
    %4353 = vrot.lane.b32.xlu0 %v1037, 36
    %v4354 = vpop.permute.xlu0 %4353
    %4355 = vrot.lane.b32.xlu0 %v2605, 36
    %v4356 = vpop.permute.xlu0 %4355
    %4361 = vrot.lane.b32.xlu0 %v1021, 40
    %v4362 = vpop.permute.xlu0 %4361
    %4363 = vrot.lane.b32.xlu0 %v2589, 40
    %v4364 = vpop.permute.xlu0 %4363
    %4369 = vrot.lane.b32.xlu0 %v1038, 44
    %v4370 = vpop.permute.xlu0 %4369
    %4371 = vrot.lane.b32.xlu0 %v2606, 44
    %v4372 = vpop.permute.xlu0 %4371
    %4377 = vrot.lane.b32.xlu0 %v1029, 48
    %v4378 = vpop.permute.xlu0 %4377
    %4379 = vrot.lane.b32.xlu0 %v2597, 48
    %v4380 = vpop.permute.xlu0 %4379
    %4385 = vrot.lane.b32.xlu0 %v1039, 52
    %v4386 = vpop.permute.xlu0 %4385
    %4387 = vrot.lane.b32.xlu0 %v2607, 52
    %v4388 = vpop.permute.xlu0 %4387
    %4393 = vrot.lane.b32.xlu0 %v1036, 56
    %v4394 = vpop.permute.xlu0 %4393
    %4395 = vrot.lane.b32.xlu0 %v2604, 56
    %v4396 = vpop.permute.xlu0 %4395
    %4401 = vrot.lane.b32.xlu0 %v1040, 60
    %v4402 = vpop.permute.xlu0 %4401
    %4403 = vrot.lane.b32.xlu0 %v2608, 60
    %v4404 = vpop.permute.xlu0 %4403
    %4409 = vrot.lane.b32.xlu0 %v1063, 64
    %v4410 = vpop.permute.xlu0 %4409
    %4411 = vrot.lane.b32.xlu0 %v2631, 64
    %v4412 = vpop.permute.xlu0 %4411
    %4417 = vrot.lane.b32.xlu0 %v1086, 68
    %v4418 = vpop.permute.xlu0 %4417
    %4419 = vrot.lane.b32.xlu0 %v2654, 68
    %v4420 = vpop.permute.xlu0 %4419
    %4425 = vrot.lane.b32.xlu0 %v1070, 72
    %v4426 = vpop.permute.xlu0 %4425
    %4427 = vrot.lane.b32.xlu0 %v2638, 72
    %v4428 = vpop.permute.xlu0 %4427
    %4433 = vrot.lane.b32.xlu0 %v1087, 76
    %v4434 = vpop.permute.xlu0 %4433
    %4435 = vrot.lane.b32.xlu0 %v2655, 76
    %v4436 = vpop.permute.xlu0 %4435
    %4441 = vrot.lane.b32.xlu0 %v1078, 80
    %v4442 = vpop.permute.xlu0 %4441
    %4443 = vrot.lane.b32.xlu0 %v2646, 80
    %v4444 = vpop.permute.xlu0 %4443
    %4449 = vrot.lane.b32.xlu0 %v1088, 84
    %v4450 = vpop.permute.xlu0 %4449
    %4451 = vrot.lane.b32.xlu0 %v2656, 84
    %v4452 = vpop.permute.xlu0 %4451
    %4457 = vrot.lane.b32.xlu0 %v1085, 88
    %v4458 = vpop.permute.xlu0 %4457
    %4459 = vrot.lane.b32.xlu0 %v2653, 88
    %v4460 = vpop.permute.xlu0 %4459
    %4465 = vrot.lane.b32.xlu0 %v1089, 92
    %v4466 = vpop.permute.xlu0 %4465
    %4467 = vrot.lane.b32.xlu0 %v2657, 92
    %v4468 = vpop.permute.xlu0 %4467
    %4473 = vrot.lane.b32.xlu0 %v1112, 96
    %v4474 = vpop.permute.xlu0 %4473
    %4475 = vrot.lane.b32.xlu0 %v2680, 96
    %v4476 = vpop.permute.xlu0 %4475
    %4481 = vrot.lane.b32.xlu0 %v1135, 100
    %v4482 = vpop.permute.xlu0 %4481
    %4483 = vrot.lane.b32.xlu0 %v2703, 100
    %v4484 = vpop.permute.xlu0 %4483
    %4489 = vrot.lane.b32.xlu0 %v1119, 104
    %v4490 = vpop.permute.xlu0 %4489
    %4491 = vrot.lane.b32.xlu0 %v2687, 104
    %v4492 = vpop.permute.xlu0 %4491
    %4497 = vrot.lane.b32.xlu0 %v1136, 108
    %v4498 = vpop.permute.xlu0 %4497
    %4499 = vrot.lane.b32.xlu0 %v2704, 108
    %v4500 = vpop.permute.xlu0 %4499
    %4505 = vrot.lane.b32.xlu0 %v1127, 112
    %v4506 = vpop.permute.xlu0 %4505
    %4507 = vrot.lane.b32.xlu0 %v2695, 112
    %v4508 = vpop.permute.xlu0 %4507
    %4513 = vrot.lane.b32.xlu0 %v1137, 116
    %v4514 = vpop.permute.xlu0 %4513
    %4515 = vrot.lane.b32.xlu0 %v2705, 116
    %v4516 = vpop.permute.xlu0 %4515
    %4521 = vrot.lane.b32.xlu0 %v1134, 120
    %v4522 = vpop.permute.xlu0 %4521
    %4523 = vrot.lane.b32.xlu0 %v2702, 120
    %v4524 = vpop.permute.xlu0 %4523
    %4529 = vrot.lane.b32.xlu0 %v1138, 124
    %v4530 = vpop.permute.xlu0 %4529
    %4531 = vrot.lane.b32.xlu0 %v2706, 124
    %v4532 = vpop.permute.xlu0 %4531
    %4537 = vrot.lane.b32.xlu0 %v1184, 4
    %v4538 = vpop.permute.xlu0 %4537
    %4539 = vrot.lane.b32.xlu0 %v2752, 4
    %v4540 = vpop.permute.xlu0 %4539
    %4545 = vrot.lane.b32.xlu0 %v1168, 8
    %v4546 = vpop.permute.xlu0 %4545
    %4547 = vrot.lane.b32.xlu0 %v2736, 8
    %v4548 = vpop.permute.xlu0 %4547
    %4553 = vrot.lane.b32.xlu0 %v1185, 12
    %v4554 = vpop.permute.xlu0 %4553
    %4555 = vrot.lane.b32.xlu0 %v2753, 12
    %v4556 = vpop.permute.xlu0 %4555
    %4561 = vrot.lane.b32.xlu0 %v1176, 16
    %v4562 = vpop.permute.xlu0 %4561
    %4563 = vrot.lane.b32.xlu0 %v2744, 16
    %v4564 = vpop.permute.xlu0 %4563
    %4569 = vrot.lane.b32.xlu0 %v1186, 20
    %v4570 = vpop.permute.xlu0 %4569
    %4571 = vrot.lane.b32.xlu0 %v2754, 20
    %v4572 = vpop.permute.xlu0 %4571
    %4577 = vrot.lane.b32.xlu0 %v1183, 24
    %v4578 = vpop.permute.xlu0 %4577
    %4579 = vrot.lane.b32.xlu0 %v2751, 24
    %v4580 = vpop.permute.xlu0 %4579
    %4585 = vrot.lane.b32.xlu0 %v1187, 28
    %v4586 = vpop.permute.xlu0 %4585
    %4587 = vrot.lane.b32.xlu0 %v2755, 28
    %v4588 = vpop.permute.xlu0 %4587
    %4593 = vrot.lane.b32.xlu0 %v1210, 32
    %v4594 = vpop.permute.xlu0 %4593
    %4595 = vrot.lane.b32.xlu0 %v2778, 32
    %v4596 = vpop.permute.xlu0 %4595
    %4601 = vrot.lane.b32.xlu0 %v1233, 36
    %v4602 = vpop.permute.xlu0 %4601
    %4603 = vrot.lane.b32.xlu0 %v2801, 36
    %v4604 = vpop.permute.xlu0 %4603
    %4609 = vrot.lane.b32.xlu0 %v1217, 40
    %v4610 = vpop.permute.xlu0 %4609
    %4611 = vrot.lane.b32.xlu0 %v2785, 40
    %v4612 = vpop.permute.xlu0 %4611
    %4617 = vrot.lane.b32.xlu0 %v1234, 44
    %v4618 = vpop.permute.xlu0 %4617
    %4619 = vrot.lane.b32.xlu0 %v2802, 44
    %v4620 = vpop.permute.xlu0 %4619
    %4625 = vrot.lane.b32.xlu0 %v1225, 48
    %v4626 = vpop.permute.xlu0 %4625
    %4627 = vrot.lane.b32.xlu0 %v2793, 48
    %v4628 = vpop.permute.xlu0 %4627
    %4633 = vrot.lane.b32.xlu0 %v1235, 52
    %v4634 = vpop.permute.xlu0 %4633
    %4635 = vrot.lane.b32.xlu0 %v2803, 52
    %v4636 = vpop.permute.xlu0 %4635
    %4641 = vrot.lane.b32.xlu0 %v1232, 56
    %v4642 = vpop.permute.xlu0 %4641
    %4643 = vrot.lane.b32.xlu0 %v2800, 56
    %v4644 = vpop.permute.xlu0 %4643
    %4649 = vrot.lane.b32.xlu0 %v1236, 60
    %v4650 = vpop.permute.xlu0 %4649
    %4651 = vrot.lane.b32.xlu0 %v2804, 60
    %v4652 = vpop.permute.xlu0 %4651
    %4657 = vrot.lane.b32.xlu0 %v1259, 64
    %v4658 = vpop.permute.xlu0 %4657
    %4659 = vrot.lane.b32.xlu0 %v2827, 64
    %v4660 = vpop.permute.xlu0 %4659
    %4665 = vrot.lane.b32.xlu0 %v1282, 68
    %v4666 = vpop.permute.xlu0 %4665
    %4667 = vrot.lane.b32.xlu0 %v2850, 68
    %v4668 = vpop.permute.xlu0 %4667
    %4673 = vrot.lane.b32.xlu0 %v1266, 72
    %v4674 = vpop.permute.xlu0 %4673
    %4675 = vrot.lane.b32.xlu0 %v2834, 72
    %v4676 = vpop.permute.xlu0 %4675
    %4681 = vrot.lane.b32.xlu0 %v1283, 76
    %v4682 = vpop.permute.xlu0 %4681
    %4683 = vrot.lane.b32.xlu0 %v2851, 76
    %v4684 = vpop.permute.xlu0 %4683
    %4689 = vrot.lane.b32.xlu0 %v1274, 80
    %v4690 = vpop.permute.xlu0 %4689
    %4691 = vrot.lane.b32.xlu0 %v2842, 80
    %v4692 = vpop.permute.xlu0 %4691
    %4697 = vrot.lane.b32.xlu0 %v1284, 84
    %v4698 = vpop.permute.xlu0 %4697
    %4699 = vrot.lane.b32.xlu0 %v2852, 84
    %v4700 = vpop.permute.xlu0 %4699
    %4705 = vrot.lane.b32.xlu0 %v1281, 88
    %v4706 = vpop.permute.xlu0 %4705
    %4707 = vrot.lane.b32.xlu0 %v2849, 88
    %v4708 = vpop.permute.xlu0 %4707
    %4713 = vrot.lane.b32.xlu0 %v1285, 92
    %v4714 = vpop.permute.xlu0 %4713
    %4715 = vrot.lane.b32.xlu0 %v2853, 92
    %v4716 = vpop.permute.xlu0 %4715
    %4721 = vrot.lane.b32.xlu0 %v1308, 96
    %v4722 = vpop.permute.xlu0 %4721
    %4723 = vrot.lane.b32.xlu0 %v2876, 96
    %v4724 = vpop.permute.xlu0 %4723
    %4729 = vrot.lane.b32.xlu0 %v1331, 100
    %v4730 = vpop.permute.xlu0 %4729
    %4731 = vrot.lane.b32.xlu0 %v2899, 100
    %v4732 = vpop.permute.xlu0 %4731
    %4737 = vrot.lane.b32.xlu0 %v1315, 104
    %v4738 = vpop.permute.xlu0 %4737
    %4739 = vrot.lane.b32.xlu0 %v2883, 104
    %v4740 = vpop.permute.xlu0 %4739
    %4745 = vrot.lane.b32.xlu0 %v1332, 108
    %v4746 = vpop.permute.xlu0 %4745
    %4747 = vrot.lane.b32.xlu0 %v2900, 108
    %v4748 = vpop.permute.xlu0 %4747
    %4753 = vrot.lane.b32.xlu0 %v1323, 112
    %v4754 = vpop.permute.xlu0 %4753
    %4755 = vrot.lane.b32.xlu0 %v2891, 112
    %v4756 = vpop.permute.xlu0 %4755
    %4761 = vrot.lane.b32.xlu0 %v1333, 116
    %v4762 = vpop.permute.xlu0 %4761
    %4763 = vrot.lane.b32.xlu0 %v2901, 116
    %v4764 = vpop.permute.xlu0 %4763
    %4769 = vrot.lane.b32.xlu0 %v1330, 120
    %v4770 = vpop.permute.xlu0 %4769
    %4771 = vrot.lane.b32.xlu0 %v2898, 120
    %v4772 = vpop.permute.xlu0 %4771
    %4777 = vrot.lane.b32.xlu0 %v1334, 124
    %v4778 = vpop.permute.xlu0 %4777
    %4779 = vrot.lane.b32.xlu0 %v2902, 124
    %v4780 = vpop.permute.xlu0 %4779
    %4785 = vrot.lane.b32.xlu0 %v1380, 4
    %v4786 = vpop.permute.xlu0 %4785
    %4787 = vrot.lane.b32.xlu0 %v2948, 4
    %v4788 = vpop.permute.xlu0 %4787
    %4793 = vrot.lane.b32.xlu0 %v1364, 8
    %v4794 = vpop.permute.xlu0 %4793
    %4795 = vrot.lane.b32.xlu0 %v2932, 8
    %v4796 = vpop.permute.xlu0 %4795
    %4801 = vrot.lane.b32.xlu0 %v1381, 12
    %v4802 = vpop.permute.xlu0 %4801
    %4803 = vrot.lane.b32.xlu0 %v2949, 12
    %v4804 = vpop.permute.xlu0 %4803
    %4809 = vrot.lane.b32.xlu0 %v1372, 16
    %v4810 = vpop.permute.xlu0 %4809
    %4811 = vrot.lane.b32.xlu0 %v2940, 16
    %v4812 = vpop.permute.xlu0 %4811
    %4817 = vrot.lane.b32.xlu0 %v1382, 20
    %v4818 = vpop.permute.xlu0 %4817
    %4819 = vrot.lane.b32.xlu0 %v2950, 20
    %v4820 = vpop.permute.xlu0 %4819
    %4825 = vrot.lane.b32.xlu0 %v1379, 24
    %v4826 = vpop.permute.xlu0 %4825
    %4827 = vrot.lane.b32.xlu0 %v2947, 24
    %v4828 = vpop.permute.xlu0 %4827
    %4833 = vrot.lane.b32.xlu0 %v1383, 28
    %v4834 = vpop.permute.xlu0 %4833
    %4835 = vrot.lane.b32.xlu0 %v2951, 28
    %v4836 = vpop.permute.xlu0 %4835
    %4841 = vrot.lane.b32.xlu0 %v1406, 32
    %v4842 = vpop.permute.xlu0 %4841
    %4843 = vrot.lane.b32.xlu0 %v2974, 32
    %v4844 = vpop.permute.xlu0 %4843
    %4849 = vrot.lane.b32.xlu0 %v1429, 36
    %v4850 = vpop.permute.xlu0 %4849
    %4851 = vrot.lane.b32.xlu0 %v2997, 36
    %v4852 = vpop.permute.xlu0 %4851
    %4857 = vrot.lane.b32.xlu0 %v1413, 40
    %v4858 = vpop.permute.xlu0 %4857
    %4859 = vrot.lane.b32.xlu0 %v2981, 40
    %v4860 = vpop.permute.xlu0 %4859
    %4865 = vrot.lane.b32.xlu0 %v1430, 44
    %v4866 = vpop.permute.xlu0 %4865
    %4867 = vrot.lane.b32.xlu0 %v2998, 44
    %v4868 = vpop.permute.xlu0 %4867
    %4873 = vrot.lane.b32.xlu0 %v1421, 48
    %v4874 = vpop.permute.xlu0 %4873
    %4875 = vrot.lane.b32.xlu0 %v2989, 48
    %v4876 = vpop.permute.xlu0 %4875
    %4881 = vrot.lane.b32.xlu0 %v1431, 52
    %v4882 = vpop.permute.xlu0 %4881
    %4883 = vrot.lane.b32.xlu0 %v2999, 52
    %v4884 = vpop.permute.xlu0 %4883
    %4889 = vrot.lane.b32.xlu0 %v1428, 56
    %v4890 = vpop.permute.xlu0 %4889
    %4891 = vrot.lane.b32.xlu0 %v2996, 56
    %v4892 = vpop.permute.xlu0 %4891
    %4897 = vrot.lane.b32.xlu0 %v1432, 60
    %v4898 = vpop.permute.xlu0 %4897
    %4899 = vrot.lane.b32.xlu0 %v3000, 60
    %v4900 = vpop.permute.xlu0 %4899
    %4905 = vrot.lane.b32.xlu0 %v1455, 64
    %v4906 = vpop.permute.xlu0 %4905
    %4907 = vrot.lane.b32.xlu0 %v3023, 64
    %v4908 = vpop.permute.xlu0 %4907
    %4913 = vrot.lane.b32.xlu0 %v1478, 68
    %v4914 = vpop.permute.xlu0 %4913
    %4915 = vrot.lane.b32.xlu0 %v3046, 68
    %v4916 = vpop.permute.xlu0 %4915
    %4921 = vrot.lane.b32.xlu0 %v1462, 72
    %v4922 = vpop.permute.xlu0 %4921
    %4923 = vrot.lane.b32.xlu0 %v3030, 72
    %v4924 = vpop.permute.xlu0 %4923
    %4929 = vrot.lane.b32.xlu0 %v1479, 76
    %v4930 = vpop.permute.xlu0 %4929
    %4931 = vrot.lane.b32.xlu0 %v3047, 76
    %v4932 = vpop.permute.xlu0 %4931
    %4937 = vrot.lane.b32.xlu0 %v1470, 80
    %v4938 = vpop.permute.xlu0 %4937
    %4939 = vrot.lane.b32.xlu0 %v3038, 80
    %v4940 = vpop.permute.xlu0 %4939
    %4945 = vrot.lane.b32.xlu0 %v1480, 84
    %v4946 = vpop.permute.xlu0 %4945
    %4947 = vrot.lane.b32.xlu0 %v3048, 84
    %v4948 = vpop.permute.xlu0 %4947
    %4953 = vrot.lane.b32.xlu0 %v1477, 88
    %v4954 = vpop.permute.xlu0 %4953
    %4955 = vrot.lane.b32.xlu0 %v3045, 88
    %v4956 = vpop.permute.xlu0 %4955
    %4961 = vrot.lane.b32.xlu0 %v1481, 92
    %v4962 = vpop.permute.xlu0 %4961
    %4963 = vrot.lane.b32.xlu0 %v3049, 92
    %v4964 = vpop.permute.xlu0 %4963
    %4969 = vrot.lane.b32.xlu0 %v1504, 96
    %v4970 = vpop.permute.xlu0 %4969
    %4971 = vrot.lane.b32.xlu0 %v3072, 96
    %v4972 = vpop.permute.xlu0 %4971
    %4977 = vrot.lane.b32.xlu0 %v1527, 100
    %v4978 = vpop.permute.xlu0 %4977
    %4979 = vrot.lane.b32.xlu0 %v3095, 100
    %v4980 = vpop.permute.xlu0 %4979
    %4985 = vrot.lane.b32.xlu0 %v1511, 104
    %v4986 = vpop.permute.xlu0 %4985
    %4987 = vrot.lane.b32.xlu0 %v3079, 104
    %v4988 = vpop.permute.xlu0 %4987
    %4993 = vrot.lane.b32.xlu0 %v1528, 108
    %v4994 = vpop.permute.xlu0 %4993
    %4995 = vrot.lane.b32.xlu0 %v3096, 108
    %v4996 = vpop.permute.xlu0 %4995
    %5001 = vrot.lane.b32.xlu0 %v1519, 112
    %v5002 = vpop.permute.xlu0 %5001
    %5003 = vrot.lane.b32.xlu0 %v3087, 112
    %v5004 = vpop.permute.xlu0 %5003
    %5009 = vrot.lane.b32.xlu0 %v1529, 116
    %v5010 = vpop.permute.xlu0 %5009
    %5011 = vrot.lane.b32.xlu0 %v3097, 116
    %v5012 = vpop.permute.xlu0 %5011
    %5017 = vrot.lane.b32.xlu0 %v1526, 120
    %v5018 = vpop.permute.xlu0 %5017
    %5019 = vrot.lane.b32.xlu0 %v3094, 120
    %v5020 = vpop.permute.xlu0 %5019
    %5025 = vrot.lane.b32.xlu0 %v1530, 124
    %v5026 = vpop.permute.xlu0 %5025
    %5027 = vrot.lane.b32.xlu0 %v3098, 124
    %v5028 = vpop.permute.xlu0 %5027
    %5033 = vrot.lane.b32.xlu0 %v1576, 4
    %v5034 = vpop.permute.xlu0 %5033
    %5035 = vrot.lane.b32.xlu0 %v3144, 4
    %v5036 = vpop.permute.xlu0 %5035
    %5041 = vrot.lane.b32.xlu0 %v1560, 8
    %v5042 = vpop.permute.xlu0 %5041
    %5043 = vrot.lane.b32.xlu0 %v3128, 8
    %v5044 = vpop.permute.xlu0 %5043
    %5049 = vrot.lane.b32.xlu0 %v1577, 12
    %v5050 = vpop.permute.xlu0 %5049
    %5051 = vrot.lane.b32.xlu0 %v3145, 12
    %v5052 = vpop.permute.xlu0 %5051
    %5057 = vrot.lane.b32.xlu0 %v1568, 16
    %v5058 = vpop.permute.xlu0 %5057
    %5059 = vrot.lane.b32.xlu0 %v3136, 16
    %v5060 = vpop.permute.xlu0 %5059
    %5065 = vrot.lane.b32.xlu0 %v1578, 20
    %v5066 = vpop.permute.xlu0 %5065
    %5067 = vrot.lane.b32.xlu0 %v3146, 20
    %v5068 = vpop.permute.xlu0 %5067
    %5073 = vrot.lane.b32.xlu0 %v1575, 24
    %v5074 = vpop.permute.xlu0 %5073
    %5075 = vrot.lane.b32.xlu0 %v3143, 24
    %v5076 = vpop.permute.xlu0 %5075
    %5081 = vrot.lane.b32.xlu0 %v1579, 28
    %v5082 = vpop.permute.xlu0 %5081
    %5083 = vrot.lane.b32.xlu0 %v3147, 28
    %v5084 = vpop.permute.xlu0 %5083
    %5089 = vrot.lane.b32.xlu0 %v1602, 32
    %v5090 = vpop.permute.xlu0 %5089
    %5091 = vrot.lane.b32.xlu0 %v3170, 32
    %v5092 = vpop.permute.xlu0 %5091
    %5097 = vrot.lane.b32.xlu0 %v1625, 36
    %v5098 = vpop.permute.xlu0 %5097
    %5099 = vrot.lane.b32.xlu0 %v3193, 36
    %v5100 = vpop.permute.xlu0 %5099
    %5105 = vrot.lane.b32.xlu0 %v1609, 40
    %v5106 = vpop.permute.xlu0 %5105
    %5107 = vrot.lane.b32.xlu0 %v3177, 40
    %v5108 = vpop.permute.xlu0 %5107
    %5113 = vrot.lane.b32.xlu0 %v1626, 44
    %v5114 = vpop.permute.xlu0 %5113
    %5115 = vrot.lane.b32.xlu0 %v3194, 44
    %v5116 = vpop.permute.xlu0 %5115
    %5121 = vrot.lane.b32.xlu0 %v1617, 48
    %v5122 = vpop.permute.xlu0 %5121
    %5123 = vrot.lane.b32.xlu0 %v3185, 48
    %v5124 = vpop.permute.xlu0 %5123
    %5129 = vrot.lane.b32.xlu0 %v1627, 52
    %v5130 = vpop.permute.xlu0 %5129
    %5131 = vrot.lane.b32.xlu0 %v3195, 52
    %v5132 = vpop.permute.xlu0 %5131
    %5137 = vrot.lane.b32.xlu0 %v1624, 56
    %v5138 = vpop.permute.xlu0 %5137
    %5139 = vrot.lane.b32.xlu0 %v3192, 56
    %v5140 = vpop.permute.xlu0 %5139
    %5145 = vrot.lane.b32.xlu0 %v1628, 60
    %v5146 = vpop.permute.xlu0 %5145
    %5147 = vrot.lane.b32.xlu0 %v3196, 60
    %v5148 = vpop.permute.xlu0 %5147
    %5153 = vrot.lane.b32.xlu0 %v1651, 64
    %v5154 = vpop.permute.xlu0 %5153
    %5155 = vrot.lane.b32.xlu0 %v3219, 64
    %v5156 = vpop.permute.xlu0 %5155
    %5161 = vrot.lane.b32.xlu0 %v1674, 68
    %v5162 = vpop.permute.xlu0 %5161
    %5163 = vrot.lane.b32.xlu0 %v3242, 68
    %v5164 = vpop.permute.xlu0 %5163
    %5169 = vrot.lane.b32.xlu0 %v1658, 72
    %v5170 = vpop.permute.xlu0 %5169
    %5171 = vrot.lane.b32.xlu0 %v3226, 72
    %v5172 = vpop.permute.xlu0 %5171
    %5177 = vrot.lane.b32.xlu0 %v1675, 76
    %v5178 = vpop.permute.xlu0 %5177
    %5179 = vrot.lane.b32.xlu0 %v3243, 76
    %v5180 = vpop.permute.xlu0 %5179
    %5185 = vrot.lane.b32.xlu0 %v1666, 80
    %v5186 = vpop.permute.xlu0 %5185
    %5187 = vrot.lane.b32.xlu0 %v3234, 80
    %v5188 = vpop.permute.xlu0 %5187
    %5193 = vrot.lane.b32.xlu0 %v1676, 84
    %v5194 = vpop.permute.xlu0 %5193
    %5195 = vrot.lane.b32.xlu0 %v3244, 84
    %v5196 = vpop.permute.xlu0 %5195
    %5201 = vrot.lane.b32.xlu0 %v1673, 88
    %v5202 = vpop.permute.xlu0 %5201
    %5203 = vrot.lane.b32.xlu0 %v3241, 88
    %v5204 = vpop.permute.xlu0 %5203
    %5209 = vrot.lane.b32.xlu0 %v1677, 92
    %v5210 = vpop.permute.xlu0 %5209
    %5211 = vrot.lane.b32.xlu0 %v3245, 92
    %v5212 = vpop.permute.xlu0 %5211
    %5217 = vrot.lane.b32.xlu0 %v1700, 96
    %v5218 = vpop.permute.xlu0 %5217
    %5219 = vrot.lane.b32.xlu0 %v3268, 96
    %v5220 = vpop.permute.xlu0 %5219
    %5225 = vrot.lane.b32.xlu0 %v1723, 100
    %v5226 = vpop.permute.xlu0 %5225
    %5227 = vrot.lane.b32.xlu0 %v3291, 100
    %v5228 = vpop.permute.xlu0 %5227
    %5233 = vrot.lane.b32.xlu0 %v1707, 104
    %v5234 = vpop.permute.xlu0 %5233
    %5235 = vrot.lane.b32.xlu0 %v3275, 104
    %v5236 = vpop.permute.xlu0 %5235
    %5241 = vrot.lane.b32.xlu0 %v1724, 108
    %v5242 = vpop.permute.xlu0 %5241
    %5243 = vrot.lane.b32.xlu0 %v3292, 108
    %v5244 = vpop.permute.xlu0 %5243
    %5249 = vrot.lane.b32.xlu0 %v1715, 112
    %v5250 = vpop.permute.xlu0 %5249
    %5251 = vrot.lane.b32.xlu0 %v3283, 112
    %v5252 = vpop.permute.xlu0 %5251
    %5257 = vrot.lane.b32.xlu0 %v1725, 116
    %v5258 = vpop.permute.xlu0 %5257
    %5259 = vrot.lane.b32.xlu0 %v3293, 116
    %v5260 = vpop.permute.xlu0 %5259
    %5265 = vrot.lane.b32.xlu0 %v1722, 120
    %v5266 = vpop.permute.xlu0 %5265
    %5267 = vrot.lane.b32.xlu0 %v3290, 120
    %v5268 = vpop.permute.xlu0 %5267
    %5273 = vrot.lane.b32.xlu0 %v1726, 124
    %v5274 = vpop.permute.xlu0 %5273
    %5275 = vrot.lane.b32.xlu0 %v3294, 124
    %v5276 = vpop.permute.xlu0 %5275
    %vm5279 = vcmask 31744
    %v5280 = vsel %vm5279, %v181, %v3298
    %v5281 = vsel %vm5279, %v1749, %v3300
    %vm5282 = vcmask 64512
    %v5283 = vsel %vm5282, %v5280, %v3306
    %v5284 = vsel %vm5282, %v5281, %v3308
    %vm5285 = vcmask 97280
    %v5286 = vsel %vm5285, %v5283, %v3314
    %v5287 = vsel %vm5285, %v5284, %v3316
    %vm5288 = vcmask 130048
    %v5289 = vsel %vm5288, %v5286, %v3322
    %v5290 = vsel %vm5288, %v5287, %v3324
    %vm5291 = vcmask 162816
    %v5292 = vsel %vm5291, %v5289, %v3330
    %v5293 = vsel %vm5291, %v5290, %v3332
    %vm5294 = vcmask 195584
    %v5295 = vsel %vm5294, %v5292, %v3338
    %v5296 = vsel %vm5294, %v5293, %v3340
    %vm5297 = vcmask 228352
    %v5298 = vsel %vm5297, %v5295, %v3346
    %v5299 = vsel %vm5297, %v5296, %v3348
    %vm5300 = vcmask 261120
    %v5301 = vsel %vm5300, %v5298, %v3354
    %v5302 = vsel %vm5300, %v5299, %v3356
    %vm5303 = vcmask 293888
    %v5304 = vsel %vm5303, %v5301, %v3362
    %v5305 = vsel %vm5303, %v5302, %v3364
    %vm5306 = vcmask 326656
    %v5307 = vsel %vm5306, %v5304, %v3370
    %v5308 = vsel %vm5306, %v5305, %v3372
    %vm5309 = vcmask 359424
    %v5310 = vsel %vm5309, %v5307, %v3378
    %v5311 = vsel %vm5309, %v5308, %v3380
    %vm5312 = vcmask 392192
    %v5313 = vsel %vm5312, %v5310, %v3386
    %v5314 = vsel %vm5312, %v5311, %v3388
    %vm5315 = vcmask 424960
    %v5316 = vsel %vm5315, %v5313, %v3394
    %v5317 = vsel %vm5315, %v5314, %v3396
    %vm5318 = vcmask 457728
    %v5319 = vsel %vm5318, %v5316, %v3402
    %v5320 = vsel %vm5318, %v5317, %v3404
    %vm5321 = vcmask 490496
    %v5322 = vsel %vm5321, %v5319, %v3410
    %v5323 = vsel %vm5321, %v5320, %v3412
    %vm5324 = vcmask 523264
    %v5325 = vsel %vm5324, %v5322, %v3418
    %v5326 = vsel %vm5324, %v5323, %v3420
    %vm5327 = vcmask 556032
    %v5328 = vsel %vm5327, %v5325, %v3426
    %v5329 = vsel %vm5327, %v5326, %v3428
    %vm5330 = vcmask 588800
    %v5331 = vsel %vm5330, %v5328, %v3434
    %v5332 = vsel %vm5330, %v5329, %v3436
    %vm5333 = vcmask 621568
    %v5334 = vsel %vm5333, %v5331, %v3442
    %v5335 = vsel %vm5333, %v5332, %v3444
    %vm5336 = vcmask 654336
    %v5337 = vsel %vm5336, %v5334, %v3450
    %v5338 = vsel %vm5336, %v5335, %v3452
    %vm5339 = vcmask 687104
    %v5340 = vsel %vm5339, %v5337, %v3458
    %v5341 = vsel %vm5339, %v5338, %v3460
    %vm5342 = vcmask 719872
    %v5343 = vsel %vm5342, %v5340, %v3466
    %v5344 = vsel %vm5342, %v5341, %v3468
    %vm5345 = vcmask 752640
    %v5346 = vsel %vm5345, %v5343, %v3474
    %v5347 = vsel %vm5345, %v5344, %v3476
    %vm5348 = vcmask 785408
    %v5349 = vsel %vm5348, %v5346, %v3482
    %v5350 = vsel %vm5348, %v5347, %v3484
    %vm5351 = vcmask 818176
    %v5352 = vsel %vm5351, %v5349, %v3490
    %v5353 = vsel %vm5351, %v5350, %v3492
    %vm5354 = vcmask 850944
    %v5355 = vsel %vm5354, %v5352, %v3498
    %v5356 = vsel %vm5354, %v5353, %v3500
    %vm5357 = vcmask 883712
    %v5358 = vsel %vm5357, %v5355, %v3506
    %v5359 = vsel %vm5357, %v5356, %v3508
    %vm5360 = vcmask 916480
    %v5361 = vsel %vm5360, %v5358, %v3514
    %v5362 = vsel %vm5360, %v5359, %v3516
    %vm5363 = vcmask 949248
    %v5364 = vsel %vm5363, %v5361, %v3522
    %v5365 = vsel %vm5363, %v5362, %v3524
    %vm5366 = vcmask 982016
    %v5367 = vsel %vm5366, %v5364, %v3530
    %v5368 = vsel %vm5366, %v5365, %v3532
    %vm5369 = vcmask 1014784
    %v5370 = vsel %vm5369, %v5367, %v3538
    %v5371 = vsel %vm5369, %v5368, %v3540
    %v5372 = vsel %vm5279, %v377, %v3546
    %v5373 = vsel %vm5279, %v1945, %v3548
    %v5374 = vsel %vm5282, %v5372, %v3554
    %v5375 = vsel %vm5282, %v5373, %v3556
    %v5376 = vsel %vm5285, %v5374, %v3562
    %v5377 = vsel %vm5285, %v5375, %v3564
    %v5378 = vsel %vm5288, %v5376, %v3570
    %v5379 = vsel %vm5288, %v5377, %v3572
    %v5380 = vsel %vm5291, %v5378, %v3578
    %v5381 = vsel %vm5291, %v5379, %v3580
    %v5382 = vsel %vm5294, %v5380, %v3586
    %v5383 = vsel %vm5294, %v5381, %v3588
    %v5384 = vsel %vm5297, %v5382, %v3594
    %v5385 = vsel %vm5297, %v5383, %v3596
    %v5386 = vsel %vm5300, %v5384, %v3602
    %v5387 = vsel %vm5300, %v5385, %v3604
    %v5388 = vsel %vm5303, %v5386, %v3610
    %v5389 = vsel %vm5303, %v5387, %v3612
    %v5390 = vsel %vm5306, %v5388, %v3618
    %v5391 = vsel %vm5306, %v5389, %v3620
    %v5392 = vsel %vm5309, %v5390, %v3626
    %v5393 = vsel %vm5309, %v5391, %v3628
    %v5394 = vsel %vm5312, %v5392, %v3634
    %v5395 = vsel %vm5312, %v5393, %v3636
    %v5396 = vsel %vm5315, %v5394, %v3642
    %v5397 = vsel %vm5315, %v5395, %v3644
    %v5398 = vsel %vm5318, %v5396, %v3650
    %v5399 = vsel %vm5318, %v5397, %v3652
    %v5400 = vsel %vm5321, %v5398, %v3658
    %v5401 = vsel %vm5321, %v5399, %v3660
    %v5402 = vsel %vm5324, %v5400, %v3666
    %v5403 = vsel %vm5324, %v5401, %v3668
    %v5404 = vsel %vm5327, %v5402, %v3674
    %v5405 = vsel %vm5327, %v5403, %v3676
    %v5406 = vsel %vm5330, %v5404, %v3682
    %v5407 = vsel %vm5330, %v5405, %v3684
    %v5408 = vsel %vm5333, %v5406, %v3690
    %v5409 = vsel %vm5333, %v5407, %v3692
    %v5410 = vsel %vm5336, %v5408, %v3698
    %v5411 = vsel %vm5336, %v5409, %v3700
    %v5412 = vsel %vm5339, %v5410, %v3706
    %v5413 = vsel %vm5339, %v5411, %v3708
    %v5414 = vsel %vm5342, %v5412, %v3714
    %v5415 = vsel %vm5342, %v5413, %v3716
    %v5416 = vsel %vm5345, %v5414, %v3722
    %v5417 = vsel %vm5345, %v5415, %v3724
    %v5418 = vsel %vm5348, %v5416, %v3730
    %v5419 = vsel %vm5348, %v5417, %v3732
    %v5420 = vsel %vm5351, %v5418, %v3738
    %v5421 = vsel %vm5351, %v5419, %v3740
    %v5422 = vsel %vm5354, %v5420, %v3746
    %v5423 = vsel %vm5354, %v5421, %v3748
    %v5424 = vsel %vm5357, %v5422, %v3754
    %v5425 = vsel %vm5357, %v5423, %v3756
    %v5426 = vsel %vm5360, %v5424, %v3762
    %v5427 = vsel %vm5360, %v5425, %v3764
    %v5428 = vsel %vm5363, %v5426, %v3770
    %v5429 = vsel %vm5363, %v5427, %v3772
    %v5430 = vsel %vm5366, %v5428, %v3778
    %v5431 = vsel %vm5366, %v5429, %v3780
    %v5432 = vsel %vm5369, %v5430, %v3786
    %v5433 = vsel %vm5369, %v5431, %v3788
    %v5434 = vsel %vm5279, %v573, %v3794
    %v5435 = vsel %vm5279, %v2141, %v3796
    %v5436 = vsel %vm5282, %v5434, %v3802
    %v5437 = vsel %vm5282, %v5435, %v3804
    %v5438 = vsel %vm5285, %v5436, %v3810
    %v5439 = vsel %vm5285, %v5437, %v3812
    %v5440 = vsel %vm5288, %v5438, %v3818
    %v5441 = vsel %vm5288, %v5439, %v3820
    %v5442 = vsel %vm5291, %v5440, %v3826
    %v5443 = vsel %vm5291, %v5441, %v3828
    %v5444 = vsel %vm5294, %v5442, %v3834
    %v5445 = vsel %vm5294, %v5443, %v3836
    %v5446 = vsel %vm5297, %v5444, %v3842
    %v5447 = vsel %vm5297, %v5445, %v3844
    %v5448 = vsel %vm5300, %v5446, %v3850
    %v5449 = vsel %vm5300, %v5447, %v3852
    %v5450 = vsel %vm5303, %v5448, %v3858
    %v5451 = vsel %vm5303, %v5449, %v3860
    %v5452 = vsel %vm5306, %v5450, %v3866
    %v5453 = vsel %vm5306, %v5451, %v3868
    %v5454 = vsel %vm5309, %v5452, %v3874
    %v5455 = vsel %vm5309, %v5453, %v3876
    %v5456 = vsel %vm5312, %v5454, %v3882
    %v5457 = vsel %vm5312, %v5455, %v3884
    %v5458 = vsel %vm5315, %v5456, %v3890
    %v5459 = vsel %vm5315, %v5457, %v3892
    %v5460 = vsel %vm5318, %v5458, %v3898
    %v5461 = vsel %vm5318, %v5459, %v3900
    %v5462 = vsel %vm5321, %v5460, %v3906
    %v5463 = vsel %vm5321, %v5461, %v3908
    %v5464 = vsel %vm5324, %v5462, %v3914
    %v5465 = vsel %vm5324, %v5463, %v3916
    %v5466 = vsel %vm5327, %v5464, %v3922
    %v5467 = vsel %vm5327, %v5465, %v3924
    %v5468 = vsel %vm5330, %v5466, %v3930
    %v5469 = vsel %vm5330, %v5467, %v3932
    %v5470 = vsel %vm5333, %v5468, %v3938
    %v5471 = vsel %vm5333, %v5469, %v3940
    %v5472 = vsel %vm5336, %v5470, %v3946
    %v5473 = vsel %vm5336, %v5471, %v3948
    %v5474 = vsel %vm5339, %v5472, %v3954
    %v5475 = vsel %vm5339, %v5473, %v3956
    %v5476 = vsel %vm5342, %v5474, %v3962
    %v5477 = vsel %vm5342, %v5475, %v3964
    %v5478 = vsel %vm5345, %v5476, %v3970
    %v5479 = vsel %vm5345, %v5477, %v3972
    %v5480 = vsel %vm5348, %v5478, %v3978
    %v5481 = vsel %vm5348, %v5479, %v3980
    %v5482 = vsel %vm5351, %v5480, %v3986
    %v5483 = vsel %vm5351, %v5481, %v3988
    %v5484 = vsel %vm5354, %v5482, %v3994
    %v5485 = vsel %vm5354, %v5483, %v3996
    %v5486 = vsel %vm5357, %v5484, %v4002
    %v5487 = vsel %vm5357, %v5485, %v4004
    %v5488 = vsel %vm5360, %v5486, %v4010
    %v5489 = vsel %vm5360, %v5487, %v4012
    %v5490 = vsel %vm5363, %v5488, %v4018
    %v5491 = vsel %vm5363, %v5489, %v4020
    %v5492 = vsel %vm5366, %v5490, %v4026
    %v5493 = vsel %vm5366, %v5491, %v4028
    %v5494 = vsel %vm5369, %v5492, %v4034
    %v5495 = vsel %vm5369, %v5493, %v4036
    %v5496 = vsel %vm5279, %v769, %v4042
    %v5497 = vsel %vm5279, %v2337, %v4044
    %v5498 = vsel %vm5282, %v5496, %v4050
    %v5499 = vsel %vm5282, %v5497, %v4052
    %v5500 = vsel %vm5285, %v5498, %v4058
    %v5501 = vsel %vm5285, %v5499, %v4060
    %v5502 = vsel %vm5288, %v5500, %v4066
    %v5503 = vsel %vm5288, %v5501, %v4068
    %v5504 = vsel %vm5291, %v5502, %v4074
    %v5505 = vsel %vm5291, %v5503, %v4076
    %v5506 = vsel %vm5294, %v5504, %v4082
    %v5507 = vsel %vm5294, %v5505, %v4084
    %v5508 = vsel %vm5297, %v5506, %v4090
    %v5509 = vsel %vm5297, %v5507, %v4092
    %v5510 = vsel %vm5300, %v5508, %v4098
    %v5511 = vsel %vm5300, %v5509, %v4100
    %v5512 = vsel %vm5303, %v5510, %v4106
    %v5513 = vsel %vm5303, %v5511, %v4108
    %v5514 = vsel %vm5306, %v5512, %v4114
    %v5515 = vsel %vm5306, %v5513, %v4116
    %v5516 = vsel %vm5309, %v5514, %v4122
    %v5517 = vsel %vm5309, %v5515, %v4124
    %v5518 = vsel %vm5312, %v5516, %v4130
    %v5519 = vsel %vm5312, %v5517, %v4132
    %v5520 = vsel %vm5315, %v5518, %v4138
    %v5521 = vsel %vm5315, %v5519, %v4140
    %v5522 = vsel %vm5318, %v5520, %v4146
    %v5523 = vsel %vm5318, %v5521, %v4148
    %v5524 = vsel %vm5321, %v5522, %v4154
    %v5525 = vsel %vm5321, %v5523, %v4156
    %v5526 = vsel %vm5324, %v5524, %v4162
    %v5527 = vsel %vm5324, %v5525, %v4164
    %v5528 = vsel %vm5327, %v5526, %v4170
    %v5529 = vsel %vm5327, %v5527, %v4172
    %v5530 = vsel %vm5330, %v5528, %v4178
    %v5531 = vsel %vm5330, %v5529, %v4180
    %v5532 = vsel %vm5333, %v5530, %v4186
    %v5533 = vsel %vm5333, %v5531, %v4188
    %v5534 = vsel %vm5336, %v5532, %v4194
    %v5535 = vsel %vm5336, %v5533, %v4196
    %v5536 = vsel %vm5339, %v5534, %v4202
    %v5537 = vsel %vm5339, %v5535, %v4204
    %v5538 = vsel %vm5342, %v5536, %v4210
    %v5539 = vsel %vm5342, %v5537, %v4212
    %v5540 = vsel %vm5345, %v5538, %v4218
    %v5541 = vsel %vm5345, %v5539, %v4220
    %v5542 = vsel %vm5348, %v5540, %v4226
    %v5543 = vsel %vm5348, %v5541, %v4228
    %v5544 = vsel %vm5351, %v5542, %v4234
    %v5545 = vsel %vm5351, %v5543, %v4236
    %v5546 = vsel %vm5354, %v5544, %v4242
    %v5547 = vsel %vm5354, %v5545, %v4244
    %v5548 = vsel %vm5357, %v5546, %v4250
    %v5549 = vsel %vm5357, %v5547, %v4252
    %v5550 = vsel %vm5360, %v5548, %v4258
    %v5551 = vsel %vm5360, %v5549, %v4260
    %v5552 = vsel %vm5363, %v5550, %v4266
    %v5553 = vsel %vm5363, %v5551, %v4268
    %v5554 = vsel %vm5366, %v5552, %v4274
    %v5555 = vsel %vm5366, %v5553, %v4276
    %v5556 = vsel %vm5369, %v5554, %v4282
    %v5557 = vsel %vm5369, %v5555, %v4284
    %v5558 = vsel %vm5279, %v965, %v4290
    %v5559 = vsel %vm5279, %v2533, %v4292
    %v5560 = vsel %vm5282, %v5558, %v4298
    %v5561 = vsel %vm5282, %v5559, %v4300
    %v5562 = vsel %vm5285, %v5560, %v4306
    %v5563 = vsel %vm5285, %v5561, %v4308
    %v5564 = vsel %vm5288, %v5562, %v4314
    %v5565 = vsel %vm5288, %v5563, %v4316
    %v5566 = vsel %vm5291, %v5564, %v4322
    %v5567 = vsel %vm5291, %v5565, %v4324
    %v5568 = vsel %vm5294, %v5566, %v4330
    %v5569 = vsel %vm5294, %v5567, %v4332
    %v5570 = vsel %vm5297, %v5568, %v4338
    %v5571 = vsel %vm5297, %v5569, %v4340
    %v5572 = vsel %vm5300, %v5570, %v4346
    %v5573 = vsel %vm5300, %v5571, %v4348
    %v5574 = vsel %vm5303, %v5572, %v4354
    %v5575 = vsel %vm5303, %v5573, %v4356
    %v5576 = vsel %vm5306, %v5574, %v4362
    %v5577 = vsel %vm5306, %v5575, %v4364
    %v5578 = vsel %vm5309, %v5576, %v4370
    %v5579 = vsel %vm5309, %v5577, %v4372
    %v5580 = vsel %vm5312, %v5578, %v4378
    %v5581 = vsel %vm5312, %v5579, %v4380
    %v5582 = vsel %vm5315, %v5580, %v4386
    %v5583 = vsel %vm5315, %v5581, %v4388
    %v5584 = vsel %vm5318, %v5582, %v4394
    %v5585 = vsel %vm5318, %v5583, %v4396
    %v5586 = vsel %vm5321, %v5584, %v4402
    %v5587 = vsel %vm5321, %v5585, %v4404
    %v5588 = vsel %vm5324, %v5586, %v4410
    %v5589 = vsel %vm5324, %v5587, %v4412
    %v5590 = vsel %vm5327, %v5588, %v4418
    %v5591 = vsel %vm5327, %v5589, %v4420
    %v5592 = vsel %vm5330, %v5590, %v4426
    %v5593 = vsel %vm5330, %v5591, %v4428
    %v5594 = vsel %vm5333, %v5592, %v4434
    %v5595 = vsel %vm5333, %v5593, %v4436
    %v5596 = vsel %vm5336, %v5594, %v4442
    %v5597 = vsel %vm5336, %v5595, %v4444
    %v5598 = vsel %vm5339, %v5596, %v4450
    %v5599 = vsel %vm5339, %v5597, %v4452
    %v5600 = vsel %vm5342, %v5598, %v4458
    %v5601 = vsel %vm5342, %v5599, %v4460
    %v5602 = vsel %vm5345, %v5600, %v4466
    %v5603 = vsel %vm5345, %v5601, %v4468
    %v5604 = vsel %vm5348, %v5602, %v4474
    %v5605 = vsel %vm5348, %v5603, %v4476
    %v5606 = vsel %vm5351, %v5604, %v4482
    %v5607 = vsel %vm5351, %v5605, %v4484
    %v5608 = vsel %vm5354, %v5606, %v4490
    %v5609 = vsel %vm5354, %v5607, %v4492
    %v5610 = vsel %vm5357, %v5608, %v4498
    %v5611 = vsel %vm5357, %v5609, %v4500
    %v5612 = vsel %vm5360, %v5610, %v4506
    %v5613 = vsel %vm5360, %v5611, %v4508
    %v5614 = vsel %vm5363, %v5612, %v4514
    %v5615 = vsel %vm5363, %v5613, %v4516
    %v5616 = vsel %vm5366, %v5614, %v4522
    %v5617 = vsel %vm5366, %v5615, %v4524
    %v5618 = vsel %vm5369, %v5616, %v4530
    %v5619 = vsel %vm5369, %v5617, %v4532
    %v5620 = vsel %vm5279, %v1161, %v4538
    %v5621 = vsel %vm5279, %v2729, %v4540
    %v5622 = vsel %vm5282, %v5620, %v4546
    %v5623 = vsel %vm5282, %v5621, %v4548
    %v5624 = vsel %vm5285, %v5622, %v4554
    %v5625 = vsel %vm5285, %v5623, %v4556
    %v5626 = vsel %vm5288, %v5624, %v4562
    %v5627 = vsel %vm5288, %v5625, %v4564
    %v5628 = vsel %vm5291, %v5626, %v4570
    %v5629 = vsel %vm5291, %v5627, %v4572
    %v5630 = vsel %vm5294, %v5628, %v4578
    %v5631 = vsel %vm5294, %v5629, %v4580
    %v5632 = vsel %vm5297, %v5630, %v4586
    %v5633 = vsel %vm5297, %v5631, %v4588
    %v5634 = vsel %vm5300, %v5632, %v4594
    %v5635 = vsel %vm5300, %v5633, %v4596
    %v5636 = vsel %vm5303, %v5634, %v4602
    %v5637 = vsel %vm5303, %v5635, %v4604
    %v5638 = vsel %vm5306, %v5636, %v4610
    %v5639 = vsel %vm5306, %v5637, %v4612
    %v5640 = vsel %vm5309, %v5638, %v4618
    %v5641 = vsel %vm5309, %v5639, %v4620
    %v5642 = vsel %vm5312, %v5640, %v4626
    %v5643 = vsel %vm5312, %v5641, %v4628
    %v5644 = vsel %vm5315, %v5642, %v4634
    %v5645 = vsel %vm5315, %v5643, %v4636
    %v5646 = vsel %vm5318, %v5644, %v4642
    %v5647 = vsel %vm5318, %v5645, %v4644
    %v5648 = vsel %vm5321, %v5646, %v4650
    %v5649 = vsel %vm5321, %v5647, %v4652
    %v5650 = vsel %vm5324, %v5648, %v4658
    %v5651 = vsel %vm5324, %v5649, %v4660
    %v5652 = vsel %vm5327, %v5650, %v4666
    %v5653 = vsel %vm5327, %v5651, %v4668
    %v5654 = vsel %vm5330, %v5652, %v4674
    %v5655 = vsel %vm5330, %v5653, %v4676
    %v5656 = vsel %vm5333, %v5654, %v4682
    %v5657 = vsel %vm5333, %v5655, %v4684
    %v5658 = vsel %vm5336, %v5656, %v4690
    %v5659 = vsel %vm5336, %v5657, %v4692
    %v5660 = vsel %vm5339, %v5658, %v4698
    %v5661 = vsel %vm5339, %v5659, %v4700
    %v5662 = vsel %vm5342, %v5660, %v4706
    %v5663 = vsel %vm5342, %v5661, %v4708
    %v5664 = vsel %vm5345, %v5662, %v4714
    %v5665 = vsel %vm5345, %v5663, %v4716
    %v5666 = vsel %vm5348, %v5664, %v4722
    %v5667 = vsel %vm5348, %v5665, %v4724
    %v5668 = vsel %vm5351, %v5666, %v4730
    %v5669 = vsel %vm5351, %v5667, %v4732
    %v5670 = vsel %vm5354, %v5668, %v4738
    %v5671 = vsel %vm5354, %v5669, %v4740
    %v5672 = vsel %vm5357, %v5670, %v4746
    %v5673 = vsel %vm5357, %v5671, %v4748
    %v5674 = vsel %vm5360, %v5672, %v4754
    %v5675 = vsel %vm5360, %v5673, %v4756
    %v5676 = vsel %vm5363, %v5674, %v4762
    %v5677 = vsel %vm5363, %v5675, %v4764
    %v5678 = vsel %vm5366, %v5676, %v4770
    %v5679 = vsel %vm5366, %v5677, %v4772
    %v5680 = vsel %vm5369, %v5678, %v4778
    %v5681 = vsel %vm5369, %v5679, %v4780
    %v5682 = vsel %vm5279, %v1357, %v4786
    %v5683 = vsel %vm5279, %v2925, %v4788
    %v5684 = vsel %vm5282, %v5682, %v4794
    %v5685 = vsel %vm5282, %v5683, %v4796
    %v5686 = vsel %vm5285, %v5684, %v4802
    %v5687 = vsel %vm5285, %v5685, %v4804
    %v5688 = vsel %vm5288, %v5686, %v4810
    %v5689 = vsel %vm5288, %v5687, %v4812
    %v5690 = vsel %vm5291, %v5688, %v4818
    %v5691 = vsel %vm5291, %v5689, %v4820
    %v5692 = vsel %vm5294, %v5690, %v4826
    %v5693 = vsel %vm5294, %v5691, %v4828
    %v5694 = vsel %vm5297, %v5692, %v4834
    %v5695 = vsel %vm5297, %v5693, %v4836
    %v5696 = vsel %vm5300, %v5694, %v4842
    %v5697 = vsel %vm5300, %v5695, %v4844
    %v5698 = vsel %vm5303, %v5696, %v4850
    %v5699 = vsel %vm5303, %v5697, %v4852
    %v5700 = vsel %vm5306, %v5698, %v4858
    %v5701 = vsel %vm5306, %v5699, %v4860
    %v5702 = vsel %vm5309, %v5700, %v4866
    %v5703 = vsel %vm5309, %v5701, %v4868
    %v5704 = vsel %vm5312, %v5702, %v4874
    %v5705 = vsel %vm5312, %v5703, %v4876
    %v5706 = vsel %vm5315, %v5704, %v4882
    %v5707 = vsel %vm5315, %v5705, %v4884
    %v5708 = vsel %vm5318, %v5706, %v4890
    %v5709 = vsel %vm5318, %v5707, %v4892
    %v5710 = vsel %vm5321, %v5708, %v4898
    %v5711 = vsel %vm5321, %v5709, %v4900
    %v5712 = vsel %vm5324, %v5710, %v4906
    %v5713 = vsel %vm5324, %v5711, %v4908
    %v5714 = vsel %vm5327, %v5712, %v4914
    %v5715 = vsel %vm5327, %v5713, %v4916
    %v5716 = vsel %vm5330, %v5714, %v4922
    %v5717 = vsel %vm5330, %v5715, %v4924
    %v5718 = vsel %vm5333, %v5716, %v4930
    %v5719 = vsel %vm5333, %v5717, %v4932
    %v5720 = vsel %vm5336, %v5718, %v4938
    %v5721 = vsel %vm5336, %v5719, %v4940
    %v5722 = vsel %vm5339, %v5720, %v4946
    %v5723 = vsel %vm5339, %v5721, %v4948
    %v5724 = vsel %vm5342, %v5722, %v4954
    %v5725 = vsel %vm5342, %v5723, %v4956
    %v5726 = vsel %vm5345, %v5724, %v4962
    %v5727 = vsel %vm5345, %v5725, %v4964
    %v5728 = vsel %vm5348, %v5726, %v4970
    %v5729 = vsel %vm5348, %v5727, %v4972
    %v5730 = vsel %vm5351, %v5728, %v4978
    %v5731 = vsel %vm5351, %v5729, %v4980
    %v5732 = vsel %vm5354, %v5730, %v4986
    %v5733 = vsel %vm5354, %v5731, %v4988
    %v5734 = vsel %vm5357, %v5732, %v4994
    %v5735 = vsel %vm5357, %v5733, %v4996
    %v5736 = vsel %vm5360, %v5734, %v5002
    %v5737 = vsel %vm5360, %v5735, %v5004
    %v5738 = vsel %vm5363, %v5736, %v5010
    %v5739 = vsel %vm5363, %v5737, %v5012
    %v5740 = vsel %vm5366, %v5738, %v5018
    %v5741 = vsel %vm5366, %v5739, %v5020
    %v5742 = vsel %vm5369, %v5740, %v5026
    %v5743 = vsel %vm5369, %v5741, %v5028
    %v5744 = vsel %vm5279, %v1553, %v5034
    %v5745 = vsel %vm5279, %v3121, %v5036
    %v5746 = vsel %vm5282, %v5744, %v5042
    %v5747 = vsel %vm5282, %v5745, %v5044
    %v5748 = vsel %vm5285, %v5746, %v5050
    %v5749 = vsel %vm5285, %v5747, %v5052
    %v5750 = vsel %vm5288, %v5748, %v5058
    %v5751 = vsel %vm5288, %v5749, %v5060
    %v5752 = vsel %vm5291, %v5750, %v5066
    %v5753 = vsel %vm5291, %v5751, %v5068
    %v5754 = vsel %vm5294, %v5752, %v5074
    %v5755 = vsel %vm5294, %v5753, %v5076
    %v5756 = vsel %vm5297, %v5754, %v5082
    %v5757 = vsel %vm5297, %v5755, %v5084
    %v5758 = vsel %vm5300, %v5756, %v5090
    %v5759 = vsel %vm5300, %v5757, %v5092
    %v5760 = vsel %vm5303, %v5758, %v5098
    %v5761 = vsel %vm5303, %v5759, %v5100
    %v5762 = vsel %vm5306, %v5760, %v5106
    %v5763 = vsel %vm5306, %v5761, %v5108
    %v5764 = vsel %vm5309, %v5762, %v5114
    %v5765 = vsel %vm5309, %v5763, %v5116
    %v5766 = vsel %vm5312, %v5764, %v5122
    %v5767 = vsel %vm5312, %v5765, %v5124
    %v5768 = vsel %vm5315, %v5766, %v5130
    %v5769 = vsel %vm5315, %v5767, %v5132
    %v5770 = vsel %vm5318, %v5768, %v5138
    %v5771 = vsel %vm5318, %v5769, %v5140
    %v5772 = vsel %vm5321, %v5770, %v5146
    %v5773 = vsel %vm5321, %v5771, %v5148
    %v5774 = vsel %vm5324, %v5772, %v5154
    %v5775 = vsel %vm5324, %v5773, %v5156
    %v5776 = vsel %vm5327, %v5774, %v5162
    %v5777 = vsel %vm5327, %v5775, %v5164
    %v5778 = vsel %vm5330, %v5776, %v5170
    %v5779 = vsel %vm5330, %v5777, %v5172
    %v5780 = vsel %vm5333, %v5778, %v5178
    %v5781 = vsel %vm5333, %v5779, %v5180
    %v5782 = vsel %vm5336, %v5780, %v5186
    %v5783 = vsel %vm5336, %v5781, %v5188
    %v5784 = vsel %vm5339, %v5782, %v5194
    %v5785 = vsel %vm5339, %v5783, %v5196
    %v5786 = vsel %vm5342, %v5784, %v5202
    %v5787 = vsel %vm5342, %v5785, %v5204
    %v5788 = vsel %vm5345, %v5786, %v5210
    %v5789 = vsel %vm5345, %v5787, %v5212
    %v5790 = vsel %vm5348, %v5788, %v5218
    %v5791 = vsel %vm5348, %v5789, %v5220
    %v5792 = vsel %vm5351, %v5790, %v5226
    %v5793 = vsel %vm5351, %v5791, %v5228
    %v5794 = vsel %vm5354, %v5792, %v5234
    %v5795 = vsel %vm5354, %v5793, %v5236
    %v5796 = vsel %vm5357, %v5794, %v5242
    %v5797 = vsel %vm5357, %v5795, %v5244
    %v5798 = vsel %vm5360, %v5796, %v5250
    %v5799 = vsel %vm5360, %v5797, %v5252
    %v5800 = vsel %vm5363, %v5798, %v5258
    %v5801 = vsel %vm5363, %v5799, %v5260
    %v5802 = vsel %vm5366, %v5800, %v5266
    %v5803 = vsel %vm5366, %v5801, %v5268
    %v5804 = vsel %vm5369, %v5802, %v5274
    %v5805 = vsel %vm5369, %v5803, %v5276
    %v5822 = vcombine.low %v5370, %v5432
    %v5823 = vcombine.low %v5494, %v5556
    %v5824 = vcombine.low %v5618, %v5680
    %v5825 = vcombine.low %v5742, %v5804
    %v5827 = vunpack.c.l.s4 1966171168
    %v5828 = vunpack.c.0.s8 %v5827
    %v5829 = vlaneseq
    %v5830 = vshrl.u32 %v5829, 7
    %v5831 = vsub.s32 %v5828, %v5830
    %v5832 = vrot.slane %v5822, %v5831
    %v5834 = vunpack.c.l.s4 1966171168
    %v5835 = vunpack.c.0.s8 %v5834
    %v5836 = vlaneseq
    %v5837 = vshrl.u32 %v5836, 7
    %v5838 = vsub.s32 %v5835, %v5837
    %v5839 = vrot.slane %v5823, %v5838
    %v5841 = vunpack.c.l.s4 1966171168
    %v5842 = vunpack.c.0.s8 %v5841
    %v5843 = vlaneseq
    %v5844 = vshrl.u32 %v5843, 7
    %v5845 = vsub.s32 %v5842, %v5844
    %v5846 = vrot.slane %v5824, %v5845
    %v5848 = vunpack.c.l.s4 1966171168
    %v5849 = vunpack.c.0.s8 %v5848
    %v5850 = vlaneseq
    %v5851 = vshrl.u32 %v5850, 7
    %v5852 = vsub.s32 %v5849, %v5851
    %v5853 = vrot.slane %v5825, %v5852
    %v5854 = vcombine.low %v5832, %v5839
    %v5855 = vcombine.low %v5846, %v5853
    %v5857 = vunpack.c.l.s4 1966171168
    %v5858 = vunpack.c.0.s8 %v5857
    %v5859 = vlaneseq
    %v5860 = vshrl.u32 %v5859, 7
    %v5861 = vsub.s32 %v5858, %v5860
    %v5862 = vrot.slane %v5854, %v5861
    %v5864 = vunpack.c.l.s4 1966171168
    %v5865 = vunpack.c.0.s8 %v5864
    %v5866 = vlaneseq
    %v5867 = vshrl.u32 %v5866, 7
    %v5868 = vsub.s32 %v5865, %v5867
    %v5869 = vrot.slane %v5855, %v5868
    %v5870 = vcombine.low %v5862, %v5869
    %v5871 = vcombine.low %v5371, %v5433
    %v5872 = vcombine.low %v5495, %v5557
    %v5873 = vcombine.low %v5619, %v5681
    %v5874 = vcombine.low %v5743, %v5805
    %v5876 = vunpack.c.l.s4 1966171168
    %v5877 = vunpack.c.0.s8 %v5876
    %v5878 = vlaneseq
    %v5879 = vshrl.u32 %v5878, 7
    %v5880 = vsub.s32 %v5877, %v5879
    %v5881 = vrot.slane %v5871, %v5880
    %v5883 = vunpack.c.l.s4 1966171168
    %v5884 = vunpack.c.0.s8 %v5883
    %v5885 = vlaneseq
    %v5886 = vshrl.u32 %v5885, 7
    %v5887 = vsub.s32 %v5884, %v5886
    %v5888 = vrot.slane %v5872, %v5887
    %v5890 = vunpack.c.l.s4 1966171168
    %v5891 = vunpack.c.0.s8 %v5890
    %v5892 = vlaneseq
    %v5893 = vshrl.u32 %v5892, 7
    %v5894 = vsub.s32 %v5891, %v5893
    %v5895 = vrot.slane %v5873, %v5894
    %v5897 = vunpack.c.l.s4 1966171168
    %v5898 = vunpack.c.0.s8 %v5897
    %v5899 = vlaneseq
    %v5900 = vshrl.u32 %v5899, 7
    %v5901 = vsub.s32 %v5898, %v5900
    %v5902 = vrot.slane %v5874, %v5901
    %v5903 = vcombine.low %v5881, %v5888
    %v5904 = vcombine.low %v5895, %v5902
    %v5906 = vunpack.c.l.s4 1966171168
    %v5907 = vunpack.c.0.s8 %v5906
    %v5908 = vlaneseq
    %v5909 = vshrl.u32 %v5908, 7
    %v5910 = vsub.s32 %v5907, %v5909
    %v5911 = vrot.slane %v5903, %v5910
    %v5913 = vunpack.c.l.s4 1966171168
    %v5914 = vunpack.c.0.s8 %v5913
    %v5915 = vlaneseq
    %v5916 = vshrl.u32 %v5915, 7
    %v5917 = vsub.s32 %v5914, %v5916
    %v5918 = vrot.slane %v5904, %v5917
    %v5919 = vcombine.low %v5911, %v5918
    %5922 = vst [vmem:[#allocation5] sm:$0xff] %v5870
    %5923 = vst [vmem:[#allocation5 + $0x8] sm:$0xff] %v5919
    // Predicated region
    $region10: #{tpu_custom_call.1} parent=1 // pred_check
      _
    $region11: #{tpu_custom_call.1} parent=1 // pred_check_branch
      %5925 = sbr.rel (0) target = $region13
    $region12: #{tpu_custom_call.1} parent=1 // pred_region
      %s5927 = ssub.s32 256, 256
      %5928 = vsyncadd [#allocation4], %s5927
      %s5929 = sshll.u32 [#allocation5], 4
      %s5930 = int_to_ptr.vmem [resolvable:$true] %s5929
      %5935 = dma.vmem_to_hbm [thread:$0]  %s5930, 256, %s1, [#allocation4], 128, 128, 8
    $region13: #{tpu_custom_call.1} parent=1 // pred_fallthru
      _
    // Predicated region
    $region14: #{tpu_custom_call.1} parent=1 // pred_check
      _
    $region15: #{tpu_custom_call.1} parent=1 // pred_check_branch
      %5937 = sbr.rel (0) target = $region17
    $region16: #{tpu_custom_call.1} parent=1 // pred_region
      %5938 = dma.done [#allocation4], 256
    $region17: #{tpu_custom_call.1} parent=1 // pred_fallthru
      _
    %5939 = vsyncpa [#allocation3], 1
    %5940 = vsyncpa [#allocation4], 1

</llo_original>
